<compile_context>
chip_gen: v5e
topology: v5e:2x2
jax: 0.10.0
libtpu: 0.0.40
codegen_flags: <defaults>
</compile_context>

<pallas_src>
import functools

import numpy as np
import jax
import jax.numpy as jnp
from jax.experimental import pallas as pl
from jax.experimental.pallas import tpu as pltpu

WINDOW_SIZE = 5
SIGMA = 1.5
MAX_VAL = 1.0
EPS = 1e-12
PAD = WINDOW_SIZE // 2  # 2


def _gaussian_kernel1d(window_size: int, sigma: float) -> np.ndarray:
    """Matches kornia.filters.get_gaussian_kernel1d for odd window sizes."""
    x = np.arange(window_size, dtype=np.float64) - (window_size // 2)
    g = np.exp(-(x ** 2) / (2.0 * sigma ** 2))
    return g / g.sum()


def _ssim_kernel(xm_ref, xp_ref, xn_ref, ym_ref, yp_ref, yn_ref, o_ref,
                 xw_ref, yw_ref, *, tile_h, out_w, halo_rows, w1d):
    """One (plane-group, row-tile) step.

    xm/ym: (P, tile_h, W)      main row tile
    xp/yp: (P, halo_rows, W)   8-row block just above the tile (clamped)
    xn/yn: (P, halo_rows, W)   8-row block just below the tile (clamped)
    o:     (P, tile_h, W)      SSIM map tile
    xw/yw: (P, tile_h+4, W+4)  f32 scratch holding the reflect-padded tile
    """
    TH, W = tile_h, out_w
    t = pl.program_id(1)
    n_t = pl.num_programs(1)

    def assemble(work, main, prev, nxt):
        # Main data lives at (row offset PAD, col offset PAD) of the scratch.
        work[:, PAD:PAD + TH, PAD:PAD + W] = main[...].astype(jnp.float32)

        # ---- top halo rows (padded rows 0,1)
        @pl.when(t > 0)
        def _():
            work[:, 0:PAD, PAD:PAD + W] = (
                prev[:, halo_rows - PAD:halo_rows, :].astype(jnp.float32))

        @pl.when(t == 0)
        def _():
            # reflect: padded row 0 <- image row 2, padded row 1 <- image row 1
            work[:, 0:1, PAD:PAD + W] = main[:, 2:3, :].astype(jnp.float32)
            work[:, 1:2, PAD:PAD + W] = main[:, 1:2, :].astype(jnp.float32)

        # ---- bottom halo rows (padded rows TH+2, TH+3)
        @pl.when(t < n_t - 1)
        def _():
            work[:, PAD + TH:PAD + TH + PAD, PAD:PAD + W] = (
                nxt[:, 0:PAD, :].astype(jnp.float32))

        @pl.when(t == n_t - 1)
        def _():
            # reflect: padded row TH+2 <- local row TH-2, TH+3 <- local TH-3
            work[:, PAD + TH:PAD + TH + 1, PAD:PAD + W] = (
                main[:, TH - 2:TH - 1, :].astype(jnp.float32))
            work[:, PAD + TH + 1:PAD + TH + 2, PAD:PAD + W] = (
                main[:, TH - 3:TH - 2, :].astype(jnp.float32))

        # ---- column reflect for all rows (after the row fills above).
        # padded col 0 <- orig col 2 (= padded col 4), col 1 <- orig col 1,
        # padded col W+2 <- orig col W-2 (= padded col W), W+3 <- orig col W-3.
        work[:, :, 0:1] = work[:, :, 4:5]
        work[:, :, 1:2] = work[:, :, 3:4]
        work[:, :, W + 2:W + 3] = work[:, :, W:W + 1]
        work[:, :, W + 3:W + 4] = work[:, :, W - 1:W]

    assemble(xw_ref, xm_ref, xp_ref, xn_ref)
    assemble(yw_ref, ym_ref, yp_ref, yn_ref)

    # ---- Vertical (sublane-direction) pass: 5 taps read straight from the
    # scratch refs (plain vld addressing); products formed per shifted slice.
    acc_x = acc_y = acc_xx = acc_yy = acc_xy = None
    for i in range(WINDOW_SIZE):
        wi = float(w1d[i])
        xs = xw_ref[:, i:i + TH, :]          # (P, TH, W+4) f32
        ys = yw_ref[:, i:i + TH, :]
        tx = wi * xs
        ty = wi * ys
        txx = tx * xs                        # == wi * x*x
        tyy = ty * ys                        # == wi * y*y
        txy = tx * ys                        # == wi * x*y
        if acc_x is None:
            acc_x, acc_y, acc_xx, acc_yy, acc_xy = tx, ty, txx, tyy, txy
        else:
            acc_x = acc_x + tx
            acc_y = acc_y + ty
            acc_xx = acc_xx + txx
            acc_yy = acc_yy + tyy
            acc_xy = acc_xy + txy

    # ---- Horizontal (lane-direction) pass: symmetric folding.
    wc = float(w1d[2])   # center tap
    w1c = float(w1d[1])  # +-1 tap
    w2c = float(w1d[0])  # +-2 tap

    def hfilt(a):        # a: (P, TH, W+4) -> (P, TH, W)
        s0 = a[:, :, 0:W]
        s1 = a[:, :, 1:1 + W]
        s2 = a[:, :, 2:2 + W]
        s3 = a[:, :, 3:3 + W]
        s4 = a[:, :, 4:4 + W]
        return wc * s2 + w1c * (s1 + s3) + w2c * (s0 + s4)

    mu1 = hfilt(acc_x)
    mu2 = hfilt(acc_y)
    m11 = hfilt(acc_xx)
    m22 = hfilt(acc_yy)
    m12 = hfilt(acc_xy)

    # ---- SSIM elementwise math.
    mu1_sq = mu1 * mu1
    mu2_sq = mu2 * mu2
    mu1_mu2 = mu1 * mu2

    sigma1_sq = m11 - mu1_sq
    sigma2_sq = m22 - mu2_sq
    sigma12 = m12 - mu1_mu2

    c1 = (0.01 * MAX_VAL) ** 2
    c2 = (0.03 * MAX_VAL) ** 2

    num = (2.0 * mu1_mu2 + c1) * (2.0 * sigma12 + c2)
    den = (mu1_sq + mu2_sq + c1) * (sigma1_sq + sigma2_sq + c2) + EPS

    # EUP approximate reciprocal + one Newton step (keeps ~f32 accuracy).
    r = pl.reciprocal(den, approx=True)
    r = r * (2.0 - den * r)
    o_ref[...] = (num * r).astype(o_ref.dtype)


def _largest_divisor_leq(n: int, cap: int) -> int:
    cap = max(1, min(n, cap))
    for p in range(cap, 0, -1):
        if n % p == 0:
            return p
    return 1


def _pick_tile_h(h: int, cap: int) -> int:
    """Largest multiple-of-8 divisor of h that is <= cap (h % 8 == 0)."""
    best = 8
    d = 8
    top = min(h, cap)
    while d <= top:
        if h % d == 0:
            best = d
        d += 8
    return best


def ssim(x: jax.Array, y: jax.Array) -> jax.Array:
    """SSIM map, equivalent to kornia.metrics.SSIM(5)(x, y). Inputs NCHW."""
    assert x.shape == y.shape and x.ndim == 4
    B, C, H, W = x.shape
    assert H >= 3 and W >= 3, "window_size=5 reflect padding needs H, W >= 3"
    N = B * C
    Wp = W + 2 * PAD

    # ---- Generation-aware VMEM budget (v7x: 64 MiB/TC, v5e/v6e: 128 MiB).
    try:
        info = pltpu.get_tpu_info()
        vmem_cap = int(getattr(info, "vmem_capacity_bytes",
                               64 * 1024 * 1024))
    except Exception:
        vmem_cap = 64 * 1024 * 1024
    budget = int(vmem_cap * 0.45)

    # Rough per-plane, per-row cost: double-buffered inputs + output,
    # two f32 work scratches and ~10 plane-sized accumulators/temps.
    per_row = 4 * (6 * W + 16 * Wp)

    row_cap = max(8, min(2048, budget // per_row))
    if H <= row_cap:
        tile_h, n_tiles = H, 1
    elif H % 8 != 0:
        # TODO(synk): ragged-H row tiling not implemented; whole-plane rows.
        tile_h, n_tiles = H, 1
    else:
        tile_h = _pick_tile_h(H, row_cap)
        n_tiles = H // tile_h

    # v7x has two TensorCores: guarantee >= 2 grid steps even for N == 1.
    if N == 1 and n_tiles == 1 and H % 8 == 0 and H >= 16:
        tile_h = _pick_tile_h(H, max(8, H // 2))
        n_tiles = H // tile_h

    halo_rows = 8 if H >= 8 else H

    # Planes per grid step: amortize per-step overhead for small planes, but
    # keep >= 2 grid steps so both v7x TensorCores get work.
    plane_bytes = max(1, per_row * (tile_h + 2 * PAD))
    p_cap = max(1, min(32, budget // plane_bytes))
    if n_tiles == 1 and N >= 2:
        p_cap = min(p_cap, max(1, N // 2))
    P = _largest_divisor_leq(N, p_cap)

    xf = x.reshape(N, H, W)
    yf = y.reshape(N, H, W)

    main_map = lambda i, t: (i, t, 0)
    if n_tiles == 1:
        prev_map = lambda i, t: (i, 0, 0)
        next_map = lambda i, t: (i, 0, 0)
    else:
        r = tile_h // halo_rows          # halo blocks per row tile
        nhb = H // halo_rows             # total halo blocks
        prev_map = lambda i, t: (i, jnp.maximum(t * r - 1, 0), 0)
        next_map = lambda i, t: (i, jnp.minimum((t + 1) * r, nhb - 1), 0)

    w1d = _gaussian_kernel1d(WINDOW_SIZE, SIGMA)
    kernel = functools.partial(_ssim_kernel, tile_h=tile_h, out_w=W,
                               halo_rows=halo_rows, w1d=w1d)

    main_spec = pl.BlockSpec((P, tile_h, W), main_map)
    prev_spec = pl.BlockSpec((P, halo_rows, W), prev_map)
    next_spec = pl.BlockSpec((P, halo_rows, W), next_map)
    out_spec = pl.BlockSpec((P, tile_h, W), main_map)

    # Actual per-step footprint -> consistent vmem_limit_bytes.
    step_bytes = P * (
        4 * 2 * 2 * tile_h * W                 # main input blocks (2 bufs)
        + 4 * 2 * 2 * 2 * halo_rows * W        # halo blocks (2 per input)
        + 4 * 2 * tile_h * W                   # output blocks (2 bufs)
        + 4 * 2 * (tile_h + 2 * PAD) * Wp      # work scratch (x, y)
        + 4 * 10 * tile_h * Wp                 # accumulators + temps
    )
    vmem_limit = min(int(vmem_cap * 0.9),
                     max(16 * 1024 * 1024, int(step_bytes * 1.5) + (2 << 20)))

    out = pl.pallas_call(
        kernel,
        out_shape=jax.ShapeDtypeStruct((N, H, W), x.dtype),
        grid=(N // P, n_tiles),
        in_specs=[main_spec, prev_spec, next_spec,
                  main_spec, prev_spec, next_spec],
        out_specs=out_spec,
        scratch_shapes=[
            pltpu.VMEM((P, tile_h + 2 * PAD, Wp), jnp.float32),
            pltpu.VMEM((P, tile_h + 2 * PAD, Wp), jnp.float32),
        ],
        compiler_params=pltpu.CompilerParams(
            dimension_semantics=("parallel", "parallel"),
            vmem_limit_bytes=vmem_limit,
        ),
    )(xf, xf, xf, yf, yf, yf)

    return out.reshape(B, C, H, W)


def _ssim_reference_np(x, y):
    """Float64 numpy reference matching kornia.metrics.ssim(window_size=5)."""
    x = np.asarray(x, np.float64)
    y = np.asarray(y, np.float64)
    _, _, H, W = x.shape
    g = _gaussian_kernel1d(WINDOW_SIZE, SIGMA)
    k2d = np.outer(g, g)

    def filt(img):
        p = np.pad(img, ((0, 0), (0, 0), (PAD, PAD), (PAD, PAD)),
                   mode="reflect")
        out = np.zeros_like(img)
        for di in range(WINDOW_SIZE):
            for dj in range(WINDOW_SIZE):
                out += k2d[di, dj] * p[:, :, di:di + H, dj:dj + W]
        return out

    mu1, mu2 = filt(x), filt(y)
    s11 = filt(x * x) - mu1 * mu1
    s22 = filt(y * y) - mu2 * mu2
    s12 = filt(x * y) - mu1 * mu2
    c1 = (0.01 * MAX_VAL) ** 2
    c2 = (0.03 * MAX_VAL) ** 2
    num = (2.0 * mu1 * mu2 + c1) * (2.0 * s12 + c2)
    den = (mu1 * mu1 + mu2 * mu2 + c1) * (s11 + s22 + c2)
    return num / (den + EPS)


if __name__ == "__main__":
    key = jax.random.PRNGKey(0)
    k1, k2 = jax.random.split(key)
    x = jax.random.uniform(k1, (2, 4, 16, 16), dtype=jnp.float32)
    y = jax.random.uniform(k2, (2, 4, 16, 16), dtype=jnp.float32)

    out = ssim(x, y)
    jax.block_until_ready(out)

    assert out.shape == (2, 4, 16, 16)
    assert out.dtype == jnp.float32

    ref = _ssim_reference_np(np.asarray(x), np.asarray(y))
    np.testing.assert_allclose(np.asarray(out), ref, atol=1e-4, rtol=1e-4)

    print("KERNEL_OK")
</pallas_src>

<mosaic_0001>
module attributes {stable_mosaic.version = 11 : i64} {
  func.func @_ssim_kernel(%arg0: i32, %arg1: i32, %arg2: memref<4x16x16xf32, #tpu.memory_space<vmem>>, %arg3: memref<4x8x16xf32, #tpu.memory_space<vmem>>, %arg4: memref<4x8x16xf32, #tpu.memory_space<vmem>>, %arg5: memref<4x16x16xf32, #tpu.memory_space<vmem>>, %arg6: memref<4x8x16xf32, #tpu.memory_space<vmem>>, %arg7: memref<4x8x16xf32, #tpu.memory_space<vmem>>, %arg8: memref<4x16x16xf32, #tpu.memory_space<vmem>>, %arg9: memref<4x20x20xf32, #tpu.memory_space<vmem>>, %arg10: memref<4x20x20xf32, #tpu.memory_space<vmem>>) attributes {dimension_semantics = [#tpu.dimension_semantics<parallel>, #tpu.dimension_semantics<parallel>], iteration_bounds = array<i64: 2, 1>, scalar_prefetch = 0 : i64, scratch_operands = 2 : i64, tpu.core_type = #tpu.core_type<tc>, window_params = [{transform_indices = @transform_0, window_bounds = array<i64: 4, 16, 16>}, {transform_indices = @transform_1, window_bounds = array<i64: 4, 8, 16>}, {transform_indices = @transform_2, window_bounds = array<i64: 4, 8, 16>}, {transform_indices = @transform_3, window_bounds = array<i64: 4, 16, 16>}, {transform_indices = @transform_4, window_bounds = array<i64: 4, 8, 16>}, {transform_indices = @transform_5, window_bounds = array<i64: 4, 8, 16>}, {transform_indices = @transform_6, window_bounds = array<i64: 4, 16, 16>}]} {
    %c0 = arith.constant 0 : index
    %c0_0 = arith.constant 0 : index
    %c0_1 = arith.constant 0 : index
    %0 = vector.load %arg2[%c0, %c0_0, %c0_1] : memref<4x16x16xf32, #tpu.memory_space<vmem>>, vector<4x16x16xf32>
    %c0_2 = arith.constant 0 : index
    %c2 = arith.constant 2 : index
    %c2_3 = arith.constant 2 : index
    %1 = vector.load %arg9[%c0_2, %c2, %c2_3] : memref<4x20x20xf32, #tpu.memory_space<vmem>>, vector<4x16x16xf32>
    tpu.vector_store %arg9[%c0_2, %c2, %c2_3], %0 {strides = array<i32>} : memref<4x20x20xf32, #tpu.memory_space<vmem>>, vector<4x16x16xf32>,
    %c0_i32 = arith.constant 0 : i32
    %2 = arith.cmpi sgt, %arg1, %c0_i32 : i32
    %3 = arith.extui %2 : i1 to i32
    %c0_i32_4 = arith.constant 0 : i32
    %4 = arith.cmpi ne, %3, %c0_i32_4 : i32
    scf.if %4 {
      %c0_131 = arith.constant 0 : index
      %c6 = arith.constant 6 : index
      %c0_132 = arith.constant 0 : index
      %215 = vector.load %arg3[%c0_131, %c6, %c0_132] : memref<4x8x16xf32, #tpu.memory_space<vmem>>, vector<4x2x16xf32>
      %c0_133 = arith.constant 0 : index
      %c0_134 = arith.constant 0 : index
      %c2_135 = arith.constant 2 : index
      %216 = vector.load %arg9[%c0_133, %c0_134, %c2_135] : memref<4x20x20xf32, #tpu.memory_space<vmem>>, vector<4x2x16xf32>
      tpu.vector_store %arg9[%c0_133, %c0_134, %c2_135], %215 {strides = array<i32>} : memref<4x20x20xf32, #tpu.memory_space<vmem>>, vector<4x2x16xf32>,
    } else {
    }
    %c0_i32_5 = arith.constant 0 : i32
    %5 = arith.cmpi eq, %arg1, %c0_i32_5 : i32
    %6 = arith.extui %5 : i1 to i32
    %c0_i32_6 = arith.constant 0 : i32
    %7 = arith.cmpi ne, %6, %c0_i32_6 : i32
    scf.if %7 {
      %c0_131 = arith.constant 0 : index
      %c2_132 = arith.constant 2 : index
      %c0_133 = arith.constant 0 : index
      %215 = vector.load %arg2[%c0_131, %c2_132, %c0_133] : memref<4x16x16xf32, #tpu.memory_space<vmem>>, vector<4x1x16xf32>
      %c0_134 = arith.constant 0 : index
      %c0_135 = arith.constant 0 : index
      %c2_136 = arith.constant 2 : index
      %216 = vector.load %arg9[%c0_134, %c0_135, %c2_136] : memref<4x20x20xf32, #tpu.memory_space<vmem>>, vector<4x1x16xf32>
      tpu.vector_store %arg9[%c0_134, %c0_135, %c2_136], %215 {strides = array<i32>} : memref<4x20x20xf32, #tpu.memory_space<vmem>>, vector<4x1x16xf32>,
      %c0_137 = arith.constant 0 : index
      %c1_138 = arith.constant 1 : index
      %c0_139 = arith.constant 0 : index
      %217 = vector.load %arg2[%c0_137, %c1_138, %c0_139] : memref<4x16x16xf32, #tpu.memory_space<vmem>>, vector<4x1x16xf32>
      %c0_140 = arith.constant 0 : index
      %c1_141 = arith.constant 1 : index
      %c2_142 = arith.constant 2 : index
      %218 = vector.load %arg9[%c0_140, %c1_141, %c2_142] : memref<4x20x20xf32, #tpu.memory_space<vmem>>, vector<4x1x16xf32>
      tpu.vector_store %arg9[%c0_140, %c1_141, %c2_142], %217 {strides = array<i32>} : memref<4x20x20xf32, #tpu.memory_space<vmem>>, vector<4x1x16xf32>,
    } else {
    }
    %c0_i32_7 = arith.constant 0 : i32
    %8 = arith.cmpi slt, %arg1, %c0_i32_7 : i32
    %9 = arith.extui %8 : i1 to i32
    %c0_i32_8 = arith.constant 0 : i32
    %10 = arith.cmpi ne, %9, %c0_i32_8 : i32
    scf.if %10 {
      %c0_131 = arith.constant 0 : index
      %c0_132 = arith.constant 0 : index
      %c0_133 = arith.constant 0 : index
      %215 = vector.load %arg4[%c0_131, %c0_132, %c0_133] : memref<4x8x16xf32, #tpu.memory_space<vmem>>, vector<4x2x16xf32>
      %c0_134 = arith.constant 0 : index
      %c18_135 = arith.constant 18 : index
      %c2_136 = arith.constant 2 : index
      %216 = vector.load %arg9[%c0_134, %c18_135, %c2_136] : memref<4x20x20xf32, #tpu.memory_space<vmem>>, vector<4x2x16xf32>
      tpu.vector_store %arg9[%c0_134, %c18_135, %c2_136], %215 {strides = array<i32>} : memref<4x20x20xf32, #tpu.memory_space<vmem>>, vector<4x2x16xf32>,
    } else {
    }
    %c0_i32_9 = arith.constant 0 : i32
    %11 = arith.cmpi eq, %arg1, %c0_i32_9 : i32
    %12 = arith.extui %11 : i1 to i32
    %c0_i32_10 = arith.constant 0 : i32
    %13 = arith.cmpi ne, %12, %c0_i32_10 : i32
    scf.if %13 {
      %c0_131 = arith.constant 0 : index
      %c14 = arith.constant 14 : index
      %c0_132 = arith.constant 0 : index
      %215 = vector.load %arg2[%c0_131, %c14, %c0_132] : memref<4x16x16xf32, #tpu.memory_space<vmem>>, vector<4x1x16xf32>
      %c0_133 = arith.constant 0 : index
      %c18_134 = arith.constant 18 : index
      %c2_135 = arith.constant 2 : index
      %216 = vector.load %arg9[%c0_133, %c18_134, %c2_135] : memref<4x20x20xf32, #tpu.memory_space<vmem>>, vector<4x1x16xf32>
      tpu.vector_store %arg9[%c0_133, %c18_134, %c2_135], %215 {strides = array<i32>} : memref<4x20x20xf32, #tpu.memory_space<vmem>>, vector<4x1x16xf32>,
      %c0_136 = arith.constant 0 : index
      %c13 = arith.constant 13 : index
      %c0_137 = arith.constant 0 : index
      %217 = vector.load %arg2[%c0_136, %c13, %c0_137] : memref<4x16x16xf32, #tpu.memory_space<vmem>>, vector<4x1x16xf32>
      %c0_138 = arith.constant 0 : index
      %c19_139 = arith.constant 19 : index
      %c2_140 = arith.constant 2 : index
      %218 = vector.load %arg9[%c0_138, %c19_139, %c2_140] : memref<4x20x20xf32, #tpu.memory_space<vmem>>, vector<4x1x16xf32>
      tpu.vector_store %arg9[%c0_138, %c19_139, %c2_140], %217 {strides = array<i32>} : memref<4x20x20xf32, #tpu.memory_space<vmem>>, vector<4x1x16xf32>,
    } else {
    }
    %c0_11 = arith.constant 0 : index
    %c0_12 = arith.constant 0 : index
    %c4 = arith.constant 4 : index
    %14 = vector.load %arg9[%c0_11, %c0_12, %c4] : memref<4x20x20xf32, #tpu.memory_space<vmem>>, vector<4x20x1xf32>
    %c0_13 = arith.constant 0 : index
    %c0_14 = arith.constant 0 : index
    %c0_15 = arith.constant 0 : index
    %15 = vector.load %arg9[%c0_13, %c0_14, %c0_15] : memref<4x20x20xf32, #tpu.memory_space<vmem>>, vector<4x20x1xf32>
    tpu.vector_store %arg9[%c0_13, %c0_14, %c0_15], %14 {strides = array<i32>} : memref<4x20x20xf32, #tpu.memory_space<vmem>>, vector<4x20x1xf32>,
    %c0_16 = arith.constant 0 : index
    %c0_17 = arith.constant 0 : index
    %c3 = arith.constant 3 : index
    %16 = vector.load %arg9[%c0_16, %c0_17, %c3] : memref<4x20x20xf32, #tpu.memory_space<vmem>>, vector<4x20x1xf32>
    %c0_18 = arith.constant 0 : index
    %c0_19 = arith.constant 0 : index
    %c1 = arith.constant 1 : index
    %17 = vector.load %arg9[%c0_18, %c0_19, %c1] : memref<4x20x20xf32, #tpu.memory_space<vmem>>, vector<4x20x1xf32>
    tpu.vector_store %arg9[%c0_18, %c0_19, %c1], %16 {strides = array<i32>} : memref<4x20x20xf32, #tpu.memory_space<vmem>>, vector<4x20x1xf32>,
    %c0_20 = arith.constant 0 : index
    %c0_21 = arith.constant 0 : index
    %c16 = arith.constant 16 : index
    %18 = vector.load %arg9[%c0_20, %c0_21, %c16] : memref<4x20x20xf32, #tpu.memory_space<vmem>>, vector<4x20x1xf32>
    %c0_22 = arith.constant 0 : index
    %c0_23 = arith.constant 0 : index
    %c18 = arith.constant 18 : index
    %19 = vector.load %arg9[%c0_22, %c0_23, %c18] : memref<4x20x20xf32, #tpu.memory_space<vmem>>, vector<4x20x1xf32>
    tpu.vector_store %arg9[%c0_22, %c0_23, %c18], %18 {strides = array<i32>} : memref<4x20x20xf32, #tpu.memory_space<vmem>>, vector<4x20x1xf32>,
    %c0_24 = arith.constant 0 : index
    %c0_25 = arith.constant 0 : index
    %c15 = arith.constant 15 : index
    %20 = vector.load %arg9[%c0_24, %c0_25, %c15] : memref<4x20x20xf32, #tpu.memory_space<vmem>>, vector<4x20x1xf32>
    %c0_26 = arith.constant 0 : index
    %c0_27 = arith.constant 0 : index
    %c19 = arith.constant 19 : index
    %21 = vector.load %arg9[%c0_26, %c0_27, %c19] : memref<4x20x20xf32, #tpu.memory_space<vmem>>, vector<4x20x1xf32>
    tpu.vector_store %arg9[%c0_26, %c0_27, %c19], %20 {strides = array<i32>} : memref<4x20x20xf32, #tpu.memory_space<vmem>>, vector<4x20x1xf32>,
    %c0_28 = arith.constant 0 : index
    %c0_29 = arith.constant 0 : index
    %c0_30 = arith.constant 0 : index
    %22 = vector.load %arg5[%c0_28, %c0_29, %c0_30] : memref<4x16x16xf32, #tpu.memory_space<vmem>>, vector<4x16x16xf32>
    %c0_31 = arith.constant 0 : index
    %c2_32 = arith.constant 2 : index
    %c2_33 = arith.constant 2 : index
    %23 = vector.load %arg10[%c0_31, %c2_32, %c2_33] : memref<4x20x20xf32, #tpu.memory_space<vmem>>, vector<4x16x16xf32>
    tpu.vector_store %arg10[%c0_31, %c2_32, %c2_33], %22 {strides = array<i32>} : memref<4x20x20xf32, #tpu.memory_space<vmem>>, vector<4x16x16xf32>,
    %c0_i32_34 = arith.constant 0 : i32
    %24 = arith.cmpi sgt, %arg1, %c0_i32_34 : i32
    %25 = arith.extui %24 : i1 to i32
    %c0_i32_35 = arith.constant 0 : i32
    %26 = arith.cmpi ne, %25, %c0_i32_35 : i32
    scf.if %26 {
      %c0_131 = arith.constant 0 : index
      %c6 = arith.constant 6 : index
      %c0_132 = arith.constant 0 : index
      %215 = vector.load %arg6[%c0_131, %c6, %c0_132] : memref<4x8x16xf32, #tpu.memory_space<vmem>>, vector<4x2x16xf32>
      %c0_133 = arith.constant 0 : index
      %c0_134 = arith.constant 0 : index
      %c2_135 = arith.constant 2 : index
      %216 = vector.load %arg10[%c0_133, %c0_134, %c2_135] : memref<4x20x20xf32, #tpu.memory_space<vmem>>, vector<4x2x16xf32>
      tpu.vector_store %arg10[%c0_133, %c0_134, %c2_135], %215 {strides = array<i32>} : memref<4x20x20xf32, #tpu.memory_space<vmem>>, vector<4x2x16xf32>,
    } else {
    }
    %c0_i32_36 = arith.constant 0 : i32
    %27 = arith.cmpi eq, %arg1, %c0_i32_36 : i32
    %28 = arith.extui %27 : i1 to i32
    %c0_i32_37 = arith.constant 0 : i32
    %29 = arith.cmpi ne, %28, %c0_i32_37 : i32
    scf.if %29 {
      %c0_131 = arith.constant 0 : index
      %c2_132 = arith.constant 2 : index
      %c0_133 = arith.constant 0 : index
      %215 = vector.load %arg5[%c0_131, %c2_132, %c0_133] : memref<4x16x16xf32, #tpu.memory_space<vmem>>, vector<4x1x16xf32>
      %c0_134 = arith.constant 0 : index
      %c0_135 = arith.constant 0 : index
      %c2_136 = arith.constant 2 : index
      %216 = vector.load %arg10[%c0_134, %c0_135, %c2_136] : memref<4x20x20xf32, #tpu.memory_space<vmem>>, vector<4x1x16xf32>
      tpu.vector_store %arg10[%c0_134, %c0_135, %c2_136], %215 {strides = array<i32>} : memref<4x20x20xf32, #tpu.memory_space<vmem>>, vector<4x1x16xf32>,
      %c0_137 = arith.constant 0 : index
      %c1_138 = arith.constant 1 : index
      %c0_139 = arith.constant 0 : index
      %217 = vector.load %arg5[%c0_137, %c1_138, %c0_139] : memref<4x16x16xf32, #tpu.memory_space<vmem>>, vector<4x1x16xf32>
      %c0_140 = arith.constant 0 : index
      %c1_141 = arith.constant 1 : index
      %c2_142 = arith.constant 2 : index
      %218 = vector.load %arg10[%c0_140, %c1_141, %c2_142] : memref<4x20x20xf32, #tpu.memory_space<vmem>>, vector<4x1x16xf32>
      tpu.vector_store %arg10[%c0_140, %c1_141, %c2_142], %217 {strides = array<i32>} : memref<4x20x20xf32, #tpu.memory_space<vmem>>, vector<4x1x16xf32>,
    } else {
    }
    %c0_i32_38 = arith.constant 0 : i32
    %30 = arith.cmpi slt, %arg1, %c0_i32_38 : i32
    %31 = arith.extui %30 : i1 to i32
    %c0_i32_39 = arith.constant 0 : i32
    %32 = arith.cmpi ne, %31, %c0_i32_39 : i32
    scf.if %32 {
      %c0_131 = arith.constant 0 : index
      %c0_132 = arith.constant 0 : index
      %c0_133 = arith.constant 0 : index
      %215 = vector.load %arg7[%c0_131, %c0_132, %c0_133] : memref<4x8x16xf32, #tpu.memory_space<vmem>>, vector<4x2x16xf32>
      %c0_134 = arith.constant 0 : index
      %c18_135 = arith.constant 18 : index
      %c2_136 = arith.constant 2 : index
      %216 = vector.load %arg10[%c0_134, %c18_135, %c2_136] : memref<4x20x20xf32, #tpu.memory_space<vmem>>, vector<4x2x16xf32>
      tpu.vector_store %arg10[%c0_134, %c18_135, %c2_136], %215 {strides = array<i32>} : memref<4x20x20xf32, #tpu.memory_space<vmem>>, vector<4x2x16xf32>,
    } else {
    }
    %c0_i32_40 = arith.constant 0 : i32
    %33 = arith.cmpi eq, %arg1, %c0_i32_40 : i32
    %34 = arith.extui %33 : i1 to i32
    %c0_i32_41 = arith.constant 0 : i32
    %35 = arith.cmpi ne, %34, %c0_i32_41 : i32
    scf.if %35 {
      %c0_131 = arith.constant 0 : index
      %c14 = arith.constant 14 : index
      %c0_132 = arith.constant 0 : index
      %215 = vector.load %arg5[%c0_131, %c14, %c0_132] : memref<4x16x16xf32, #tpu.memory_space<vmem>>, vector<4x1x16xf32>
      %c0_133 = arith.constant 0 : index
      %c18_134 = arith.constant 18 : index
      %c2_135 = arith.constant 2 : index
      %216 = vector.load %arg10[%c0_133, %c18_134, %c2_135] : memref<4x20x20xf32, #tpu.memory_space<vmem>>, vector<4x1x16xf32>
      tpu.vector_store %arg10[%c0_133, %c18_134, %c2_135], %215 {strides = array<i32>} : memref<4x20x20xf32, #tpu.memory_space<vmem>>, vector<4x1x16xf32>,
      %c0_136 = arith.constant 0 : index
      %c13 = arith.constant 13 : index
      %c0_137 = arith.constant 0 : index
      %217 = vector.load %arg5[%c0_136, %c13, %c0_137] : memref<4x16x16xf32, #tpu.memory_space<vmem>>, vector<4x1x16xf32>
      %c0_138 = arith.constant 0 : index
      %c19_139 = arith.constant 19 : index
      %c2_140 = arith.constant 2 : index
      %218 = vector.load %arg10[%c0_138, %c19_139, %c2_140] : memref<4x20x20xf32, #tpu.memory_space<vmem>>, vector<4x1x16xf32>
      tpu.vector_store %arg10[%c0_138, %c19_139, %c2_140], %217 {strides = array<i32>} : memref<4x20x20xf32, #tpu.memory_space<vmem>>, vector<4x1x16xf32>,
    } else {
    }
    %c0_42 = arith.constant 0 : index
    %c0_43 = arith.constant 0 : index
    %c4_44 = arith.constant 4 : index
    %36 = vector.load %arg10[%c0_42, %c0_43, %c4_44] : memref<4x20x20xf32, #tpu.memory_space<vmem>>, vector<4x20x1xf32>
    %c0_45 = arith.constant 0 : index
    %c0_46 = arith.constant 0 : index
    %c0_47 = arith.constant 0 : index
    %37 = vector.load %arg10[%c0_45, %c0_46, %c0_47] : memref<4x20x20xf32, #tpu.memory_space<vmem>>, vector<4x20x1xf32>
    tpu.vector_store %arg10[%c0_45, %c0_46, %c0_47], %36 {strides = array<i32>} : memref<4x20x20xf32, #tpu.memory_space<vmem>>, vector<4x20x1xf32>,
    %c0_48 = arith.constant 0 : index
    %c0_49 = arith.constant 0 : index
    %c3_50 = arith.constant 3 : index
    %38 = vector.load %arg10[%c0_48, %c0_49, %c3_50] : memref<4x20x20xf32, #tpu.memory_space<vmem>>, vector<4x20x1xf32>
    %c0_51 = arith.constant 0 : index
    %c0_52 = arith.constant 0 : index
    %c1_53 = arith.constant 1 : index
    %39 = vector.load %arg10[%c0_51, %c0_52, %c1_53] : memref<4x20x20xf32, #tpu.memory_space<vmem>>, vector<4x20x1xf32>
    tpu.vector_store %arg10[%c0_51, %c0_52, %c1_53], %38 {strides = array<i32>} : memref<4x20x20xf32, #tpu.memory_space<vmem>>, vector<4x20x1xf32>,
    %c0_54 = arith.constant 0 : index
    %c0_55 = arith.constant 0 : index
    %c16_56 = arith.constant 16 : index
    %40 = vector.load %arg10[%c0_54, %c0_55, %c16_56] : memref<4x20x20xf32, #tpu.memory_space<vmem>>, vector<4x20x1xf32>
    %c0_57 = arith.constant 0 : index
    %c0_58 = arith.constant 0 : index
    %c18_59 = arith.constant 18 : index
    %41 = vector.load %arg10[%c0_57, %c0_58, %c18_59] : memref<4x20x20xf32, #tpu.memory_space<vmem>>, vector<4x20x1xf32>
    tpu.vector_store %arg10[%c0_57, %c0_58, %c18_59], %40 {strides = array<i32>} : memref<4x20x20xf32, #tpu.memory_space<vmem>>, vector<4x20x1xf32>,
    %c0_60 = arith.constant 0 : index
    %c0_61 = arith.constant 0 : index
    %c15_62 = arith.constant 15 : index
    %42 = vector.load %arg10[%c0_60, %c0_61, %c15_62] : memref<4x20x20xf32, #tpu.memory_space<vmem>>, vector<4x20x1xf32>
    %c0_63 = arith.constant 0 : index
    %c0_64 = arith.constant 0 : index
    %c19_65 = arith.constant 19 : index
    %43 = vector.load %arg10[%c0_63, %c0_64, %c19_65] : memref<4x20x20xf32, #tpu.memory_space<vmem>>, vector<4x20x1xf32>
    tpu.vector_store %arg10[%c0_63, %c0_64, %c19_65], %42 {strides = array<i32>} : memref<4x20x20xf32, #tpu.memory_space<vmem>>, vector<4x20x1xf32>,
    %c0_66 = arith.constant 0 : index
    %c0_67 = arith.constant 0 : index
    %c0_68 = arith.constant 0 : index
    %44 = vector.load %arg9[%c0_66, %c0_67, %c0_68] : memref<4x20x20xf32, #tpu.memory_space<vmem>>, vector<4x16x20xf32>
    %c0_69 = arith.constant 0 : index
    %c0_70 = arith.constant 0 : index
    %c0_71 = arith.constant 0 : index
    %45 = vector.load %arg10[%c0_69, %c0_70, %c0_71] : memref<4x20x20xf32, #tpu.memory_space<vmem>>, vector<4x16x20xf32>
    %cst = arith.constant 0.120078385 : f32
    %46 = vector.broadcast %cst : f32 to vector<4x16x20xf32>
    %47 = arith.mulf %46, %44 : vector<4x16x20xf32>
    %cst_72 = arith.constant 0.120078385 : f32
    %48 = vector.broadcast %cst_72 : f32 to vector<4x16x20xf32>
    %49 = arith.mulf %48, %45 : vector<4x16x20xf32>
    %50 = arith.mulf %47, %44 : vector<4x16x20xf32>
    %51 = arith.mulf %49, %45 : vector<4x16x20xf32>
    %52 = arith.mulf %47, %45 : vector<4x16x20xf32>
    %c0_73 = arith.constant 0 : index
    %c1_74 = arith.constant 1 : index
    %c0_75 = arith.constant 0 : index
    %53 = vector.load %arg9[%c0_73, %c1_74, %c0_75] : memref<4x20x20xf32, #tpu.memory_space<vmem>>, vector<4x16x20xf32>
    %c0_76 = arith.constant 0 : index
    %c1_77 = arith.constant 1 : index
    %c0_78 = arith.constant 0 : index
    %54 = vector.load %arg10[%c0_76, %c1_77, %c0_78] : memref<4x20x20xf32, #tpu.memory_space<vmem>>, vector<4x16x20xf32>
    %cst_79 = arith.constant 0.233880758 : f32
    %55 = vector.broadcast %cst_79 : f32 to vector<4x16x20xf32>
    %56 = arith.mulf %55, %53 : vector<4x16x20xf32>
    %cst_80 = arith.constant 0.233880758 : f32
    %57 = vector.broadcast %cst_80 : f32 to vector<4x16x20xf32>
    %58 = arith.mulf %57, %54 : vector<4x16x20xf32>
    %59 = arith.mulf %56, %53 : vector<4x16x20xf32>
    %60 = arith.mulf %58, %54 : vector<4x16x20xf32>
    %61 = arith.mulf %56, %54 : vector<4x16x20xf32>
    %62 = arith.addf %47, %56 : vector<4x16x20xf32>
    %63 = arith.addf %49, %58 : vector<4x16x20xf32>
    %64 = arith.addf %50, %59 : vector<4x16x20xf32>
    %65 = arith.addf %51, %60 : vector<4x16x20xf32>
    %66 = arith.addf %52, %61 : vector<4x16x20xf32>
    %c0_81 = arith.constant 0 : index
    %c2_82 = arith.constant 2 : index
    %c0_83 = arith.constant 0 : index
    %67 = vector.load %arg9[%c0_81, %c2_82, %c0_83] : memref<4x20x20xf32, #tpu.memory_space<vmem>>, vector<4x16x20xf32>
    %c0_84 = arith.constant 0 : index
    %c2_85 = arith.constant 2 : index
    %c0_86 = arith.constant 0 : index
    %68 = vector.load %arg10[%c0_84, %c2_85, %c0_86] : memref<4x20x20xf32, #tpu.memory_space<vmem>>, vector<4x16x20xf32>
    %cst_87 = arith.constant 0.292081714 : f32
    %69 = vector.broadcast %cst_87 : f32 to vector<4x16x20xf32>
    %70 = arith.mulf %69, %67 : vector<4x16x20xf32>
    %cst_88 = arith.constant 0.292081714 : f32
    %71 = vector.broadcast %cst_88 : f32 to vector<4x16x20xf32>
    %72 = arith.mulf %71, %68 : vector<4x16x20xf32>
    %73 = arith.mulf %70, %67 : vector<4x16x20xf32>
    %74 = arith.mulf %72, %68 : vector<4x16x20xf32>
    %75 = arith.mulf %70, %68 : vector<4x16x20xf32>
    %76 = arith.addf %62, %70 : vector<4x16x20xf32>
    %77 = arith.addf %63, %72 : vector<4x16x20xf32>
    %78 = arith.addf %64, %73 : vector<4x16x20xf32>
    %79 = arith.addf %65, %74 : vector<4x16x20xf32>
    %80 = arith.addf %66, %75 : vector<4x16x20xf32>
    %c0_89 = arith.constant 0 : index
    %c3_90 = arith.constant 3 : index
    %c0_91 = arith.constant 0 : index
    %81 = vector.load %arg9[%c0_89, %c3_90, %c0_91] : memref<4x20x20xf32, #tpu.memory_space<vmem>>, vector<4x16x20xf32>
    %c0_92 = arith.constant 0 : index
    %c3_93 = arith.constant 3 : index
    %c0_94 = arith.constant 0 : index
    %82 = vector.load %arg10[%c0_92, %c3_93, %c0_94] : memref<4x20x20xf32, #tpu.memory_space<vmem>>, vector<4x16x20xf32>
    %cst_95 = arith.constant 0.233880758 : f32
    %83 = vector.broadcast %cst_95 : f32 to vector<4x16x20xf32>
    %84 = arith.mulf %83, %81 : vector<4x16x20xf32>
    %cst_96 = arith.constant 0.233880758 : f32
    %85 = vector.broadcast %cst_96 : f32 to vector<4x16x20xf32>
    %86 = arith.mulf %85, %82 : vector<4x16x20xf32>
    %87 = arith.mulf %84, %81 : vector<4x16x20xf32>
    %88 = arith.mulf %86, %82 : vector<4x16x20xf32>
    %89 = arith.mulf %84, %82 : vector<4x16x20xf32>
    %90 = arith.addf %76, %84 : vector<4x16x20xf32>
    %91 = arith.addf %77, %86 : vector<4x16x20xf32>
    %92 = arith.addf %78, %87 : vector<4x16x20xf32>
    %93 = arith.addf %79, %88 : vector<4x16x20xf32>
    %94 = arith.addf %80, %89 : vector<4x16x20xf32>
    %c0_97 = arith.constant 0 : index
    %c4_98 = arith.constant 4 : index
    %c0_99 = arith.constant 0 : index
    %95 = vector.load %arg9[%c0_97, %c4_98, %c0_99] : memref<4x20x20xf32, #tpu.memory_space<vmem>>, vector<4x16x20xf32>
    %c0_100 = arith.constant 0 : index
    %c4_101 = arith.constant 4 : index
    %c0_102 = arith.constant 0 : index
    %96 = vector.load %arg10[%c0_100, %c4_101, %c0_102] : memref<4x20x20xf32, #tpu.memory_space<vmem>>, vector<4x16x20xf32>
    %cst_103 = arith.constant 0.120078385 : f32
    %97 = vector.broadcast %cst_103 : f32 to vector<4x16x20xf32>
    %98 = arith.mulf %97, %95 : vector<4x16x20xf32>
    %cst_104 = arith.constant 0.120078385 : f32
    %99 = vector.broadcast %cst_104 : f32 to vector<4x16x20xf32>
    %100 = arith.mulf %99, %96 : vector<4x16x20xf32>
    %101 = arith.mulf %98, %95 : vector<4x16x20xf32>
    %102 = arith.mulf %100, %96 : vector<4x16x20xf32>
    %103 = arith.mulf %98, %96 : vector<4x16x20xf32>
    %104 = arith.addf %90, %98 : vector<4x16x20xf32>
    %105 = arith.addf %91, %100 : vector<4x16x20xf32>
    %106 = arith.addf %92, %101 : vector<4x16x20xf32>
    %107 = arith.addf %93, %102 : vector<4x16x20xf32>
    %108 = arith.addf %94, %103 : vector<4x16x20xf32>
    %109 = vector.extract_strided_slice %104 {offsets = [0, 0, 0], sizes = [4, 16, 16], strides = [1, 1, 1]} : vector<4x16x20xf32> to vector<4x16x16xf32>
    %110 = vector.extract_strided_slice %104 {offsets = [0, 0, 1], sizes = [4, 16, 16], strides = [1, 1, 1]} : vector<4x16x20xf32> to vector<4x16x16xf32>
    %111 = vector.extract_strided_slice %104 {offsets = [0, 0, 2], sizes = [4, 16, 16], strides = [1, 1, 1]} : vector<4x16x20xf32> to vector<4x16x16xf32>
    %112 = vector.extract_strided_slice %104 {offsets = [0, 0, 3], sizes = [4, 16, 16], strides = [1, 1, 1]} : vector<4x16x20xf32> to vector<4x16x16xf32>
    %113 = vector.extract_strided_slice %104 {offsets = [0, 0, 4], sizes = [4, 16, 16], strides = [1, 1, 1]} : vector<4x16x20xf32> to vector<4x16x16xf32>
    %cst_105 = arith.constant 0.292081714 : f32
    %114 = vector.broadcast %cst_105 : f32 to vector<4x16x16xf32>
    %115 = arith.mulf %114, %111 : vector<4x16x16xf32>
    %116 = arith.addf %110, %112 : vector<4x16x16xf32>
    %cst_106 = arith.constant 0.233880758 : f32
    %117 = vector.broadcast %cst_106 : f32 to vector<4x16x16xf32>
    %118 = arith.mulf %117, %116 : vector<4x16x16xf32>
    %119 = arith.addf %115, %118 : vector<4x16x16xf32>
    %120 = arith.addf %109, %113 : vector<4x16x16xf32>
    %cst_107 = arith.constant 0.120078385 : f32
    %121 = vector.broadcast %cst_107 : f32 to vector<4x16x16xf32>
    %122 = arith.mulf %121, %120 : vector<4x16x16xf32>
    %123 = arith.addf %119, %122 : vector<4x16x16xf32>
    %124 = vector.extract_strided_slice %105 {offsets = [0, 0, 0], sizes = [4, 16, 16], strides = [1, 1, 1]} : vector<4x16x20xf32> to vector<4x16x16xf32>
    %125 = vector.extract_strided_slice %105 {offsets = [0, 0, 1], sizes = [4, 16, 16], strides = [1, 1, 1]} : vector<4x16x20xf32> to vector<4x16x16xf32>
    %126 = vector.extract_strided_slice %105 {offsets = [0, 0, 2], sizes = [4, 16, 16], strides = [1, 1, 1]} : vector<4x16x20xf32> to vector<4x16x16xf32>
    %127 = vector.extract_strided_slice %105 {offsets = [0, 0, 3], sizes = [4, 16, 16], strides = [1, 1, 1]} : vector<4x16x20xf32> to vector<4x16x16xf32>
    %128 = vector.extract_strided_slice %105 {offsets = [0, 0, 4], sizes = [4, 16, 16], strides = [1, 1, 1]} : vector<4x16x20xf32> to vector<4x16x16xf32>
    %cst_108 = arith.constant 0.292081714 : f32
    %129 = vector.broadcast %cst_108 : f32 to vector<4x16x16xf32>
    %130 = arith.mulf %129, %126 : vector<4x16x16xf32>
    %131 = arith.addf %125, %127 : vector<4x16x16xf32>
    %cst_109 = arith.constant 0.233880758 : f32
    %132 = vector.broadcast %cst_109 : f32 to vector<4x16x16xf32>
    %133 = arith.mulf %132, %131 : vector<4x16x16xf32>
    %134 = arith.addf %130, %133 : vector<4x16x16xf32>
    %135 = arith.addf %124, %128 : vector<4x16x16xf32>
    %cst_110 = arith.constant 0.120078385 : f32
    %136 = vector.broadcast %cst_110 : f32 to vector<4x16x16xf32>
    %137 = arith.mulf %136, %135 : vector<4x16x16xf32>
    %138 = arith.addf %134, %137 : vector<4x16x16xf32>
    %139 = vector.extract_strided_slice %106 {offsets = [0, 0, 0], sizes = [4, 16, 16], strides = [1, 1, 1]} : vector<4x16x20xf32> to vector<4x16x16xf32>
    %140 = vector.extract_strided_slice %106 {offsets = [0, 0, 1], sizes = [4, 16, 16], strides = [1, 1, 1]} : vector<4x16x20xf32> to vector<4x16x16xf32>
    %141 = vector.extract_strided_slice %106 {offsets = [0, 0, 2], sizes = [4, 16, 16], strides = [1, 1, 1]} : vector<4x16x20xf32> to vector<4x16x16xf32>
    %142 = vector.extract_strided_slice %106 {offsets = [0, 0, 3], sizes = [4, 16, 16], strides = [1, 1, 1]} : vector<4x16x20xf32> to vector<4x16x16xf32>
    %143 = vector.extract_strided_slice %106 {offsets = [0, 0, 4], sizes = [4, 16, 16], strides = [1, 1, 1]} : vector<4x16x20xf32> to vector<4x16x16xf32>
    %cst_111 = arith.constant 0.292081714 : f32
    %144 = vector.broadcast %cst_111 : f32 to vector<4x16x16xf32>
    %145 = arith.mulf %144, %141 : vector<4x16x16xf32>
    %146 = arith.addf %140, %142 : vector<4x16x16xf32>
    %cst_112 = arith.constant 0.233880758 : f32
    %147 = vector.broadcast %cst_112 : f32 to vector<4x16x16xf32>
    %148 = arith.mulf %147, %146 : vector<4x16x16xf32>
    %149 = arith.addf %145, %148 : vector<4x16x16xf32>
    %150 = arith.addf %139, %143 : vector<4x16x16xf32>
    %cst_113 = arith.constant 0.120078385 : f32
    %151 = vector.broadcast %cst_113 : f32 to vector<4x16x16xf32>
    %152 = arith.mulf %151, %150 : vector<4x16x16xf32>
    %153 = arith.addf %149, %152 : vector<4x16x16xf32>
    %154 = vector.extract_strided_slice %107 {offsets = [0, 0, 0], sizes = [4, 16, 16], strides = [1, 1, 1]} : vector<4x16x20xf32> to vector<4x16x16xf32>
    %155 = vector.extract_strided_slice %107 {offsets = [0, 0, 1], sizes = [4, 16, 16], strides = [1, 1, 1]} : vector<4x16x20xf32> to vector<4x16x16xf32>
    %156 = vector.extract_strided_slice %107 {offsets = [0, 0, 2], sizes = [4, 16, 16], strides = [1, 1, 1]} : vector<4x16x20xf32> to vector<4x16x16xf32>
    %157 = vector.extract_strided_slice %107 {offsets = [0, 0, 3], sizes = [4, 16, 16], strides = [1, 1, 1]} : vector<4x16x20xf32> to vector<4x16x16xf32>
    %158 = vector.extract_strided_slice %107 {offsets = [0, 0, 4], sizes = [4, 16, 16], strides = [1, 1, 1]} : vector<4x16x20xf32> to vector<4x16x16xf32>
    %cst_114 = arith.constant 0.292081714 : f32
    %159 = vector.broadcast %cst_114 : f32 to vector<4x16x16xf32>
    %160 = arith.mulf %159, %156 : vector<4x16x16xf32>
    %161 = arith.addf %155, %157 : vector<4x16x16xf32>
    %cst_115 = arith.constant 0.233880758 : f32
    %162 = vector.broadcast %cst_115 : f32 to vector<4x16x16xf32>
    %163 = arith.mulf %162, %161 : vector<4x16x16xf32>
    %164 = arith.addf %160, %163 : vector<4x16x16xf32>
    %165 = arith.addf %154, %158 : vector<4x16x16xf32>
    %cst_116 = arith.constant 0.120078385 : f32
    %166 = vector.broadcast %cst_116 : f32 to vector<4x16x16xf32>
    %167 = arith.mulf %166, %165 : vector<4x16x16xf32>
    %168 = arith.addf %164, %167 : vector<4x16x16xf32>
    %169 = vector.extract_strided_slice %108 {offsets = [0, 0, 0], sizes = [4, 16, 16], strides = [1, 1, 1]} : vector<4x16x20xf32> to vector<4x16x16xf32>
    %170 = vector.extract_strided_slice %108 {offsets = [0, 0, 1], sizes = [4, 16, 16], strides = [1, 1, 1]} : vector<4x16x20xf32> to vector<4x16x16xf32>
    %171 = vector.extract_strided_slice %108 {offsets = [0, 0, 2], sizes = [4, 16, 16], strides = [1, 1, 1]} : vector<4x16x20xf32> to vector<4x16x16xf32>
    %172 = vector.extract_strided_slice %108 {offsets = [0, 0, 3], sizes = [4, 16, 16], strides = [1, 1, 1]} : vector<4x16x20xf32> to vector<4x16x16xf32>
    %173 = vector.extract_strided_slice %108 {offsets = [0, 0, 4], sizes = [4, 16, 16], strides = [1, 1, 1]} : vector<4x16x20xf32> to vector<4x16x16xf32>
    %cst_117 = arith.constant 0.292081714 : f32
    %174 = vector.broadcast %cst_117 : f32 to vector<4x16x16xf32>
    %175 = arith.mulf %174, %171 : vector<4x16x16xf32>
    %176 = arith.addf %170, %172 : vector<4x16x16xf32>
    %cst_118 = arith.constant 0.233880758 : f32
    %177 = vector.broadcast %cst_118 : f32 to vector<4x16x16xf32>
    %178 = arith.mulf %177, %176 : vector<4x16x16xf32>
    %179 = arith.addf %175, %178 : vector<4x16x16xf32>
    %180 = arith.addf %169, %173 : vector<4x16x16xf32>
    %cst_119 = arith.constant 0.120078385 : f32
    %181 = vector.broadcast %cst_119 : f32 to vector<4x16x16xf32>
    %182 = arith.mulf %181, %180 : vector<4x16x16xf32>
    %183 = arith.addf %179, %182 : vector<4x16x16xf32>
    %184 = arith.mulf %123, %123 : vector<4x16x16xf32>
    %185 = arith.mulf %138, %138 : vector<4x16x16xf32>
    %186 = arith.mulf %123, %138 : vector<4x16x16xf32>
    %187 = arith.subf %153, %184 : vector<4x16x16xf32>
    %188 = arith.subf %168, %185 : vector<4x16x16xf32>
    %189 = arith.subf %183, %186 : vector<4x16x16xf32>
    %cst_120 = arith.constant 2.000000e+00 : f32
    %190 = vector.broadcast %cst_120 : f32 to vector<4x16x16xf32>
    %191 = arith.mulf %190, %186 : vector<4x16x16xf32>
    %cst_121 = arith.constant 9.99999974E-5 : f32
    %192 = vector.broadcast %cst_121 : f32 to vector<4x16x16xf32>
    %193 = arith.addf %191, %192 : vector<4x16x16xf32>
    %cst_122 = arith.constant 2.000000e+00 : f32
    %194 = vector.broadcast %cst_122 : f32 to vector<4x16x16xf32>
    %195 = arith.mulf %194, %189 : vector<4x16x16xf32>
    %cst_123 = arith.constant 8.99999984E-4 : f32
    %196 = vector.broadcast %cst_123 : f32 to vector<4x16x16xf32>
    %197 = arith.addf %195, %196 : vector<4x16x16xf32>
    %198 = arith.mulf %193, %197 : vector<4x16x16xf32>
    %199 = arith.addf %184, %185 : vector<4x16x16xf32>
    %cst_124 = arith.constant 9.99999974E-5 : f32
    %200 = vector.broadcast %cst_124 : f32 to vector<4x16x16xf32>
    %201 = arith.addf %199, %200 : vector<4x16x16xf32>
    %202 = arith.addf %187, %188 : vector<4x16x16xf32>
    %cst_125 = arith.constant 8.99999984E-4 : f32
    %203 = vector.broadcast %cst_125 : f32 to vector<4x16x16xf32>
    %204 = arith.addf %202, %203 : vector<4x16x16xf32>
    %205 = arith.mulf %201, %204 : vector<4x16x16xf32>
    %cst_126 = arith.constant 9.99999996E-13 : f32
    %206 = vector.broadcast %cst_126 : f32 to vector<4x16x16xf32>
    %207 = arith.addf %205, %206 : vector<4x16x16xf32>
    %208 = tpu.reciprocal %207 {approx = true} : vector<4x16x16xf32> -> vector<4x16x16xf32>
    %209 = arith.mulf %207, %208 : vector<4x16x16xf32>
    %cst_127 = arith.constant 2.000000e+00 : f32
    %210 = vector.broadcast %cst_127 : f32 to vector<4x16x16xf32>
    %211 = arith.subf %210, %209 : vector<4x16x16xf32>
    %212 = arith.mulf %208, %211 : vector<4x16x16xf32>
    %213 = arith.mulf %198, %212 : vector<4x16x16xf32>
    %c0_128 = arith.constant 0 : index
    %c0_129 = arith.constant 0 : index
    %c0_130 = arith.constant 0 : index
    %214 = vector.load %arg8[%c0_128, %c0_129, %c0_130] : memref<4x16x16xf32, #tpu.memory_space<vmem>>, vector<4x16x16xf32>
    tpu.vector_store %arg8[%c0_128, %c0_129, %c0_130], %213 {strides = array<i32>} : memref<4x16x16xf32, #tpu.memory_space<vmem>>, vector<4x16x16xf32>,
    return
  }
  func.func @transform_0(%arg0: i32, %arg1: i32) -> (i32, i32, i32) {
    %c0_i32 = arith.constant 0 : i32
    %c0_i32_0 = arith.constant 0 : i32
    return %arg0, %arg1, %c0_i32 : i32, i32, i32
  }
  func.func @transform_1(%arg0: i32, %arg1: i32) -> (i32, i32, i32) {
    %c0_i32 = arith.constant 0 : i32
    %c0_i32_0 = arith.constant 0 : i32
    %c0_i32_1 = arith.constant 0 : i32
    return %arg0, %c0_i32, %c0_i32_0 : i32, i32, i32
  }
  func.func @transform_2(%arg0: i32, %arg1: i32) -> (i32, i32, i32) {
    %c0_i32 = arith.constant 0 : i32
    %c0_i32_0 = arith.constant 0 : i32
    %c0_i32_1 = arith.constant 0 : i32
    return %arg0, %c0_i32, %c0_i32_0 : i32, i32, i32
  }
  func.func @transform_3(%arg0: i32, %arg1: i32) -> (i32, i32, i32) {
    %c0_i32 = arith.constant 0 : i32
    %c0_i32_0 = arith.constant 0 : i32
    return %arg0, %arg1, %c0_i32 : i32, i32, i32
  }
  func.func @transform_4(%arg0: i32, %arg1: i32) -> (i32, i32, i32) {
    %c0_i32 = arith.constant 0 : i32
    %c0_i32_0 = arith.constant 0 : i32
    %c0_i32_1 = arith.constant 0 : i32
    return %arg0, %c0_i32, %c0_i32_0 : i32, i32, i32
  }
  func.func @transform_5(%arg0: i32, %arg1: i32) -> (i32, i32, i32) {
    %c0_i32 = arith.constant 0 : i32
    %c0_i32_0 = arith.constant 0 : i32
    %c0_i32_1 = arith.constant 0 : i32
    return %arg0, %c0_i32, %c0_i32_0 : i32, i32, i32
  }
  func.func @transform_6(%arg0: i32, %arg1: i32) -> (i32, i32, i32) {
    %c0_i32 = arith.constant 0 : i32
    %c0_i32_0 = arith.constant 0 : i32
    return %arg0, %arg1, %c0_i32 : i32, i32, i32
  }
}

</mosaic_0001>

<llo_original>
// kernel: tpu_custom_call.1
$region0: #{tpu_custom_call.1}
  #allocation0 [shape = 'u32[]', space=smem, size = 0x4, offset = 0x4, fixed_abs, tag = 'smem constant byte address 0x4 - core index']
  #allocation1 [shape = 'u32[72,128]{1,0:T(1,128)}', space=vmem, size = 0x9000, scoped, tag = 'internal scratch']
  #allocation2 [shape = 'f32[4,20,20]{2,1,0:T(8,128)}', space=vmem, size = 0xc000, scoped, tag = 'scratch operand']
  #allocation3 [shape = 'f32[4,20,20]{2,1,0:T(8,128)}', space=vmem, size = 0xc000, scoped, tag = 'scratch operand']
  %s0 = inlined_call_operand.hbm [shape: f32[8,16,16], index: 0, kind: input, shape index: {}]
  %s1 = inlined_call_operand.hbm [shape: f32[8,16,16], index: 1, kind: input, shape index: {}]
  %s2 = inlined_call_operand.hbm [shape: f32[8,16,16], index: 2, kind: input, shape index: {}]
  %s3 = inlined_call_operand.hbm [shape: f32[8,16,16], index: 3, kind: input, shape index: {}]
  %s4 = inlined_call_operand.hbm [shape: f32[8,16,16], index: 4, kind: input, shape index: {}]
  %s5 = inlined_call_operand.hbm [shape: f32[8,16,16], index: 5, kind: input, shape index: {}]
  %s6 = inlined_call_operand.hbm [shape: f32[8,16,16], index: 6, kind: output, shape index: {}]
  %s7 = sld [smem:[#allocation0]]
  $region113: #{tpu_custom_call.1} parent=0
    _
  %s9 = ssub.s32 1, %s7
  %s10 = scalar_select 0, %s9, %s7
  $region1: #{tpu_custom_call.1} parent=0
    #allocation4 [shape = 'u8[65536]{0}', space=vmem, size = 0x10000, scoped, tag = 'input window, operand 0']
    #allocation5 [shape = 's32[2]{0}', space=sflag, size = 0x8, scoped, tag = 'scoped memory for tpu_custom_call.1']
    #allocation6 [shape = 's32[2]{0}', space=sflag, size = 0x8, scoped, tag = 'scoped memory for tpu_custom_call.1']
    #allocation7 [shape = 'u8[32768]{0}', space=vmem, size = 0x8000, scoped, tag = 'input window, operand 1']
    #allocation8 [shape = 's32[2]{0}', space=sflag, size = 0x8, scoped, tag = 'scoped memory for tpu_custom_call.1']
    #allocation9 [shape = 'u8[32768]{0}', space=vmem, size = 0x8000, scoped, tag = 'input window, operand 2']
    #allocation10 [shape = 'u8[65536]{0}', space=vmem, size = 0x10000, scoped, tag = 'input window, operand 3']
    #allocation11 [shape = 's32[2]{0}', space=sflag, size = 0x8, scoped, tag = 'scoped memory for tpu_custom_call.1']
    #allocation12 [shape = 'u8[32768]{0}', space=vmem, size = 0x8000, scoped, tag = 'input window, operand 4']
    #allocation13 [shape = 'u8[32768]{0}', space=vmem, size = 0x8000, scoped, tag = 'input window, operand 5']
    #allocation14 [shape = 's32[2]{0}', space=sflag, size = 0x8, scoped, tag = 'scoped memory for tpu_custom_call.1']
    #allocation15 [shape = 'u8[65536]{0}', space=vmem, size = 0x10000, scoped, tag = 'output window, operand 0']
    %11 = vsyncpa [#allocation5], 0
    %s12 = scalar_lea.sflag [#allocation5], 1
    %13 = vsyncpa %s12, 0
    %14 = vsyncpa [#allocation8], 0
    %s15 = scalar_lea.sflag [#allocation8], 1
    %16 = vsyncpa %s15, 0
    %17 = vsyncpa [#allocation11], 0
    %s18 = scalar_lea.sflag [#allocation11], 1
    %19 = vsyncpa %s18, 0
    %20 = vsyncpa [#allocation14], 0
    %s21 = scalar_lea.sflag [#allocation14], 1
    %22 = vsyncpa %s21, 0
    %23 = vsyncpa [#allocation6], 0
    %s24 = scalar_lea.sflag [#allocation6], 1
    %25 = vsyncpa %s24, 0
    loop: start=0, step=1, limit=4
    $region2: #{tpu_custom_call.1} parent=1 // loop_pre_header
      _
    $region3: #{tpu_custom_call.1} parent=1 // loop_header
      %s27 = sphi 0, %s31
      %p28 = scmp.ge.s32.totalorder %s27, 4
      %s34 = sphi 0, %s46
      %s35 = sphi 0, %s42
      %s36 = sphi 0, %s34
      %s37 = sphi 0, %s35
      %s38 = sphi 0, %s36
      %s39 = sphi 0, %s37
      %s51 = sphi 0, %s53
      %s54 = sphi 0, %s51
      %s55 = sphi 0, %s54
      %s71 = sphi 0, %s55
      %s77 = sphi 0, %s79
      %s80 = sphi 0, %s77
      %s81 = sphi 0, %s80
      %s97 = sphi 0, %s81
      %s103 = sphi 0, %s105
      %s106 = sphi 0, %s103
      %s107 = sphi 0, %s106
      %s123 = sphi 0, %s107
      %s131 = sphi 0, %s133
      %s134 = sphi 0, %s131
      %s135 = sphi 0, %s134
      %s151 = sphi 0, %s135
      %s157 = sphi 0, %s159
      %s160 = sphi 0, %s157
      %s161 = sphi 0, %s160
      %s177 = sphi 0, %s161
      %s183 = sphi 0, %s185
      %s186 = sphi 0, %s183
      %s187 = sphi 0, %s186
      %s203 = sphi 0, %s187
      %s211 = sphi 0, %s213
      %s214 = sphi 0, %s211
      %s215 = sphi 0, %s214
      %s231 = sphi 0, %s215
    $region4: #{tpu_custom_call.1} parent=1 // loop_header_branch
      %30 = sbr.rel (%p28) target = $region8
    $region5: #{tpu_custom_call.1} parent=1 // loop_body
      %s32 = ssub.s32 %s27, 1
      %s33 = ssub.s32 %s27, 2
      %s40 = sadd.s32 1, %s35
      %p41 = scmp.ge.s32.totalorder %s40, 1
      %s42 = scalar_select %p41, 0, %s40
      %s43 = sadd.s32 1, %s34
      %s44 = scalar_select %p41, %s43, %s34
      %p45 = scmp.ge.s32.totalorder %s44, 2
      %s46 = scalar_select %p45, 0, %s44
      %s47 = ssub.s32 %s34, %s46
      %s48 = ssub.s32 %s35, %s42
      %s49 = sor.u32 %s47, %s48
      %p50 = scmp.eq.s32.totalorder %s49, 0
      %s52 = sadd.s32 %s51, 1
      %s53 = scalar_select %p50, %s51, %s52
      %p56 = pneg %p50
      %p57 = scmp.eq.s32.totalorder %s27, 1
      %p58 = por %p56, %p57
      %p59 = scmp.ne.s32.totalorder %s51, %s54
      %p60 = scmp.eq.s32.totalorder %s27, 0
      %p61 = por %p59, %p60
      %p62 = scmp.ne.s32.totalorder %s51, %s54
      %p63 = scmp.eq.s32.totalorder %s32, 1
      %p64 = por %p62, %p63
      %p65 = scmp.ne.s32.totalorder %s54, %s55
      %p66 = scmp.eq.s32.totalorder %s32, 0
      %p67 = por %p65, %p66
      %p68 = scmp.ne.s32.totalorder %s54, %s55
      %p69 = scmp.eq.s32.totalorder %s33, 1
      %p70 = por %p68, %p69
      %p72 = scmp.ne.s32.totalorder %s55, %s71
      %p73 = scmp.eq.s32.totalorder %s33, 0
      %p74 = por %p72, %p73
      %s75 = ssub.s32 %s34, %s46
      %p76 = scmp.eq.s32.totalorder %s75, 0
      %s78 = sadd.s32 %s77, 1
      %s79 = scalar_select %p76, %s77, %s78
      %p82 = pneg %p76
      %p83 = scmp.eq.s32.totalorder %s27, 1
      %p84 = por %p82, %p83
      %p85 = scmp.ne.s32.totalorder %s77, %s80
      %p86 = scmp.eq.s32.totalorder %s27, 0
      %p87 = por %p85, %p86
      %p88 = scmp.ne.s32.totalorder %s77, %s80
      %p89 = scmp.eq.s32.totalorder %s32, 1
      %p90 = por %p88, %p89
      %p91 = scmp.ne.s32.totalorder %s80, %s81
      %p92 = scmp.eq.s32.totalorder %s32, 0
      %p93 = por %p91, %p92
      %p94 = scmp.ne.s32.totalorder %s80, %s81
      %p95 = scmp.eq.s32.totalorder %s33, 1
      %p96 = por %p94, %p95
      %p98 = scmp.ne.s32.totalorder %s81, %s97
      %p99 = scmp.eq.s32.totalorder %s33, 0
      %p100 = por %p98, %p99
      %s101 = ssub.s32 %s34, %s46
      %p102 = scmp.eq.s32.totalorder %s101, 0
      %s104 = sadd.s32 %s103, 1
      %s105 = scalar_select %p102, %s103, %s104
      %p108 = pneg %p102
      %p109 = scmp.eq.s32.totalorder %s27, 1
      %p110 = por %p108, %p109
      %p111 = scmp.ne.s32.totalorder %s103, %s106
      %p112 = scmp.eq.s32.totalorder %s27, 0
      %p113 = por %p111, %p112
      %p114 = scmp.ne.s32.totalorder %s103, %s106
      %p115 = scmp.eq.s32.totalorder %s32, 1
      %p116 = por %p114, %p115
      %p117 = scmp.ne.s32.totalorder %s106, %s107
      %p118 = scmp.eq.s32.totalorder %s32, 0
      %p119 = por %p117, %p118
      %p120 = scmp.ne.s32.totalorder %s106, %s107
      %p121 = scmp.eq.s32.totalorder %s33, 1
      %p122 = por %p120, %p121
      %p124 = scmp.ne.s32.totalorder %s107, %s123
      %p125 = scmp.eq.s32.totalorder %s33, 0
      %p126 = por %p124, %p125
      %s127 = ssub.s32 %s34, %s46
      %s128 = ssub.s32 %s35, %s42
      %s129 = sor.u32 %s127, %s128
      %p130 = scmp.eq.s32.totalorder %s129, 0
      %s132 = sadd.s32 %s131, 1
      %s133 = scalar_select %p130, %s131, %s132
      %p136 = pneg %p130
      %p137 = scmp.eq.s32.totalorder %s27, 1
      %p138 = por %p136, %p137
      %p139 = scmp.ne.s32.totalorder %s131, %s134
      %p140 = scmp.eq.s32.totalorder %s27, 0
      %p141 = por %p139, %p140
      %p142 = scmp.ne.s32.totalorder %s131, %s134
      %p143 = scmp.eq.s32.totalorder %s32, 1
      %p144 = por %p142, %p143
      %p145 = scmp.ne.s32.totalorder %s134, %s135
      %p146 = scmp.eq.s32.totalorder %s32, 0
      %p147 = por %p145, %p146
      %p148 = scmp.ne.s32.totalorder %s134, %s135
      %p149 = scmp.eq.s32.totalorder %s33, 1
      %p150 = por %p148, %p149
      %p152 = scmp.ne.s32.totalorder %s135, %s151
      %p153 = scmp.eq.s32.totalorder %s33, 0
      %p154 = por %p152, %p153
      %s155 = ssub.s32 %s34, %s46
      %p156 = scmp.eq.s32.totalorder %s155, 0
      %s158 = sadd.s32 %s157, 1
      %s159 = scalar_select %p156, %s157, %s158
      %p162 = pneg %p156
      %p163 = scmp.eq.s32.totalorder %s27, 1
      %p164 = por %p162, %p163
      %p165 = scmp.ne.s32.totalorder %s157, %s160
      %p166 = scmp.eq.s32.totalorder %s27, 0
      %p167 = por %p165, %p166
      %p168 = scmp.ne.s32.totalorder %s157, %s160
      %p169 = scmp.eq.s32.totalorder %s32, 1
      %p170 = por %p168, %p169
      %p171 = scmp.ne.s32.totalorder %s160, %s161
      %p172 = scmp.eq.s32.totalorder %s32, 0
      %p173 = por %p171, %p172
      %p174 = scmp.ne.s32.totalorder %s160, %s161
      %p175 = scmp.eq.s32.totalorder %s33, 1
      %p176 = por %p174, %p175
      %p178 = scmp.ne.s32.totalorder %s161, %s177
      %p179 = scmp.eq.s32.totalorder %s33, 0
      %p180 = por %p178, %p179
      %s181 = ssub.s32 %s34, %s46
      %p182 = scmp.eq.s32.totalorder %s181, 0
      %s184 = sadd.s32 %s183, 1
      %s185 = scalar_select %p182, %s183, %s184
      %p188 = pneg %p182
      %p189 = scmp.eq.s32.totalorder %s27, 1
      %p190 = por %p188, %p189
      %p191 = scmp.ne.s32.totalorder %s183, %s186
      %p192 = scmp.eq.s32.totalorder %s27, 0
      %p193 = por %p191, %p192
      %p194 = scmp.ne.s32.totalorder %s183, %s186
      %p195 = scmp.eq.s32.totalorder %s32, 1
      %p196 = por %p194, %p195
      %p197 = scmp.ne.s32.totalorder %s186, %s187
      %p198 = scmp.eq.s32.totalorder %s32, 0
      %p199 = por %p197, %p198
      %p200 = scmp.ne.s32.totalorder %s186, %s187
      %p201 = scmp.eq.s32.totalorder %s33, 1
      %p202 = por %p200, %p201
      %p204 = scmp.ne.s32.totalorder %s187, %s203
      %p205 = scmp.eq.s32.totalorder %s33, 0
      %p206 = por %p204, %p205
      %s207 = ssub.s32 %s34, %s46
      %s208 = ssub.s32 %s35, %s42
      %s209 = sor.u32 %s207, %s208
      %p210 = scmp.eq.s32.totalorder %s209, 0
      %s212 = sadd.s32 %s211, 1
      %s213 = scalar_select %p210, %s211, %s212
      %p216 = pneg %p210
      %p217 = scmp.eq.s32.totalorder %s27, 1
      %p218 = por %p216, %p217
      %p219 = scmp.ne.s32.totalorder %s211, %s214
      %p220 = scmp.eq.s32.totalorder %s27, 0
      %p221 = por %p219, %p220
      %p222 = scmp.ne.s32.totalorder %s211, %s214
      %p223 = scmp.eq.s32.totalorder %s32, 1
      %p224 = por %p222, %p223
      %p225 = scmp.ne.s32.totalorder %s214, %s215
      %p226 = scmp.eq.s32.totalorder %s32, 0
      %p227 = por %p225, %p226
      %p228 = scmp.ne.s32.totalorder %s214, %s215
      %p229 = scmp.eq.s32.totalorder %s33, 1
      %p230 = por %p228, %p229
      %p232 = scmp.ne.s32.totalorder %s215, %s231
      %p233 = scmp.eq.s32.totalorder %s33, 0
      %p234 = por %p232, %p233
      %p235 = scmp.le.s32.totalorder 1, %s27
      %p236 = scmp.lt.s32.totalorder %s27, 3
      %p237 = pnand %p235, %p236
      %p238 = pneg %p237
      // Predicated region
      $region9: #{tpu_custom_call.1} parent=5 // pred_check
        _
      $region10: #{tpu_custom_call.1} parent=5 // pred_check_branch
        %240 = sbr.rel (%p237) target = $region12
      $region11: #{tpu_custom_call.1} parent=5 // pred_region
        %s241 = ssub.s32 %s27, 1
      $region12: #{tpu_custom_call.1} parent=5 // pred_fallthru
        _
      %p242 = scmp.lt.s32.totalorder %s27, 2
      // Predicated region
      $region13: #{tpu_custom_call.1} parent=5 // pred_check
        %p243 = pneg %p242
      $region14: #{tpu_custom_call.1} parent=5 // pred_check_branch
        %245 = sbr.rel (%p243) target = $region16
      $region15: #{tpu_custom_call.1} parent=5 // pred_region
        // Predicated region
        $region17: #{tpu_custom_call.1} parent=15 // pred_check
          %p246 = pneg %p61
        $region18: #{tpu_custom_call.1} parent=15 // pred_check_branch
          %248 = sbr.rel (%p246) target = $region20
        $region19: #{tpu_custom_call.1} parent=15 // pred_region
          %s249 = sand.u32 %s51, 1
          %s250 = scalar_lea.sflag [#allocation5], %s249
          %s251 = sand.u32 %s51, 1
          %s252 = smul.addr %s251, 64
          %s253 = scalar_lea.vmem [#allocation4], %s252
          %s254 = smul.u32 4, %s34
          %s255 = smul.u32 2, %s35
          %257 = vsyncadd %s250, 0
          %s258 = smul.addr %s254, 2
          %s259 = sadd.s32 %s255, %s258
          %s260 = smul.addr %s259, 8
          %s261 = scalar_lea.hbm %s0, %s260
          %s262 = sshll.u32 %s261, 4
          %s263 = int_to_ptr.hbm [resolvable:$true] %s262
          %s264 = sshll.u32 %s253, 4
          %s265 = int_to_ptr.vmem [resolvable:$true] %s264
          %270 = dma.hbm_to_vmem [thread:$0]  %s263, 1024, %s265, %s250, 128, 128, 8
        $region20: #{tpu_custom_call.1} parent=15 // pred_fallthru
          _
        // Predicated region
        $region21: #{tpu_custom_call.1} parent=15 // pred_check
          %p271 = pneg %p87
        $region22: #{tpu_custom_call.1} parent=15 // pred_check_branch
          %273 = sbr.rel (%p271) target = $region24
        $region23: #{tpu_custom_call.1} parent=15 // pred_region
          %s274 = sand.u32 %s27, 1
          %s275 = scalar_lea.sflag [#allocation8], %s274
          %s276 = sand.u32 %s77, 1
          %s277 = smul.addr %s276, 32
          %s278 = scalar_lea.vmem [#allocation7], %s277
          %s279 = smul.u32 4, %s34
          %281 = vsyncadd %s275, 0
          %s282 = smul.addr %s279, 2
          %s283 = smul.addr %s282, 8
          %s284 = scalar_lea.hbm %s1, %s283
          %s285 = sshll.u32 %s284, 4
          %s286 = int_to_ptr.hbm [resolvable:$true] %s285
          %s287 = sshll.u32 %s278, 4
          %s288 = int_to_ptr.vmem [resolvable:$true] %s287
          %293 = dma.hbm_to_vmem [thread:$0]  %s286, 512, %s288, %s275, 256, 128, 8
        $region24: #{tpu_custom_call.1} parent=15 // pred_fallthru
          _
        // Predicated region
        $region25: #{tpu_custom_call.1} parent=15 // pred_check
          %p294 = pneg %p113
        $region26: #{tpu_custom_call.1} parent=15 // pred_check_branch
          %296 = sbr.rel (%p294) target = $region28
        $region27: #{tpu_custom_call.1} parent=15 // pred_region
          %s297 = sand.u32 %s27, 1
          %s298 = scalar_lea.sflag [#allocation8], %s297
          %s299 = sand.u32 %s103, 1
          %s300 = smul.addr %s299, 32
          %s301 = scalar_lea.vmem [#allocation9], %s300
          %s302 = smul.u32 4, %s34
          %304 = vsyncadd %s298, 0
          %s305 = smul.addr %s302, 2
          %s306 = smul.addr %s305, 8
          %s307 = scalar_lea.hbm %s2, %s306
          %s308 = sshll.u32 %s307, 4
          %s309 = int_to_ptr.hbm [resolvable:$true] %s308
          %s310 = sshll.u32 %s301, 4
          %s311 = int_to_ptr.vmem [resolvable:$true] %s310
          %316 = dma.hbm_to_vmem [thread:$0]  %s309, 512, %s311, %s298, 256, 128, 8
        $region28: #{tpu_custom_call.1} parent=15 // pred_fallthru
          _
        // Predicated region
        $region29: #{tpu_custom_call.1} parent=15 // pred_check
          %p317 = pneg %p141
        $region30: #{tpu_custom_call.1} parent=15 // pred_check_branch
          %319 = sbr.rel (%p317) target = $region32
        $region31: #{tpu_custom_call.1} parent=15 // pred_region
          %s320 = sand.u32 %s27, 1
          %s321 = scalar_lea.sflag [#allocation11], %s320
          %s322 = sand.u32 %s131, 1
          %s323 = smul.addr %s322, 64
          %s324 = scalar_lea.vmem [#allocation10], %s323
          %s325 = smul.u32 4, %s34
          %s326 = smul.u32 2, %s35
          %328 = vsyncadd %s321, 0
          %s329 = smul.addr %s325, 2
          %s330 = sadd.s32 %s326, %s329
          %s331 = smul.addr %s330, 8
          %s332 = scalar_lea.hbm %s3, %s331
          %s333 = sshll.u32 %s332, 4
          %s334 = int_to_ptr.hbm [resolvable:$true] %s333
          %s335 = sshll.u32 %s324, 4
          %s336 = int_to_ptr.vmem [resolvable:$true] %s335
          %341 = dma.hbm_to_vmem [thread:$0]  %s334, 1024, %s336, %s321, 128, 128, 8
        $region32: #{tpu_custom_call.1} parent=15 // pred_fallthru
          _
        // Predicated region
        $region33: #{tpu_custom_call.1} parent=15 // pred_check
          %p342 = pneg %p167
        $region34: #{tpu_custom_call.1} parent=15 // pred_check_branch
          %344 = sbr.rel (%p342) target = $region36
        $region35: #{tpu_custom_call.1} parent=15 // pred_region
          %s345 = sand.u32 %s27, 1
          %s346 = scalar_lea.sflag [#allocation11], %s345
          %s347 = sand.u32 %s157, 1
          %s348 = smul.addr %s347, 32
          %s349 = scalar_lea.vmem [#allocation12], %s348
          %s350 = smul.u32 4, %s34
          %352 = vsyncadd %s346, 0
          %s353 = smul.addr %s350, 2
          %s354 = smul.addr %s353, 8
          %s355 = scalar_lea.hbm %s4, %s354
          %s356 = sshll.u32 %s355, 4
          %s357 = int_to_ptr.hbm [resolvable:$true] %s356
          %s358 = sshll.u32 %s349, 4
          %s359 = int_to_ptr.vmem [resolvable:$true] %s358
          %364 = dma.hbm_to_vmem [thread:$0]  %s357, 512, %s359, %s346, 256, 128, 8
        $region36: #{tpu_custom_call.1} parent=15 // pred_fallthru
          _
        // Predicated region
        $region37: #{tpu_custom_call.1} parent=15 // pred_check
          %p365 = pneg %p193
        $region38: #{tpu_custom_call.1} parent=15 // pred_check_branch
          %367 = sbr.rel (%p365) target = $region40
        $region39: #{tpu_custom_call.1} parent=15 // pred_region
          %s368 = sand.u32 %s183, 1
          %s369 = scalar_lea.sflag [#allocation14], %s368
          %s370 = sand.u32 %s183, 1
          %s371 = smul.addr %s370, 32
          %s372 = scalar_lea.vmem [#allocation13], %s371
          %s373 = smul.u32 4, %s34
          %375 = vsyncadd %s369, 0
          %s376 = smul.addr %s373, 2
          %s377 = smul.addr %s376, 8
          %s378 = scalar_lea.hbm %s5, %s377
          %s379 = sshll.u32 %s378, 4
          %s380 = int_to_ptr.hbm [resolvable:$true] %s379
          %s381 = sshll.u32 %s372, 4
          %s382 = int_to_ptr.vmem [resolvable:$true] %s381
          %387 = dma.hbm_to_vmem [thread:$0]  %s380, 512, %s382, %s369, 256, 128, 8
        $region40: #{tpu_custom_call.1} parent=15 // pred_fallthru
          _
      $region16: #{tpu_custom_call.1} parent=5 // pred_fallthru
        _
      %p388 = scmp.le.s32.totalorder 1, %s27
      %p389 = scmp.lt.s32.totalorder %s27, 3
      %p390 = pnand %p388, %p389
      %p391 = pneg %p390
      // Predicated region
      $region41: #{tpu_custom_call.1} parent=5 // pred_check
        _
      $region42: #{tpu_custom_call.1} parent=5 // pred_check_branch
        %393 = sbr.rel (%p390) target = $region44
      $region43: #{tpu_custom_call.1} parent=5 // pred_region
        %s394 = ssub.s32 %s27, 1
        %s395 = sand.u32 %s54, 1
        %s396 = scalar_lea.sflag [#allocation5], %s395
        %s397 = sand.u32 %s54, 1
        %s398 = smul.addr %s397, 64
        %s399 = scalar_lea.vmem [#allocation4], %s398
        // Predicated region
        $region45: #{tpu_custom_call.1} parent=43 // pred_check
          %p400 = pneg %p67
        $region46: #{tpu_custom_call.1} parent=43 // pred_check_branch
          %402 = sbr.rel (%p400) target = $region48
        $region47: #{tpu_custom_call.1} parent=43 // pred_region
          %404 = dma.done %s396, 1024
        $region48: #{tpu_custom_call.1} parent=43 // pred_fallthru
          _
        %s405 = sand.u32 %s32, 1
        %s406 = scalar_lea.sflag [#allocation8], %s405
        %s407 = sand.u32 %s80, 1
        %s408 = smul.addr %s407, 32
        %s409 = scalar_lea.vmem [#allocation7], %s408
        // Predicated region
        $region49: #{tpu_custom_call.1} parent=43 // pred_check
          %p410 = pneg %p93
        $region50: #{tpu_custom_call.1} parent=43 // pred_check_branch
          %412 = sbr.rel (%p410) target = $region52
        $region51: #{tpu_custom_call.1} parent=43 // pred_region
          %414 = dma.done %s406, 512
        $region52: #{tpu_custom_call.1} parent=43 // pred_fallthru
          _
        %s415 = sand.u32 %s32, 1
        %s416 = scalar_lea.sflag [#allocation8], %s415
        %s417 = sand.u32 %s106, 1
        %s418 = smul.addr %s417, 32
        %s419 = scalar_lea.vmem [#allocation9], %s418
        // Predicated region
        $region53: #{tpu_custom_call.1} parent=43 // pred_check
          %p420 = pneg %p119
        $region54: #{tpu_custom_call.1} parent=43 // pred_check_branch
          %422 = sbr.rel (%p420) target = $region56
        $region55: #{tpu_custom_call.1} parent=43 // pred_region
          %424 = dma.done %s416, 512
        $region56: #{tpu_custom_call.1} parent=43 // pred_fallthru
          _
        %s425 = sand.u32 %s32, 1
        %s426 = scalar_lea.sflag [#allocation11], %s425
        %s427 = sand.u32 %s134, 1
        %s428 = smul.addr %s427, 64
        %s429 = scalar_lea.vmem [#allocation10], %s428
        // Predicated region
        $region57: #{tpu_custom_call.1} parent=43 // pred_check
          %p430 = pneg %p147
        $region58: #{tpu_custom_call.1} parent=43 // pred_check_branch
          %432 = sbr.rel (%p430) target = $region60
        $region59: #{tpu_custom_call.1} parent=43 // pred_region
          %434 = dma.done %s426, 1024
        $region60: #{tpu_custom_call.1} parent=43 // pred_fallthru
          _
        %s435 = sand.u32 %s32, 1
        %s436 = scalar_lea.sflag [#allocation11], %s435
        %s437 = sand.u32 %s160, 1
        %s438 = smul.addr %s437, 32
        %s439 = scalar_lea.vmem [#allocation12], %s438
        // Predicated region
        $region61: #{tpu_custom_call.1} parent=43 // pred_check
          %p440 = pneg %p173
        $region62: #{tpu_custom_call.1} parent=43 // pred_check_branch
          %442 = sbr.rel (%p440) target = $region64
        $region63: #{tpu_custom_call.1} parent=43 // pred_region
          %444 = dma.done %s436, 512
        $region64: #{tpu_custom_call.1} parent=43 // pred_fallthru
          _
        %s445 = sand.u32 %s186, 1
        %s446 = scalar_lea.sflag [#allocation14], %s445
        %s447 = sand.u32 %s186, 1
        %s448 = smul.addr %s447, 32
        %s449 = scalar_lea.vmem [#allocation13], %s448
        // Predicated region
        $region65: #{tpu_custom_call.1} parent=43 // pred_check
          %p450 = pneg %p199
        $region66: #{tpu_custom_call.1} parent=43 // pred_check_branch
          %452 = sbr.rel (%p450) target = $region68
        $region67: #{tpu_custom_call.1} parent=43 // pred_region
          %454 = dma.done %s446, 512
        $region68: #{tpu_custom_call.1} parent=43 // pred_fallthru
          _
        %s455 = sand.u32 %s54, 1
        %s456 = scalar_lea.sflag [#allocation5], %s455
        %s457 = sand.u32 %s54, 1
        %s458 = smul.addr %s457, 64
        %s459 = scalar_lea.vmem [#allocation4], %s458
        %p460 = pneg %p67
        %p461 = pneg %p64
        %s462 = sand.u32 %s32, 1
        %s463 = scalar_lea.sflag [#allocation8], %s462
        %s464 = sand.u32 %s80, 1
        %s465 = smul.addr %s464, 32
        %s466 = scalar_lea.vmem [#allocation7], %s465
        %p467 = pneg %p93
        %p468 = pneg %p90
        %s469 = sand.u32 %s32, 1
        %s470 = scalar_lea.sflag [#allocation8], %s469
        %s471 = sand.u32 %s106, 1
        %s472 = smul.addr %s471, 32
        %s473 = scalar_lea.vmem [#allocation9], %s472
        %p474 = pneg %p119
        %p475 = pneg %p116
        %s476 = sand.u32 %s32, 1
        %s477 = scalar_lea.sflag [#allocation11], %s476
        %s478 = sand.u32 %s134, 1
        %s479 = smul.addr %s478, 64
        %s480 = scalar_lea.vmem [#allocation10], %s479
        %p481 = pneg %p147
        %p482 = pneg %p144
        %s483 = sand.u32 %s32, 1
        %s484 = scalar_lea.sflag [#allocation11], %s483
        %s485 = sand.u32 %s160, 1
        %s486 = smul.addr %s485, 32
        %s487 = scalar_lea.vmem [#allocation12], %s486
        %p488 = pneg %p173
        %p489 = pneg %p170
        %s490 = sand.u32 %s186, 1
        %s491 = scalar_lea.sflag [#allocation14], %s490
        %s492 = sand.u32 %s186, 1
        %s493 = smul.addr %s492, 32
        %s494 = scalar_lea.vmem [#allocation13], %s493
        %p495 = pneg %p199
        %p496 = pneg %p196
        %p497 = pneg %p227
        %p498 = pneg %p224
        %s499 = sand.u32 %s214, 1
        %s500 = scalar_lea.sflag [#allocation6], %s499
        %s501 = sand.u32 %s214, 1
        %s502 = smul.addr %s501, 64
        %s503 = scalar_lea.vmem [#allocation15], %s502
        %s504 = smul.u32 4, %s36
        %s505 = smul.u32 2, %s37
        %s506 = smul.u32 4, %s36
        %s507 = smul.u32 4, %s36
        %s508 = smul.u32 4, %s36
        %s509 = smul.u32 2, %s37
        %s510 = smul.u32 4, %s36
        %s511 = smul.u32 4, %s36
        %s512 = smul.u32 4, %s36
        %s513 = smul.u32 2, %s37
        %v514 = vld [vmem:[%s399] sm:$0xff]
        %v515 = vld [vmem:[%s399 + $0x8] sm:$0xff]
        %v516 = vld [vmem:[%s399 + $0x10] sm:$0xff]
        %v517 = vld [vmem:[%s399 + $0x18] sm:$0xff]
        %v518 = vld [vmem:[%s399 + $0x20] sm:$0xff]
        %v519 = vld [vmem:[%s399 + $0x28] sm:$0xff]
        %v520 = vld [vmem:[%s399 + $0x30] sm:$0xff]
        %v521 = vld [vmem:[%s399 + $0x38] sm:$0xff]
        %530 = vrot.lane.b32.xlu0 %v514, 2
        %v531 = vpop.permute.xlu0 %530
        %532 = vrot.lane.b32.xlu0 %v515, 2
        %v533 = vpop.permute.xlu0 %532
        %534 = vrot.lane.b32.xlu0 %v516, 2
        %v535 = vpop.permute.xlu0 %534
        %536 = vrot.lane.b32.xlu0 %v517, 2
        %v537 = vpop.permute.xlu0 %536
        %538 = vrot.lane.b32.xlu0 %v518, 2
        %v539 = vpop.permute.xlu0 %538
        %540 = vrot.lane.b32.xlu0 %v519, 2
        %v541 = vpop.permute.xlu0 %540
        %542 = vrot.lane.b32.xlu0 %v520, 2
        %v543 = vpop.permute.xlu0 %542
        %544 = vrot.lane.b32.xlu0 %v521, 2
        %v545 = vpop.permute.xlu0 %544
        %vm554 = vcmask 146448
        %555 = vst.msk [vmem:[#allocation2 + $0x2] sm:$0xff] %vm554, %v531
        %556 = vst.msk [vmem:[#allocation2 + $0xa] sm:$0xff] %vm554, %v533
        %557 = vst.msk [vmem:[#allocation2 + $0x1a] sm:$0xff] %vm554, %v535
        %558 = vst.msk [vmem:[#allocation2 + $0x22] sm:$0xff] %vm554, %v537
        %559 = vst.msk [vmem:[#allocation2 + $0x32] sm:$0xff] %vm554, %v539
        %560 = vst.msk [vmem:[#allocation2 + $0x3a] sm:$0xff] %vm554, %v541
        %561 = vst.msk [vmem:[#allocation2 + $0x4a] sm:$0xff] %vm554, %v543
        %562 = vst.msk [vmem:[#allocation2 + $0x52] sm:$0xff] %vm554, %v545
        %p563 = scmp.gt.s32.totalorder %s37, 0
        // Predicated region
        $region69: #{tpu_custom_call.1} parent=43 // pred_check
          %p564 = pneg %p563
        $region70: #{tpu_custom_call.1} parent=43 // pred_check_branch
          %566 = sbr.rel (%p564) target = $region72
        $region71: #{tpu_custom_call.1} parent=43 // pred_region
          %v567 = vld [vmem:[%s409 + $0x6] sm:$0x3]
          %v568 = vld [vmem:[%s409 + $0xe] sm:$0x3]
          %v569 = vld [vmem:[%s409 + $0x16] sm:$0x3]
          %v570 = vld [vmem:[%s409 + $0x1e] sm:$0x3]
          %575 = vrot.lane.b32.xlu0 %v567, 2
          %v576 = vpop.permute.xlu0 %575
          %577 = vrot.lane.b32.xlu0 %v568, 2
          %v578 = vpop.permute.xlu0 %577
          %579 = vrot.lane.b32.xlu0 %v569, 2
          %v580 = vpop.permute.xlu0 %579
          %581 = vrot.lane.b32.xlu0 %v570, 2
          %v582 = vpop.permute.xlu0 %581
          %vm587 = vcmask 140304
          %588 = vst.msk [vmem:[#allocation2] sm:$0x3] %vm587, %v576
          %589 = vst.msk [vmem:[#allocation2 + $0x18] sm:$0x3] %vm587, %v578
          %590 = vst.msk [vmem:[#allocation2 + $0x30] sm:$0x3] %vm587, %v580
          %591 = vst.msk [vmem:[#allocation2 + $0x48] sm:$0x3] %vm587, %v582
        $region72: #{tpu_custom_call.1} parent=43 // pred_fallthru
          _
        %p592 = scmp.eq.s32.totalorder %s37, 0
        // Predicated region
        $region73: #{tpu_custom_call.1} parent=43 // pred_check
          %p593 = pneg %p592
        $region74: #{tpu_custom_call.1} parent=43 // pred_check_branch
          %595 = sbr.rel (%p593) target = $region76
        $region75: #{tpu_custom_call.1} parent=43 // pred_region
          %v596 = vld [vmem:[%s399 + $0x2] sm:$0x1]
          %v597 = vld [vmem:[%s399 + $0x12] sm:$0x1]
          %v598 = vld [vmem:[%s399 + $0x22] sm:$0x1]
          %v599 = vld [vmem:[%s399 + $0x32] sm:$0x1]
          %604 = vrot.lane.b32.xlu0 %v596, 2
          %v605 = vpop.permute.xlu0 %604
          %606 = vrot.lane.b32.xlu0 %v597, 2
          %v607 = vpop.permute.xlu0 %606
          %608 = vrot.lane.b32.xlu0 %v598, 2
          %v609 = vpop.permute.xlu0 %608
          %610 = vrot.lane.b32.xlu0 %v599, 2
          %v611 = vpop.permute.xlu0 %610
          %vm616 = vcmask 139280
          %617 = vst.msk [vmem:[#allocation2] sm:$0x1] %vm616, %v605
          %618 = vst.msk [vmem:[#allocation2 + $0x18] sm:$0x1] %vm616, %v607
          %619 = vst.msk [vmem:[#allocation2 + $0x30] sm:$0x1] %vm616, %v609
          %620 = vst.msk [vmem:[#allocation2 + $0x48] sm:$0x1] %vm616, %v611
          %v621 = vld [vmem:[%s399 + $0x1] sm:$0x1]
          %v622 = vld [vmem:[%s399 + $0x11] sm:$0x1]
          %v623 = vld [vmem:[%s399 + $0x21] sm:$0x1]
          %v624 = vld [vmem:[%s399 + $0x31] sm:$0x1]
          %629 = vrot.lane.b32.xlu0 %v621, 2
          %v630 = vpop.permute.xlu0 %629
          %631 = vrot.lane.b32.xlu0 %v622, 2
          %v632 = vpop.permute.xlu0 %631
          %633 = vrot.lane.b32.xlu0 %v623, 2
          %v634 = vpop.permute.xlu0 %633
          %635 = vrot.lane.b32.xlu0 %v624, 2
          %v636 = vpop.permute.xlu0 %635
          %641 = vst.msk [vmem:[#allocation2 + $0x1] sm:$0x1] %vm616, %v630
          %642 = vst.msk [vmem:[#allocation2 + $0x19] sm:$0x1] %vm616, %v632
          %643 = vst.msk [vmem:[#allocation2 + $0x31] sm:$0x1] %vm616, %v634
          %644 = vst.msk [vmem:[#allocation2 + $0x49] sm:$0x1] %vm616, %v636
        $region76: #{tpu_custom_call.1} parent=43 // pred_fallthru
          _
        %p645 = scmp.lt.s32.totalorder %s37, 0
        // Predicated region
        $region77: #{tpu_custom_call.1} parent=43 // pred_check
          %p646 = pneg %p645
        $region78: #{tpu_custom_call.1} parent=43 // pred_check_branch
          %648 = sbr.rel (%p646) target = $region80
        $region79: #{tpu_custom_call.1} parent=43 // pred_region
          %v649 = vld [vmem:[%s419] sm:$0x3]
          %v650 = vld [vmem:[%s419 + $0x8] sm:$0x3]
          %v651 = vld [vmem:[%s419 + $0x10] sm:$0x3]
          %v652 = vld [vmem:[%s419 + $0x18] sm:$0x3]
          %657 = vrot.lane.b32.xlu0 %v649, 2
          %v658 = vpop.permute.xlu0 %657
          %659 = vrot.lane.b32.xlu0 %v650, 2
          %v660 = vpop.permute.xlu0 %659
          %661 = vrot.lane.b32.xlu0 %v651, 2
          %v662 = vpop.permute.xlu0 %661
          %663 = vrot.lane.b32.xlu0 %v652, 2
          %v664 = vpop.permute.xlu0 %663
          %vm669 = vcmask 140304
          %670 = vst.msk [vmem:[#allocation2 + $0x12] sm:$0x3] %vm669, %v658
          %671 = vst.msk [vmem:[#allocation2 + $0x2a] sm:$0x3] %vm669, %v660
          %672 = vst.msk [vmem:[#allocation2 + $0x42] sm:$0x3] %vm669, %v662
          %673 = vst.msk [vmem:[#allocation2 + $0x5a] sm:$0x3] %vm669, %v664
        $region80: #{tpu_custom_call.1} parent=43 // pred_fallthru
          _
        // Predicated region
        $region81: #{tpu_custom_call.1} parent=43 // pred_check
          %p674 = pneg %p592
        $region82: #{tpu_custom_call.1} parent=43 // pred_check_branch
          %676 = sbr.rel (%p674) target = $region84
        $region83: #{tpu_custom_call.1} parent=43 // pred_region
          %v677 = vld [vmem:[%s399 + $0xe] sm:$0x1]
          %v678 = vld [vmem:[%s399 + $0x1e] sm:$0x1]
          %v679 = vld [vmem:[%s399 + $0x2e] sm:$0x1]
          %v680 = vld [vmem:[%s399 + $0x3e] sm:$0x1]
          %685 = vrot.lane.b32.xlu0 %v677, 2
          %v686 = vpop.permute.xlu0 %685
          %687 = vrot.lane.b32.xlu0 %v678, 2
          %v688 = vpop.permute.xlu0 %687
          %689 = vrot.lane.b32.xlu0 %v679, 2
          %v690 = vpop.permute.xlu0 %689
          %691 = vrot.lane.b32.xlu0 %v680, 2
          %v692 = vpop.permute.xlu0 %691
          %vm697 = vcmask 139280
          %698 = vst.msk [vmem:[#allocation2 + $0x12] sm:$0x1] %vm697, %v686
          %699 = vst.msk [vmem:[#allocation2 + $0x2a] sm:$0x1] %vm697, %v688
          %700 = vst.msk [vmem:[#allocation2 + $0x42] sm:$0x1] %vm697, %v690
          %701 = vst.msk [vmem:[#allocation2 + $0x5a] sm:$0x1] %vm697, %v692
          %v702 = vld [vmem:[%s399 + $0xd] sm:$0x1]
          %v703 = vld [vmem:[%s399 + $0x1d] sm:$0x1]
          %v704 = vld [vmem:[%s399 + $0x2d] sm:$0x1]
          %v705 = vld [vmem:[%s399 + $0x3d] sm:$0x1]
          %710 = vrot.lane.b32.xlu0 %v702, 2
          %v711 = vpop.permute.xlu0 %710
          %712 = vrot.lane.b32.xlu0 %v703, 2
          %v713 = vpop.permute.xlu0 %712
          %714 = vrot.lane.b32.xlu0 %v704, 2
          %v715 = vpop.permute.xlu0 %714
          %716 = vrot.lane.b32.xlu0 %v705, 2
          %v717 = vpop.permute.xlu0 %716
          %722 = vst.msk [vmem:[#allocation2 + $0x13] sm:$0x1] %vm697, %v711
          %723 = vst.msk [vmem:[#allocation2 + $0x2b] sm:$0x1] %vm697, %v713
          %724 = vst.msk [vmem:[#allocation2 + $0x43] sm:$0x1] %vm697, %v715
          %725 = vst.msk [vmem:[#allocation2 + $0x5b] sm:$0x1] %vm697, %v717
        $region84: #{tpu_custom_call.1} parent=43 // pred_fallthru
          _
        %v726 = vld [vmem:[#allocation2] sm:$0xff]
        %v727 = vld [vmem:[#allocation2 + $0x8] sm:$0xff]
        %v728 = vld [vmem:[#allocation2 + $0x10] sm:$0xf]
        %v729 = vld [vmem:[#allocation2 + $0x18] sm:$0xff]
        %v730 = vld [vmem:[#allocation2 + $0x20] sm:$0xff]
        %v731 = vld [vmem:[#allocation2 + $0x28] sm:$0xf]
        %v732 = vld [vmem:[#allocation2 + $0x30] sm:$0xff]
        %v733 = vld [vmem:[#allocation2 + $0x38] sm:$0xff]
        %v734 = vld [vmem:[#allocation2 + $0x40] sm:$0xf]
        %v735 = vld [vmem:[#allocation2 + $0x48] sm:$0xff]
        %v736 = vld [vmem:[#allocation2 + $0x50] sm:$0xff]
        %v737 = vld [vmem:[#allocation2 + $0x58] sm:$0xf]
        %750 = vrot.lane.b32.xlu0 %v726, 124
        %v751 = vpop.permute.xlu0 %750
        %752 = vrot.lane.b32.xlu0 %v727, 124
        %v753 = vpop.permute.xlu0 %752
        %754 = vrot.lane.b32.xlu0 %v728, 124
        %v755 = vpop.permute.xlu0 %754
        %756 = vrot.lane.b32.xlu0 %v729, 124
        %v757 = vpop.permute.xlu0 %756
        %758 = vrot.lane.b32.xlu0 %v730, 124
        %v759 = vpop.permute.xlu0 %758
        %760 = vrot.lane.b32.xlu0 %v731, 124
        %v761 = vpop.permute.xlu0 %760
        %762 = vrot.lane.b32.xlu0 %v732, 124
        %v763 = vpop.permute.xlu0 %762
        %764 = vrot.lane.b32.xlu0 %v733, 124
        %v765 = vpop.permute.xlu0 %764
        %766 = vrot.lane.b32.xlu0 %v734, 124
        %v767 = vpop.permute.xlu0 %766
        %768 = vrot.lane.b32.xlu0 %v735, 124
        %v769 = vpop.permute.xlu0 %768
        %770 = vrot.lane.b32.xlu0 %v736, 124
        %v771 = vpop.permute.xlu0 %770
        %772 = vrot.lane.b32.xlu0 %v737, 124
        %v773 = vpop.permute.xlu0 %772
        %vm786 = vcmask 7168
        %787 = vst.msk [vmem:[#allocation2] sm:$0xff] %vm786, %v751
        %788 = vst.msk [vmem:[#allocation2 + $0x8] sm:$0xff] %vm786, %v753
        %vm789 = vcmask 3072
        %790 = vst.msk [vmem:[#allocation2 + $0x10] sm:$0xf] %vm789, %v755
        %791 = vst.msk [vmem:[#allocation2 + $0x18] sm:$0xff] %vm786, %v757
        %792 = vst.msk [vmem:[#allocation2 + $0x20] sm:$0xff] %vm786, %v759
        %793 = vst.msk [vmem:[#allocation2 + $0x28] sm:$0xf] %vm789, %v761
        %794 = vst.msk [vmem:[#allocation2 + $0x30] sm:$0xff] %vm786, %v763
        %795 = vst.msk [vmem:[#allocation2 + $0x38] sm:$0xff] %vm786, %v765
        %796 = vst.msk [vmem:[#allocation2 + $0x40] sm:$0xf] %vm789, %v767
        %797 = vst.msk [vmem:[#allocation2 + $0x48] sm:$0xff] %vm786, %v769
        %798 = vst.msk [vmem:[#allocation2 + $0x50] sm:$0xff] %vm786, %v771
        %799 = vst.msk [vmem:[#allocation2 + $0x58] sm:$0xf] %vm789, %v773
        %v800 = vld [vmem:[#allocation2] sm:$0xff]
        %v801 = vld [vmem:[#allocation2 + $0x8] sm:$0xff]
        %v802 = vld [vmem:[#allocation2 + $0x10] sm:$0xf]
        %v803 = vld [vmem:[#allocation2 + $0x18] sm:$0xff]
        %v804 = vld [vmem:[#allocation2 + $0x20] sm:$0xff]
        %v805 = vld [vmem:[#allocation2 + $0x28] sm:$0xf]
        %v806 = vld [vmem:[#allocation2 + $0x30] sm:$0xff]
        %v807 = vld [vmem:[#allocation2 + $0x38] sm:$0xff]
        %v808 = vld [vmem:[#allocation2 + $0x40] sm:$0xf]
        %v809 = vld [vmem:[#allocation2 + $0x48] sm:$0xff]
        %v810 = vld [vmem:[#allocation2 + $0x50] sm:$0xff]
        %v811 = vld [vmem:[#allocation2 + $0x58] sm:$0xf]
        %824 = vrot.lane.b32.xlu0 %v800, 126
        %v825 = vpop.permute.xlu0 %824
        %826 = vrot.lane.b32.xlu0 %v801, 126
        %v827 = vpop.permute.xlu0 %826
        %828 = vrot.lane.b32.xlu0 %v802, 126
        %v829 = vpop.permute.xlu0 %828
        %830 = vrot.lane.b32.xlu0 %v803, 126
        %v831 = vpop.permute.xlu0 %830
        %832 = vrot.lane.b32.xlu0 %v804, 126
        %v833 = vpop.permute.xlu0 %832
        %834 = vrot.lane.b32.xlu0 %v805, 126
        %v835 = vpop.permute.xlu0 %834
        %836 = vrot.lane.b32.xlu0 %v806, 126
        %v837 = vpop.permute.xlu0 %836
        %838 = vrot.lane.b32.xlu0 %v807, 126
        %v839 = vpop.permute.xlu0 %838
        %840 = vrot.lane.b32.xlu0 %v808, 126
        %v841 = vpop.permute.xlu0 %840
        %842 = vrot.lane.b32.xlu0 %v809, 126
        %v843 = vpop.permute.xlu0 %842
        %844 = vrot.lane.b32.xlu0 %v810, 126
        %v845 = vpop.permute.xlu0 %844
        %846 = vrot.lane.b32.xlu0 %v811, 126
        %v847 = vpop.permute.xlu0 %846
        %vm860 = vcmask 15368
        %861 = vst.msk [vmem:[#allocation2] sm:$0xff] %vm860, %v825
        %862 = vst.msk [vmem:[#allocation2 + $0x8] sm:$0xff] %vm860, %v827
        %vm863 = vcmask 11272
        %864 = vst.msk [vmem:[#allocation2 + $0x10] sm:$0xf] %vm863, %v829
        %865 = vst.msk [vmem:[#allocation2 + $0x18] sm:$0xff] %vm860, %v831
        %866 = vst.msk [vmem:[#allocation2 + $0x20] sm:$0xff] %vm860, %v833
        %867 = vst.msk [vmem:[#allocation2 + $0x28] sm:$0xf] %vm863, %v835
        %868 = vst.msk [vmem:[#allocation2 + $0x30] sm:$0xff] %vm860, %v837
        %869 = vst.msk [vmem:[#allocation2 + $0x38] sm:$0xff] %vm860, %v839
        %870 = vst.msk [vmem:[#allocation2 + $0x40] sm:$0xf] %vm863, %v841
        %871 = vst.msk [vmem:[#allocation2 + $0x48] sm:$0xff] %vm860, %v843
        %872 = vst.msk [vmem:[#allocation2 + $0x50] sm:$0xff] %vm860, %v845
        %873 = vst.msk [vmem:[#allocation2 + $0x58] sm:$0xf] %vm863, %v847
        %v874 = vld [vmem:[#allocation2] sm:$0xff]
        %v875 = vld [vmem:[#allocation2 + $0x8] sm:$0xff]
        %v876 = vld [vmem:[#allocation2 + $0x10] sm:$0xf]
        %v877 = vld [vmem:[#allocation2 + $0x18] sm:$0xff]
        %v878 = vld [vmem:[#allocation2 + $0x20] sm:$0xff]
        %v879 = vld [vmem:[#allocation2 + $0x28] sm:$0xf]
        %v880 = vld [vmem:[#allocation2 + $0x30] sm:$0xff]
        %v881 = vld [vmem:[#allocation2 + $0x38] sm:$0xff]
        %v882 = vld [vmem:[#allocation2 + $0x40] sm:$0xf]
        %v883 = vld [vmem:[#allocation2 + $0x48] sm:$0xff]
        %v884 = vld [vmem:[#allocation2 + $0x50] sm:$0xff]
        %v885 = vld [vmem:[#allocation2 + $0x58] sm:$0xf]
        %898 = vrot.lane.b32.xlu0 %v874, 2
        %v899 = vpop.permute.xlu0 %898
        %900 = vrot.lane.b32.xlu0 %v875, 2
        %v901 = vpop.permute.xlu0 %900
        %902 = vrot.lane.b32.xlu0 %v876, 2
        %v903 = vpop.permute.xlu0 %902
        %904 = vrot.lane.b32.xlu0 %v877, 2
        %v905 = vpop.permute.xlu0 %904
        %906 = vrot.lane.b32.xlu0 %v878, 2
        %v907 = vpop.permute.xlu0 %906
        %908 = vrot.lane.b32.xlu0 %v879, 2
        %v909 = vpop.permute.xlu0 %908
        %910 = vrot.lane.b32.xlu0 %v880, 2
        %v911 = vpop.permute.xlu0 %910
        %912 = vrot.lane.b32.xlu0 %v881, 2
        %v913 = vpop.permute.xlu0 %912
        %914 = vrot.lane.b32.xlu0 %v882, 2
        %v915 = vpop.permute.xlu0 %914
        %916 = vrot.lane.b32.xlu0 %v883, 2
        %v917 = vpop.permute.xlu0 %916
        %918 = vrot.lane.b32.xlu0 %v884, 2
        %v919 = vpop.permute.xlu0 %918
        %920 = vrot.lane.b32.xlu0 %v885, 2
        %v921 = vpop.permute.xlu0 %920
        %vm934 = vcmask 154768
        %935 = vst.msk [vmem:[#allocation2] sm:$0xff] %vm934, %v899
        %936 = vst.msk [vmem:[#allocation2 + $0x8] sm:$0xff] %vm934, %v901
        %vm937 = vcmask 150672
        %938 = vst.msk [vmem:[#allocation2 + $0x10] sm:$0xf] %vm937, %v903
        %939 = vst.msk [vmem:[#allocation2 + $0x18] sm:$0xff] %vm934, %v905
        %940 = vst.msk [vmem:[#allocation2 + $0x20] sm:$0xff] %vm934, %v907
        %941 = vst.msk [vmem:[#allocation2 + $0x28] sm:$0xf] %vm937, %v909
        %942 = vst.msk [vmem:[#allocation2 + $0x30] sm:$0xff] %vm934, %v911
        %943 = vst.msk [vmem:[#allocation2 + $0x38] sm:$0xff] %vm934, %v913
        %944 = vst.msk [vmem:[#allocation2 + $0x40] sm:$0xf] %vm937, %v915
        %945 = vst.msk [vmem:[#allocation2 + $0x48] sm:$0xff] %vm934, %v917
        %946 = vst.msk [vmem:[#allocation2 + $0x50] sm:$0xff] %vm934, %v919
        %947 = vst.msk [vmem:[#allocation2 + $0x58] sm:$0xf] %vm937, %v921
        %v948 = vld [vmem:[#allocation2] sm:$0xff]
        %v949 = vld [vmem:[#allocation2 + $0x8] sm:$0xff]
        %v950 = vld [vmem:[#allocation2 + $0x10] sm:$0xf]
        %v951 = vld [vmem:[#allocation2 + $0x18] sm:$0xff]
        %v952 = vld [vmem:[#allocation2 + $0x20] sm:$0xff]
        %v953 = vld [vmem:[#allocation2 + $0x28] sm:$0xf]
        %v954 = vld [vmem:[#allocation2 + $0x30] sm:$0xff]
        %v955 = vld [vmem:[#allocation2 + $0x38] sm:$0xff]
        %v956 = vld [vmem:[#allocation2 + $0x40] sm:$0xf]
        %v957 = vld [vmem:[#allocation2 + $0x48] sm:$0xff]
        %v958 = vld [vmem:[#allocation2 + $0x50] sm:$0xff]
        %v959 = vld [vmem:[#allocation2 + $0x58] sm:$0xf]
        %972 = vrot.lane.b32.xlu0 %v948, 4
        %v973 = vpop.permute.xlu0 %972
        %974 = vrot.lane.b32.xlu0 %v949, 4
        %v975 = vpop.permute.xlu0 %974
        %976 = vrot.lane.b32.xlu0 %v950, 4
        %v977 = vpop.permute.xlu0 %976
        %978 = vrot.lane.b32.xlu0 %v951, 4
        %v979 = vpop.permute.xlu0 %978
        %980 = vrot.lane.b32.xlu0 %v952, 4
        %v981 = vpop.permute.xlu0 %980
        %982 = vrot.lane.b32.xlu0 %v953, 4
        %v983 = vpop.permute.xlu0 %982
        %984 = vrot.lane.b32.xlu0 %v954, 4
        %v985 = vpop.permute.xlu0 %984
        %986 = vrot.lane.b32.xlu0 %v955, 4
        %v987 = vpop.permute.xlu0 %986
        %988 = vrot.lane.b32.xlu0 %v956, 4
        %v989 = vpop.permute.xlu0 %988
        %990 = vrot.lane.b32.xlu0 %v957, 4
        %v991 = vpop.permute.xlu0 %990
        %992 = vrot.lane.b32.xlu0 %v958, 4
        %v993 = vpop.permute.xlu0 %992
        %994 = vrot.lane.b32.xlu0 %v959, 4
        %v995 = vpop.permute.xlu0 %994
        %vm1008 = vcmask 162968
        %1009 = vst.msk [vmem:[#allocation2] sm:$0xff] %vm1008, %v973
        %1010 = vst.msk [vmem:[#allocation2 + $0x8] sm:$0xff] %vm1008, %v975
        %vm1011 = vcmask 158872
        %1012 = vst.msk [vmem:[#allocation2 + $0x10] sm:$0xf] %vm1011, %v977
        %1013 = vst.msk [vmem:[#allocation2 + $0x18] sm:$0xff] %vm1008, %v979
        %1014 = vst.msk [vmem:[#allocation2 + $0x20] sm:$0xff] %vm1008, %v981
        %1015 = vst.msk [vmem:[#allocation2 + $0x28] sm:$0xf] %vm1011, %v983
        %1016 = vst.msk [vmem:[#allocation2 + $0x30] sm:$0xff] %vm1008, %v985
        %1017 = vst.msk [vmem:[#allocation2 + $0x38] sm:$0xff] %vm1008, %v987
        %1018 = vst.msk [vmem:[#allocation2 + $0x40] sm:$0xf] %vm1011, %v989
        %1019 = vst.msk [vmem:[#allocation2 + $0x48] sm:$0xff] %vm1008, %v991
        %1020 = vst.msk [vmem:[#allocation2 + $0x50] sm:$0xff] %vm1008, %v993
        %1021 = vst.msk [vmem:[#allocation2 + $0x58] sm:$0xf] %vm1011, %v995
        %v1022 = vld [vmem:[%s429] sm:$0xff]
        %v1023 = vld [vmem:[%s429 + $0x8] sm:$0xff]
        %v1024 = vld [vmem:[%s429 + $0x10] sm:$0xff]
        %v1025 = vld [vmem:[%s429 + $0x18] sm:$0xff]
        %v1026 = vld [vmem:[%s429 + $0x20] sm:$0xff]
        %v1027 = vld [vmem:[%s429 + $0x28] sm:$0xff]
        %v1028 = vld [vmem:[%s429 + $0x30] sm:$0xff]
        %v1029 = vld [vmem:[%s429 + $0x38] sm:$0xff]
        %1038 = vrot.lane.b32.xlu0 %v1022, 2
        %v1039 = vpop.permute.xlu0 %1038
        %1040 = vrot.lane.b32.xlu0 %v1023, 2
        %v1041 = vpop.permute.xlu0 %1040
        %1042 = vrot.lane.b32.xlu0 %v1024, 2
        %v1043 = vpop.permute.xlu0 %1042
        %1044 = vrot.lane.b32.xlu0 %v1025, 2
        %v1045 = vpop.permute.xlu0 %1044
        %1046 = vrot.lane.b32.xlu0 %v1026, 2
        %v1047 = vpop.permute.xlu0 %1046
        %1048 = vrot.lane.b32.xlu0 %v1027, 2
        %v1049 = vpop.permute.xlu0 %1048
        %1050 = vrot.lane.b32.xlu0 %v1028, 2
        %v1051 = vpop.permute.xlu0 %1050
        %1052 = vrot.lane.b32.xlu0 %v1029, 2
        %v1053 = vpop.permute.xlu0 %1052
        %1062 = vst.msk [vmem:[#allocation3 + $0x2] sm:$0xff] %vm554, %v1039
        %1063 = vst.msk [vmem:[#allocation3 + $0xa] sm:$0xff] %vm554, %v1041
        %1064 = vst.msk [vmem:[#allocation3 + $0x1a] sm:$0xff] %vm554, %v1043
        %1065 = vst.msk [vmem:[#allocation3 + $0x22] sm:$0xff] %vm554, %v1045
        %1066 = vst.msk [vmem:[#allocation3 + $0x32] sm:$0xff] %vm554, %v1047
        %1067 = vst.msk [vmem:[#allocation3 + $0x3a] sm:$0xff] %vm554, %v1049
        %1068 = vst.msk [vmem:[#allocation3 + $0x4a] sm:$0xff] %vm554, %v1051
        %1069 = vst.msk [vmem:[#allocation3 + $0x52] sm:$0xff] %vm554, %v1053
        // Predicated region
        $region85: #{tpu_custom_call.1} parent=43 // pred_check
          %p1070 = pneg %p563
        $region86: #{tpu_custom_call.1} parent=43 // pred_check_branch
          %1072 = sbr.rel (%p1070) target = $region88
        $region87: #{tpu_custom_call.1} parent=43 // pred_region
          %v1073 = vld [vmem:[%s439 + $0x6] sm:$0x3]
          %v1074 = vld [vmem:[%s439 + $0xe] sm:$0x3]
          %v1075 = vld [vmem:[%s439 + $0x16] sm:$0x3]
          %v1076 = vld [vmem:[%s439 + $0x1e] sm:$0x3]
          %1081 = vrot.lane.b32.xlu0 %v1073, 2
          %v1082 = vpop.permute.xlu0 %1081
          %1083 = vrot.lane.b32.xlu0 %v1074, 2
          %v1084 = vpop.permute.xlu0 %1083
          %1085 = vrot.lane.b32.xlu0 %v1075, 2
          %v1086 = vpop.permute.xlu0 %1085
          %1087 = vrot.lane.b32.xlu0 %v1076, 2
          %v1088 = vpop.permute.xlu0 %1087
          %vm1093 = vcmask 140304
          %1094 = vst.msk [vmem:[#allocation3] sm:$0x3] %vm1093, %v1082
          %1095 = vst.msk [vmem:[#allocation3 + $0x18] sm:$0x3] %vm1093, %v1084
          %1096 = vst.msk [vmem:[#allocation3 + $0x30] sm:$0x3] %vm1093, %v1086
          %1097 = vst.msk [vmem:[#allocation3 + $0x48] sm:$0x3] %vm1093, %v1088
        $region88: #{tpu_custom_call.1} parent=43 // pred_fallthru
          _
        // Predicated region
        $region89: #{tpu_custom_call.1} parent=43 // pred_check
          %p1098 = pneg %p592
        $region90: #{tpu_custom_call.1} parent=43 // pred_check_branch
          %1100 = sbr.rel (%p1098) target = $region92
        $region91: #{tpu_custom_call.1} parent=43 // pred_region
          %v1101 = vld [vmem:[%s429 + $0x2] sm:$0x1]
          %v1102 = vld [vmem:[%s429 + $0x12] sm:$0x1]
          %v1103 = vld [vmem:[%s429 + $0x22] sm:$0x1]
          %v1104 = vld [vmem:[%s429 + $0x32] sm:$0x1]
          %1109 = vrot.lane.b32.xlu0 %v1101, 2
          %v1110 = vpop.permute.xlu0 %1109
          %1111 = vrot.lane.b32.xlu0 %v1102, 2
          %v1112 = vpop.permute.xlu0 %1111
          %1113 = vrot.lane.b32.xlu0 %v1103, 2
          %v1114 = vpop.permute.xlu0 %1113
          %1115 = vrot.lane.b32.xlu0 %v1104, 2
          %v1116 = vpop.permute.xlu0 %1115
          %vm1121 = vcmask 139280
          %1122 = vst.msk [vmem:[#allocation3] sm:$0x1] %vm1121, %v1110
          %1123 = vst.msk [vmem:[#allocation3 + $0x18] sm:$0x1] %vm1121, %v1112
          %1124 = vst.msk [vmem:[#allocation3 + $0x30] sm:$0x1] %vm1121, %v1114
          %1125 = vst.msk [vmem:[#allocation3 + $0x48] sm:$0x1] %vm1121, %v1116
          %v1126 = vld [vmem:[%s429 + $0x1] sm:$0x1]
          %v1127 = vld [vmem:[%s429 + $0x11] sm:$0x1]
          %v1128 = vld [vmem:[%s429 + $0x21] sm:$0x1]
          %v1129 = vld [vmem:[%s429 + $0x31] sm:$0x1]
          %1134 = vrot.lane.b32.xlu0 %v1126, 2
          %v1135 = vpop.permute.xlu0 %1134
          %1136 = vrot.lane.b32.xlu0 %v1127, 2
          %v1137 = vpop.permute.xlu0 %1136
          %1138 = vrot.lane.b32.xlu0 %v1128, 2
          %v1139 = vpop.permute.xlu0 %1138
          %1140 = vrot.lane.b32.xlu0 %v1129, 2
          %v1141 = vpop.permute.xlu0 %1140
          %1146 = vst.msk [vmem:[#allocation3 + $0x1] sm:$0x1] %vm1121, %v1135
          %1147 = vst.msk [vmem:[#allocation3 + $0x19] sm:$0x1] %vm1121, %v1137
          %1148 = vst.msk [vmem:[#allocation3 + $0x31] sm:$0x1] %vm1121, %v1139
          %1149 = vst.msk [vmem:[#allocation3 + $0x49] sm:$0x1] %vm1121, %v1141
        $region92: #{tpu_custom_call.1} parent=43 // pred_fallthru
          _
        // Predicated region
        $region93: #{tpu_custom_call.1} parent=43 // pred_check
          %p1150 = pneg %p645
        $region94: #{tpu_custom_call.1} parent=43 // pred_check_branch
          %1152 = sbr.rel (%p1150) target = $region96
        $region95: #{tpu_custom_call.1} parent=43 // pred_region
          %v1153 = vld [vmem:[%s449] sm:$0x3]
          %v1154 = vld [vmem:[%s449 + $0x8] sm:$0x3]
          %v1155 = vld [vmem:[%s449 + $0x10] sm:$0x3]
          %v1156 = vld [vmem:[%s449 + $0x18] sm:$0x3]
          %1161 = vrot.lane.b32.xlu0 %v1153, 2
          %v1162 = vpop.permute.xlu0 %1161
          %1163 = vrot.lane.b32.xlu0 %v1154, 2
          %v1164 = vpop.permute.xlu0 %1163
          %1165 = vrot.lane.b32.xlu0 %v1155, 2
          %v1166 = vpop.permute.xlu0 %1165
          %1167 = vrot.lane.b32.xlu0 %v1156, 2
          %v1168 = vpop.permute.xlu0 %1167
          %vm1173 = vcmask 140304
          %1174 = vst.msk [vmem:[#allocation3 + $0x12] sm:$0x3] %vm1173, %v1162
          %1175 = vst.msk [vmem:[#allocation3 + $0x2a] sm:$0x3] %vm1173, %v1164
          %1176 = vst.msk [vmem:[#allocation3 + $0x42] sm:$0x3] %vm1173, %v1166
          %1177 = vst.msk [vmem:[#allocation3 + $0x5a] sm:$0x3] %vm1173, %v1168
        $region96: #{tpu_custom_call.1} parent=43 // pred_fallthru
          _
        // Predicated region
        $region97: #{tpu_custom_call.1} parent=43 // pred_check
          %p1178 = pneg %p592
        $region98: #{tpu_custom_call.1} parent=43 // pred_check_branch
          %1180 = sbr.rel (%p1178) target = $region100
        $region99: #{tpu_custom_call.1} parent=43 // pred_region
          %v1181 = vld [vmem:[%s429 + $0xe] sm:$0x1]
          %v1182 = vld [vmem:[%s429 + $0x1e] sm:$0x1]
          %v1183 = vld [vmem:[%s429 + $0x2e] sm:$0x1]
          %v1184 = vld [vmem:[%s429 + $0x3e] sm:$0x1]
          %1189 = vrot.lane.b32.xlu0 %v1181, 2
          %v1190 = vpop.permute.xlu0 %1189
          %1191 = vrot.lane.b32.xlu0 %v1182, 2
          %v1192 = vpop.permute.xlu0 %1191
          %1193 = vrot.lane.b32.xlu0 %v1183, 2
          %v1194 = vpop.permute.xlu0 %1193
          %1195 = vrot.lane.b32.xlu0 %v1184, 2
          %v1196 = vpop.permute.xlu0 %1195
          %vm1201 = vcmask 139280
          %1202 = vst.msk [vmem:[#allocation3 + $0x12] sm:$0x1] %vm1201, %v1190
          %1203 = vst.msk [vmem:[#allocation3 + $0x2a] sm:$0x1] %vm1201, %v1192
          %1204 = vst.msk [vmem:[#allocation3 + $0x42] sm:$0x1] %vm1201, %v1194
          %1205 = vst.msk [vmem:[#allocation3 + $0x5a] sm:$0x1] %vm1201, %v1196
          %v1206 = vld [vmem:[%s429 + $0xd] sm:$0x1]
          %v1207 = vld [vmem:[%s429 + $0x1d] sm:$0x1]
          %v1208 = vld [vmem:[%s429 + $0x2d] sm:$0x1]
          %v1209 = vld [vmem:[%s429 + $0x3d] sm:$0x1]
          %1214 = vrot.lane.b32.xlu0 %v1206, 2
          %v1215 = vpop.permute.xlu0 %1214
          %1216 = vrot.lane.b32.xlu0 %v1207, 2
          %v1217 = vpop.permute.xlu0 %1216
          %1218 = vrot.lane.b32.xlu0 %v1208, 2
          %v1219 = vpop.permute.xlu0 %1218
          %1220 = vrot.lane.b32.xlu0 %v1209, 2
          %v1221 = vpop.permute.xlu0 %1220
          %1226 = vst.msk [vmem:[#allocation3 + $0x13] sm:$0x1] %vm1201, %v1215
          %1227 = vst.msk [vmem:[#allocation3 + $0x2b] sm:$0x1] %vm1201, %v1217
          %1228 = vst.msk [vmem:[#allocation3 + $0x43] sm:$0x1] %vm1201, %v1219
          %1229 = vst.msk [vmem:[#allocation3 + $0x5b] sm:$0x1] %vm1201, %v1221
        $region100: #{tpu_custom_call.1} parent=43 // pred_fallthru
          _
        %v1230 = vld [vmem:[#allocation3] sm:$0xff]
        %v1231 = vld [vmem:[#allocation3 + $0x8] sm:$0xff]
        %v1232 = vld [vmem:[#allocation3 + $0x10] sm:$0xf]
        %v1233 = vld [vmem:[#allocation3 + $0x18] sm:$0xff]
        %v1234 = vld [vmem:[#allocation3 + $0x20] sm:$0xff]
        %v1235 = vld [vmem:[#allocation3 + $0x28] sm:$0xf]
        %v1236 = vld [vmem:[#allocation3 + $0x30] sm:$0xff]
        %v1237 = vld [vmem:[#allocation3 + $0x38] sm:$0xff]
        %v1238 = vld [vmem:[#allocation3 + $0x40] sm:$0xf]
        %v1239 = vld [vmem:[#allocation3 + $0x48] sm:$0xff]
        %v1240 = vld [vmem:[#allocation3 + $0x50] sm:$0xff]
        %v1241 = vld [vmem:[#allocation3 + $0x58] sm:$0xf]
        %1254 = vrot.lane.b32.xlu0 %v1230, 124
        %v1255 = vpop.permute.xlu0 %1254
        %1256 = vrot.lane.b32.xlu0 %v1231, 124
        %v1257 = vpop.permute.xlu0 %1256
        %1258 = vrot.lane.b32.xlu0 %v1232, 124
        %v1259 = vpop.permute.xlu0 %1258
        %1260 = vrot.lane.b32.xlu0 %v1233, 124
        %v1261 = vpop.permute.xlu0 %1260
        %1262 = vrot.lane.b32.xlu0 %v1234, 124
        %v1263 = vpop.permute.xlu0 %1262
        %1264 = vrot.lane.b32.xlu0 %v1235, 124
        %v1265 = vpop.permute.xlu0 %1264
        %1266 = vrot.lane.b32.xlu0 %v1236, 124
        %v1267 = vpop.permute.xlu0 %1266
        %1268 = vrot.lane.b32.xlu0 %v1237, 124
        %v1269 = vpop.permute.xlu0 %1268
        %1270 = vrot.lane.b32.xlu0 %v1238, 124
        %v1271 = vpop.permute.xlu0 %1270
        %1272 = vrot.lane.b32.xlu0 %v1239, 124
        %v1273 = vpop.permute.xlu0 %1272
        %1274 = vrot.lane.b32.xlu0 %v1240, 124
        %v1275 = vpop.permute.xlu0 %1274
        %1276 = vrot.lane.b32.xlu0 %v1241, 124
        %v1277 = vpop.permute.xlu0 %1276
        %1290 = vst.msk [vmem:[#allocation3] sm:$0xff] %vm786, %v1255
        %1291 = vst.msk [vmem:[#allocation3 + $0x8] sm:$0xff] %vm786, %v1257
        %1292 = vst.msk [vmem:[#allocation3 + $0x10] sm:$0xf] %vm789, %v1259
        %1293 = vst.msk [vmem:[#allocation3 + $0x18] sm:$0xff] %vm786, %v1261
        %1294 = vst.msk [vmem:[#allocation3 + $0x20] sm:$0xff] %vm786, %v1263
        %1295 = vst.msk [vmem:[#allocation3 + $0x28] sm:$0xf] %vm789, %v1265
        %1296 = vst.msk [vmem:[#allocation3 + $0x30] sm:$0xff] %vm786, %v1267
        %1297 = vst.msk [vmem:[#allocation3 + $0x38] sm:$0xff] %vm786, %v1269
        %1298 = vst.msk [vmem:[#allocation3 + $0x40] sm:$0xf] %vm789, %v1271
        %1299 = vst.msk [vmem:[#allocation3 + $0x48] sm:$0xff] %vm786, %v1273
        %1300 = vst.msk [vmem:[#allocation3 + $0x50] sm:$0xff] %vm786, %v1275
        %1301 = vst.msk [vmem:[#allocation3 + $0x58] sm:$0xf] %vm789, %v1277
        %v1302 = vld [vmem:[#allocation3] sm:$0xff]
        %v1303 = vld [vmem:[#allocation3 + $0x8] sm:$0xff]
        %v1304 = vld [vmem:[#allocation3 + $0x10] sm:$0xf]
        %v1305 = vld [vmem:[#allocation3 + $0x18] sm:$0xff]
        %v1306 = vld [vmem:[#allocation3 + $0x20] sm:$0xff]
        %v1307 = vld [vmem:[#allocation3 + $0x28] sm:$0xf]
        %v1308 = vld [vmem:[#allocation3 + $0x30] sm:$0xff]
        %v1309 = vld [vmem:[#allocation3 + $0x38] sm:$0xff]
        %v1310 = vld [vmem:[#allocation3 + $0x40] sm:$0xf]
        %v1311 = vld [vmem:[#allocation3 + $0x48] sm:$0xff]
        %v1312 = vld [vmem:[#allocation3 + $0x50] sm:$0xff]
        %v1313 = vld [vmem:[#allocation3 + $0x58] sm:$0xf]
        %1326 = vrot.lane.b32.xlu0 %v1302, 126
        %v1327 = vpop.permute.xlu0 %1326
        %1328 = vrot.lane.b32.xlu0 %v1303, 126
        %v1329 = vpop.permute.xlu0 %1328
        %1330 = vrot.lane.b32.xlu0 %v1304, 126
        %v1331 = vpop.permute.xlu0 %1330
        %1332 = vrot.lane.b32.xlu0 %v1305, 126
        %v1333 = vpop.permute.xlu0 %1332
        %1334 = vrot.lane.b32.xlu0 %v1306, 126
        %v1335 = vpop.permute.xlu0 %1334
        %1336 = vrot.lane.b32.xlu0 %v1307, 126
        %v1337 = vpop.permute.xlu0 %1336
        %1338 = vrot.lane.b32.xlu0 %v1308, 126
        %v1339 = vpop.permute.xlu0 %1338
        %1340 = vrot.lane.b32.xlu0 %v1309, 126
        %v1341 = vpop.permute.xlu0 %1340
        %1342 = vrot.lane.b32.xlu0 %v1310, 126
        %v1343 = vpop.permute.xlu0 %1342
        %1344 = vrot.lane.b32.xlu0 %v1311, 126
        %v1345 = vpop.permute.xlu0 %1344
        %1346 = vrot.lane.b32.xlu0 %v1312, 126
        %v1347 = vpop.permute.xlu0 %1346
        %1348 = vrot.lane.b32.xlu0 %v1313, 126
        %v1349 = vpop.permute.xlu0 %1348
        %1362 = vst.msk [vmem:[#allocation3] sm:$0xff] %vm860, %v1327
        %1363 = vst.msk [vmem:[#allocation3 + $0x8] sm:$0xff] %vm860, %v1329
        %1364 = vst.msk [vmem:[#allocation3 + $0x10] sm:$0xf] %vm863, %v1331
        %1365 = vst.msk [vmem:[#allocation3 + $0x18] sm:$0xff] %vm860, %v1333
        %1366 = vst.msk [vmem:[#allocation3 + $0x20] sm:$0xff] %vm860, %v1335
        %1367 = vst.msk [vmem:[#allocation3 + $0x28] sm:$0xf] %vm863, %v1337
        %1368 = vst.msk [vmem:[#allocation3 + $0x30] sm:$0xff] %vm860, %v1339
        %1369 = vst.msk [vmem:[#allocation3 + $0x38] sm:$0xff] %vm860, %v1341
        %1370 = vst.msk [vmem:[#allocation3 + $0x40] sm:$0xf] %vm863, %v1343
        %1371 = vst.msk [vmem:[#allocation3 + $0x48] sm:$0xff] %vm860, %v1345
        %1372 = vst.msk [vmem:[#allocation3 + $0x50] sm:$0xff] %vm860, %v1347
        %1373 = vst.msk [vmem:[#allocation3 + $0x58] sm:$0xf] %vm863, %v1349
        %v1374 = vld [vmem:[#allocation3] sm:$0xff]
        %v1375 = vld [vmem:[#allocation3 + $0x8] sm:$0xff]
        %v1376 = vld [vmem:[#allocation3 + $0x10] sm:$0xf]
        %v1377 = vld [vmem:[#allocation3 + $0x18] sm:$0xff]
        %v1378 = vld [vmem:[#allocation3 + $0x20] sm:$0xff]
        %v1379 = vld [vmem:[#allocation3 + $0x28] sm:$0xf]
        %v1380 = vld [vmem:[#allocation3 + $0x30] sm:$0xff]
        %v1381 = vld [vmem:[#allocation3 + $0x38] sm:$0xff]
        %v1382 = vld [vmem:[#allocation3 + $0x40] sm:$0xf]
        %v1383 = vld [vmem:[#allocation3 + $0x48] sm:$0xff]
        %v1384 = vld [vmem:[#allocation3 + $0x50] sm:$0xff]
        %v1385 = vld [vmem:[#allocation3 + $0x58] sm:$0xf]
        %1398 = vrot.lane.b32.xlu0 %v1374, 2
        %v1399 = vpop.permute.xlu0 %1398
        %1400 = vrot.lane.b32.xlu0 %v1375, 2
        %v1401 = vpop.permute.xlu0 %1400
        %1402 = vrot.lane.b32.xlu0 %v1376, 2
        %v1403 = vpop.permute.xlu0 %1402
        %1404 = vrot.lane.b32.xlu0 %v1377, 2
        %v1405 = vpop.permute.xlu0 %1404
        %1406 = vrot.lane.b32.xlu0 %v1378, 2
        %v1407 = vpop.permute.xlu0 %1406
        %1408 = vrot.lane.b32.xlu0 %v1379, 2
        %v1409 = vpop.permute.xlu0 %1408
        %1410 = vrot.lane.b32.xlu0 %v1380, 2
        %v1411 = vpop.permute.xlu0 %1410
        %1412 = vrot.lane.b32.xlu0 %v1381, 2
        %v1413 = vpop.permute.xlu0 %1412
        %1414 = vrot.lane.b32.xlu0 %v1382, 2
        %v1415 = vpop.permute.xlu0 %1414
        %1416 = vrot.lane.b32.xlu0 %v1383, 2
        %v1417 = vpop.permute.xlu0 %1416
        %1418 = vrot.lane.b32.xlu0 %v1384, 2
        %v1419 = vpop.permute.xlu0 %1418
        %1420 = vrot.lane.b32.xlu0 %v1385, 2
        %v1421 = vpop.permute.xlu0 %1420
        %1434 = vst.msk [vmem:[#allocation3] sm:$0xff] %vm934, %v1399
        %1435 = vst.msk [vmem:[#allocation3 + $0x8] sm:$0xff] %vm934, %v1401
        %1436 = vst.msk [vmem:[#allocation3 + $0x10] sm:$0xf] %vm937, %v1403
        %1437 = vst.msk [vmem:[#allocation3 + $0x18] sm:$0xff] %vm934, %v1405
        %1438 = vst.msk [vmem:[#allocation3 + $0x20] sm:$0xff] %vm934, %v1407
        %1439 = vst.msk [vmem:[#allocation3 + $0x28] sm:$0xf] %vm937, %v1409
        %1440 = vst.msk [vmem:[#allocation3 + $0x30] sm:$0xff] %vm934, %v1411
        %1441 = vst.msk [vmem:[#allocation3 + $0x38] sm:$0xff] %vm934, %v1413
        %1442 = vst.msk [vmem:[#allocation3 + $0x40] sm:$0xf] %vm937, %v1415
        %1443 = vst.msk [vmem:[#allocation3 + $0x48] sm:$0xff] %vm934, %v1417
        %1444 = vst.msk [vmem:[#allocation3 + $0x50] sm:$0xff] %vm934, %v1419
        %1445 = vst.msk [vmem:[#allocation3 + $0x58] sm:$0xf] %vm937, %v1421
        %v1446 = vld [vmem:[#allocation3] sm:$0xff]
        %v1447 = vld [vmem:[#allocation3 + $0x8] sm:$0xff]
        %v1448 = vld [vmem:[#allocation3 + $0x10] sm:$0xf]
        %v1449 = vld [vmem:[#allocation3 + $0x18] sm:$0xff]
        %v1450 = vld [vmem:[#allocation3 + $0x20] sm:$0xff]
        %v1451 = vld [vmem:[#allocation3 + $0x28] sm:$0xf]
        %v1452 = vld [vmem:[#allocation3 + $0x30] sm:$0xff]
        %v1453 = vld [vmem:[#allocation3 + $0x38] sm:$0xff]
        %v1454 = vld [vmem:[#allocation3 + $0x40] sm:$0xf]
        %v1455 = vld [vmem:[#allocation3 + $0x48] sm:$0xff]
        %v1456 = vld [vmem:[#allocation3 + $0x50] sm:$0xff]
        %v1457 = vld [vmem:[#allocation3 + $0x58] sm:$0xf]
        %1470 = vrot.lane.b32.xlu0 %v1446, 4
        %v1471 = vpop.permute.xlu0 %1470
        %1472 = vrot.lane.b32.xlu0 %v1447, 4
        %v1473 = vpop.permute.xlu0 %1472
        %1474 = vrot.lane.b32.xlu0 %v1448, 4
        %v1475 = vpop.permute.xlu0 %1474
        %1476 = vrot.lane.b32.xlu0 %v1449, 4
        %v1477 = vpop.permute.xlu0 %1476
        %1478 = vrot.lane.b32.xlu0 %v1450, 4
        %v1479 = vpop.permute.xlu0 %1478
        %1480 = vrot.lane.b32.xlu0 %v1451, 4
        %v1481 = vpop.permute.xlu0 %1480
        %1482 = vrot.lane.b32.xlu0 %v1452, 4
        %v1483 = vpop.permute.xlu0 %1482
        %1484 = vrot.lane.b32.xlu0 %v1453, 4
        %v1485 = vpop.permute.xlu0 %1484
        %1486 = vrot.lane.b32.xlu0 %v1454, 4
        %v1487 = vpop.permute.xlu0 %1486
        %1488 = vrot.lane.b32.xlu0 %v1455, 4
        %v1489 = vpop.permute.xlu0 %1488
        %1490 = vrot.lane.b32.xlu0 %v1456, 4
        %v1491 = vpop.permute.xlu0 %1490
        %1492 = vrot.lane.b32.xlu0 %v1457, 4
        %v1493 = vpop.permute.xlu0 %1492
        %1506 = vst.msk [vmem:[#allocation3] sm:$0xff] %vm1008, %v1471
        %1507 = vst.msk [vmem:[#allocation3 + $0x8] sm:$0xff] %vm1008, %v1473
        %1508 = vst.msk [vmem:[#allocation3 + $0x10] sm:$0xf] %vm1011, %v1475
        %1509 = vst.msk [vmem:[#allocation3 + $0x18] sm:$0xff] %vm1008, %v1477
        %1510 = vst.msk [vmem:[#allocation3 + $0x20] sm:$0xff] %vm1008, %v1479
        %1511 = vst.msk [vmem:[#allocation3 + $0x28] sm:$0xf] %vm1011, %v1481
        %1512 = vst.msk [vmem:[#allocation3 + $0x30] sm:$0xff] %vm1008, %v1483
        %1513 = vst.msk [vmem:[#allocation3 + $0x38] sm:$0xff] %vm1008, %v1485
        %1514 = vst.msk [vmem:[#allocation3 + $0x40] sm:$0xf] %vm1011, %v1487
        %1515 = vst.msk [vmem:[#allocation3 + $0x48] sm:$0xff] %vm1008, %v1489
        %1516 = vst.msk [vmem:[#allocation3 + $0x50] sm:$0xff] %vm1008, %v1491
        %1517 = vst.msk [vmem:[#allocation3 + $0x58] sm:$0xf] %vm1011, %v1493
        %v1518 = vld [vmem:[#allocation2] sm:$0xff]
        %v1519 = vld [vmem:[#allocation2 + $0x8] sm:$0xff]
        %v1520 = vld [vmem:[#allocation2 + $0x18] sm:$0xff]
        %v1521 = vld [vmem:[#allocation2 + $0x20] sm:$0xff]
        %v1522 = vld [vmem:[#allocation2 + $0x30] sm:$0xff]
        %v1523 = vld [vmem:[#allocation2 + $0x38] sm:$0xff]
        %v1524 = vld [vmem:[#allocation2 + $0x48] sm:$0xff]
        %v1525 = vld [vmem:[#allocation2 + $0x50] sm:$0xff]
        %v1526 = vld [vmem:[#allocation3] sm:$0xff]
        %v1527 = vld [vmem:[#allocation3 + $0x8] sm:$0xff]
        %v1528 = vld [vmem:[#allocation3 + $0x18] sm:$0xff]
        %v1529 = vld [vmem:[#allocation3 + $0x20] sm:$0xff]
        %v1530 = vld [vmem:[#allocation3 + $0x30] sm:$0xff]
        %v1531 = vld [vmem:[#allocation3 + $0x38] sm:$0xff]
        %v1532 = vld [vmem:[#allocation3 + $0x48] sm:$0xff]
        %v1533 = vld [vmem:[#allocation3 + $0x50] sm:$0xff]
        %v1534 = vmul.f32 %v1518, 0.120078385
        %v1535 = vmul.f32 %v1519, 0.120078385
        %v1536 = vmul.f32 %v1520, 0.120078385
        %v1537 = vmul.f32 %v1521, 0.120078385
        %v1538 = vmul.f32 %v1522, 0.120078385
        %v1539 = vmul.f32 %v1523, 0.120078385
        %v1540 = vmul.f32 %v1524, 0.120078385
        %v1541 = vmul.f32 %v1525, 0.120078385
        %v1542 = vmul.f32 %v1526, 0.120078385
        %v1543 = vmul.f32 %v1527, 0.120078385
        %v1544 = vmul.f32 %v1528, 0.120078385
        %v1545 = vmul.f32 %v1529, 0.120078385
        %v1546 = vmul.f32 %v1530, 0.120078385
        %v1547 = vmul.f32 %v1531, 0.120078385
        %v1548 = vmul.f32 %v1532, 0.120078385
        %v1549 = vmul.f32 %v1533, 0.120078385
        %v1550 = vmul.f32 %v1534, %v1518
        %v1551 = vmul.f32 %v1535, %v1519
        %v1552 = vmul.f32 %v1536, %v1520
        %v1553 = vmul.f32 %v1537, %v1521
        %v1554 = vmul.f32 %v1538, %v1522
        %v1555 = vmul.f32 %v1539, %v1523
        %v1556 = vmul.f32 %v1540, %v1524
        %v1557 = vmul.f32 %v1541, %v1525
        %v1558 = vmul.f32 %v1542, %v1526
        %v1559 = vmul.f32 %v1543, %v1527
        %v1560 = vmul.f32 %v1544, %v1528
        %v1561 = vmul.f32 %v1545, %v1529
        %v1562 = vmul.f32 %v1546, %v1530
        %v1563 = vmul.f32 %v1547, %v1531
        %v1564 = vmul.f32 %v1548, %v1532
        %v1565 = vmul.f32 %v1549, %v1533
        %v1566 = vmul.f32 %v1534, %v1526
        %v1567 = vmul.f32 %v1535, %v1527
        %v1568 = vmul.f32 %v1536, %v1528
        %v1569 = vmul.f32 %v1537, %v1529
        %v1570 = vmul.f32 %v1538, %v1530
        %v1571 = vmul.f32 %v1539, %v1531
        %v1572 = vmul.f32 %v1540, %v1532
        %v1573 = vmul.f32 %v1541, %v1533
        %v1574 = vld [vmem:[#allocation2 + $0x1] sm:$0xff]
        %v1575 = vld [vmem:[#allocation2 + $0x9] sm:$0xff]
        %v1576 = vld [vmem:[#allocation2 + $0x19] sm:$0xff]
        %v1577 = vld [vmem:[#allocation2 + $0x21] sm:$0xff]
        %v1578 = vld [vmem:[#allocation2 + $0x31] sm:$0xff]
        %v1579 = vld [vmem:[#allocation2 + $0x39] sm:$0xff]
        %v1580 = vld [vmem:[#allocation2 + $0x49] sm:$0xff]
        %v1581 = vld [vmem:[#allocation2 + $0x51] sm:$0xff]
        %v1582 = vld [vmem:[#allocation3 + $0x1] sm:$0xff]
        %v1583 = vld [vmem:[#allocation3 + $0x9] sm:$0xff]
        %v1584 = vld [vmem:[#allocation3 + $0x19] sm:$0xff]
        %v1585 = vld [vmem:[#allocation3 + $0x21] sm:$0xff]
        %v1586 = vld [vmem:[#allocation3 + $0x31] sm:$0xff]
        %v1587 = vld [vmem:[#allocation3 + $0x39] sm:$0xff]
        %v1588 = vld [vmem:[#allocation3 + $0x49] sm:$0xff]
        %v1589 = vld [vmem:[#allocation3 + $0x51] sm:$0xff]
        %v1590 = vmul.f32 %v1574, 0.23388076
        %v1591 = vmul.f32 %v1575, 0.23388076
        %v1592 = vmul.f32 %v1576, 0.23388076
        %v1593 = vmul.f32 %v1577, 0.23388076
        %v1594 = vmul.f32 %v1578, 0.23388076
        %v1595 = vmul.f32 %v1579, 0.23388076
        %v1596 = vmul.f32 %v1580, 0.23388076
        %v1597 = vmul.f32 %v1581, 0.23388076
        %v1598 = vmul.f32 %v1582, 0.23388076
        %v1599 = vmul.f32 %v1583, 0.23388076
        %v1600 = vmul.f32 %v1584, 0.23388076
        %v1601 = vmul.f32 %v1585, 0.23388076
        %v1602 = vmul.f32 %v1586, 0.23388076
        %v1603 = vmul.f32 %v1587, 0.23388076
        %v1604 = vmul.f32 %v1588, 0.23388076
        %v1605 = vmul.f32 %v1589, 0.23388076
        %v1606 = vmul.f32 %v1590, %v1574
        %v1607 = vmul.f32 %v1591, %v1575
        %v1608 = vmul.f32 %v1592, %v1576
        %v1609 = vmul.f32 %v1593, %v1577
        %v1610 = vmul.f32 %v1594, %v1578
        %v1611 = vmul.f32 %v1595, %v1579
        %v1612 = vmul.f32 %v1596, %v1580
        %v1613 = vmul.f32 %v1597, %v1581
        %v1614 = vmul.f32 %v1598, %v1582
        %v1615 = vmul.f32 %v1599, %v1583
        %v1616 = vmul.f32 %v1600, %v1584
        %v1617 = vmul.f32 %v1601, %v1585
        %v1618 = vmul.f32 %v1602, %v1586
        %v1619 = vmul.f32 %v1603, %v1587
        %v1620 = vmul.f32 %v1604, %v1588
        %v1621 = vmul.f32 %v1605, %v1589
        %v1622 = vmul.f32 %v1590, %v1582
        %v1623 = vmul.f32 %v1591, %v1583
        %v1624 = vmul.f32 %v1592, %v1584
        %v1625 = vmul.f32 %v1593, %v1585
        %v1626 = vmul.f32 %v1594, %v1586
        %v1627 = vmul.f32 %v1595, %v1587
        %v1628 = vmul.f32 %v1596, %v1588
        %v1629 = vmul.f32 %v1597, %v1589
        %v1630 = vadd.f32 %v1534, %v1590
        %v1631 = vadd.f32 %v1535, %v1591
        %v1632 = vadd.f32 %v1536, %v1592
        %v1633 = vadd.f32 %v1537, %v1593
        %v1634 = vadd.f32 %v1538, %v1594
        %v1635 = vadd.f32 %v1539, %v1595
        %v1636 = vadd.f32 %v1540, %v1596
        %v1637 = vadd.f32 %v1541, %v1597
        %v1638 = vadd.f32 %v1542, %v1598
        %v1639 = vadd.f32 %v1543, %v1599
        %v1640 = vadd.f32 %v1544, %v1600
        %v1641 = vadd.f32 %v1545, %v1601
        %v1642 = vadd.f32 %v1546, %v1602
        %v1643 = vadd.f32 %v1547, %v1603
        %v1644 = vadd.f32 %v1548, %v1604
        %v1645 = vadd.f32 %v1549, %v1605
        %v1646 = vadd.f32 %v1550, %v1606
        %v1647 = vadd.f32 %v1551, %v1607
        %v1648 = vadd.f32 %v1552, %v1608
        %v1649 = vadd.f32 %v1553, %v1609
        %v1650 = vadd.f32 %v1554, %v1610
        %v1651 = vadd.f32 %v1555, %v1611
        %v1652 = vadd.f32 %v1556, %v1612
        %v1653 = vadd.f32 %v1557, %v1613
        %v1654 = vadd.f32 %v1558, %v1614
        %v1655 = vadd.f32 %v1559, %v1615
        %v1656 = vadd.f32 %v1560, %v1616
        %v1657 = vadd.f32 %v1561, %v1617
        %v1658 = vadd.f32 %v1562, %v1618
        %v1659 = vadd.f32 %v1563, %v1619
        %v1660 = vadd.f32 %v1564, %v1620
        %v1661 = vadd.f32 %v1565, %v1621
        %v1662 = vadd.f32 %v1566, %v1622
        %v1663 = vadd.f32 %v1567, %v1623
        %v1664 = vadd.f32 %v1568, %v1624
        %v1665 = vadd.f32 %v1569, %v1625
        %v1666 = vadd.f32 %v1570, %v1626
        %v1667 = vadd.f32 %v1571, %v1627
        %v1668 = vadd.f32 %v1572, %v1628
        %v1669 = vadd.f32 %v1573, %v1629
        %v1670 = vld [vmem:[#allocation2 + $0x2] sm:$0xff]
        %v1671 = vld [vmem:[#allocation2 + $0xa] sm:$0xff]
        %v1672 = vld [vmem:[#allocation2 + $0x1a] sm:$0xff]
        %v1673 = vld [vmem:[#allocation2 + $0x22] sm:$0xff]
        %v1674 = vld [vmem:[#allocation2 + $0x32] sm:$0xff]
        %v1675 = vld [vmem:[#allocation2 + $0x3a] sm:$0xff]
        %v1676 = vld [vmem:[#allocation2 + $0x4a] sm:$0xff]
        %v1677 = vld [vmem:[#allocation2 + $0x52] sm:$0xff]
        %v1678 = vld [vmem:[#allocation3 + $0x2] sm:$0xff]
        %v1679 = vld [vmem:[#allocation3 + $0xa] sm:$0xff]
        %v1680 = vld [vmem:[#allocation3 + $0x1a] sm:$0xff]
        %v1681 = vld [vmem:[#allocation3 + $0x22] sm:$0xff]
        %v1682 = vld [vmem:[#allocation3 + $0x32] sm:$0xff]
        %v1683 = vld [vmem:[#allocation3 + $0x3a] sm:$0xff]
        %v1684 = vld [vmem:[#allocation3 + $0x4a] sm:$0xff]
        %v1685 = vld [vmem:[#allocation3 + $0x52] sm:$0xff]
        %v1686 = vmul.f32 %v1670, 0.2920817
        %v1687 = vmul.f32 %v1671, 0.2920817
        %v1688 = vmul.f32 %v1672, 0.2920817
        %v1689 = vmul.f32 %v1673, 0.2920817
        %v1690 = vmul.f32 %v1674, 0.2920817
        %v1691 = vmul.f32 %v1675, 0.2920817
        %v1692 = vmul.f32 %v1676, 0.2920817
        %v1693 = vmul.f32 %v1677, 0.2920817
        %v1694 = vmul.f32 %v1678, 0.2920817
        %v1695 = vmul.f32 %v1679, 0.2920817
        %v1696 = vmul.f32 %v1680, 0.2920817
        %v1697 = vmul.f32 %v1681, 0.2920817
        %v1698 = vmul.f32 %v1682, 0.2920817
        %v1699 = vmul.f32 %v1683, 0.2920817
        %v1700 = vmul.f32 %v1684, 0.2920817
        %v1701 = vmul.f32 %v1685, 0.2920817
        %v1702 = vmul.f32 %v1686, %v1670
        %v1703 = vmul.f32 %v1687, %v1671
        %v1704 = vmul.f32 %v1688, %v1672
        %v1705 = vmul.f32 %v1689, %v1673
        %v1706 = vmul.f32 %v1690, %v1674
        %v1707 = vmul.f32 %v1691, %v1675
        %v1708 = vmul.f32 %v1692, %v1676
        %v1709 = vmul.f32 %v1693, %v1677
        %v1710 = vmul.f32 %v1694, %v1678
        %v1711 = vmul.f32 %v1695, %v1679
        %v1712 = vmul.f32 %v1696, %v1680
        %v1713 = vmul.f32 %v1697, %v1681
        %v1714 = vmul.f32 %v1698, %v1682
        %v1715 = vmul.f32 %v1699, %v1683
        %v1716 = vmul.f32 %v1700, %v1684
        %v1717 = vmul.f32 %v1701, %v1685
        %v1718 = vmul.f32 %v1686, %v1678
        %v1719 = vmul.f32 %v1687, %v1679
        %v1720 = vmul.f32 %v1688, %v1680
        %v1721 = vmul.f32 %v1689, %v1681
        %v1722 = vmul.f32 %v1690, %v1682
        %v1723 = vmul.f32 %v1691, %v1683
        %v1724 = vmul.f32 %v1692, %v1684
        %v1725 = vmul.f32 %v1693, %v1685
        %v1726 = vadd.f32 %v1630, %v1686
        %v1727 = vadd.f32 %v1631, %v1687
        %v1728 = vadd.f32 %v1632, %v1688
        %v1729 = vadd.f32 %v1633, %v1689
        %v1730 = vadd.f32 %v1634, %v1690
        %v1731 = vadd.f32 %v1635, %v1691
        %v1732 = vadd.f32 %v1636, %v1692
        %v1733 = vadd.f32 %v1637, %v1693
        %v1734 = vadd.f32 %v1638, %v1694
        %v1735 = vadd.f32 %v1639, %v1695
        %v1736 = vadd.f32 %v1640, %v1696
        %v1737 = vadd.f32 %v1641, %v1697
        %v1738 = vadd.f32 %v1642, %v1698
        %v1739 = vadd.f32 %v1643, %v1699
        %v1740 = vadd.f32 %v1644, %v1700
        %v1741 = vadd.f32 %v1645, %v1701
        %v1742 = vadd.f32 %v1646, %v1702
        %v1743 = vadd.f32 %v1647, %v1703
        %v1744 = vadd.f32 %v1648, %v1704
        %v1745 = vadd.f32 %v1649, %v1705
        %v1746 = vadd.f32 %v1650, %v1706
        %v1747 = vadd.f32 %v1651, %v1707
        %v1748 = vadd.f32 %v1652, %v1708
        %v1749 = vadd.f32 %v1653, %v1709
        %v1750 = vadd.f32 %v1654, %v1710
        %v1751 = vadd.f32 %v1655, %v1711
        %v1752 = vadd.f32 %v1656, %v1712
        %v1753 = vadd.f32 %v1657, %v1713
        %v1754 = vadd.f32 %v1658, %v1714
        %v1755 = vadd.f32 %v1659, %v1715
        %v1756 = vadd.f32 %v1660, %v1716
        %v1757 = vadd.f32 %v1661, %v1717
        %v1758 = vadd.f32 %v1662, %v1718
        %v1759 = vadd.f32 %v1663, %v1719
        %v1760 = vadd.f32 %v1664, %v1720
        %v1761 = vadd.f32 %v1665, %v1721
        %v1762 = vadd.f32 %v1666, %v1722
        %v1763 = vadd.f32 %v1667, %v1723
        %v1764 = vadd.f32 %v1668, %v1724
        %v1765 = vadd.f32 %v1669, %v1725
        %v1766 = vld [vmem:[#allocation2 + $0x3] sm:$0xff]
        %v1767 = vld [vmem:[#allocation2 + $0xb] sm:$0xff]
        %v1768 = vld [vmem:[#allocation2 + $0x1b] sm:$0xff]
        %v1769 = vld [vmem:[#allocation2 + $0x23] sm:$0xff]
        %v1770 = vld [vmem:[#allocation2 + $0x33] sm:$0xff]
        %v1771 = vld [vmem:[#allocation2 + $0x3b] sm:$0xff]
        %v1772 = vld [vmem:[#allocation2 + $0x4b] sm:$0xff]
        %v1773 = vld [vmem:[#allocation2 + $0x53] sm:$0xff]
        %v1774 = vld [vmem:[#allocation3 + $0x3] sm:$0xff]
        %v1775 = vld [vmem:[#allocation3 + $0xb] sm:$0xff]
        %v1776 = vld [vmem:[#allocation3 + $0x1b] sm:$0xff]
        %v1777 = vld [vmem:[#allocation3 + $0x23] sm:$0xff]
        %v1778 = vld [vmem:[#allocation3 + $0x33] sm:$0xff]
        %v1779 = vld [vmem:[#allocation3 + $0x3b] sm:$0xff]
        %v1780 = vld [vmem:[#allocation3 + $0x4b] sm:$0xff]
        %v1781 = vld [vmem:[#allocation3 + $0x53] sm:$0xff]
        %v1782 = vmul.f32 %v1766, 0.23388076
        %v1783 = vmul.f32 %v1767, 0.23388076
        %v1784 = vmul.f32 %v1768, 0.23388076
        %v1785 = vmul.f32 %v1769, 0.23388076
        %v1786 = vmul.f32 %v1770, 0.23388076
        %v1787 = vmul.f32 %v1771, 0.23388076
        %v1788 = vmul.f32 %v1772, 0.23388076
        %v1789 = vmul.f32 %v1773, 0.23388076
        %v1790 = vmul.f32 %v1774, 0.23388076
        %v1791 = vmul.f32 %v1775, 0.23388076
        %v1792 = vmul.f32 %v1776, 0.23388076
        %v1793 = vmul.f32 %v1777, 0.23388076
        %v1794 = vmul.f32 %v1778, 0.23388076
        %v1795 = vmul.f32 %v1779, 0.23388076
        %v1796 = vmul.f32 %v1780, 0.23388076
        %v1797 = vmul.f32 %v1781, 0.23388076
        %v1798 = vmul.f32 %v1782, %v1766
        %v1799 = vmul.f32 %v1783, %v1767
        %v1800 = vmul.f32 %v1784, %v1768
        %v1801 = vmul.f32 %v1785, %v1769
        %v1802 = vmul.f32 %v1786, %v1770
        %v1803 = vmul.f32 %v1787, %v1771
        %v1804 = vmul.f32 %v1788, %v1772
        %v1805 = vmul.f32 %v1789, %v1773
        %v1806 = vmul.f32 %v1790, %v1774
        %v1807 = vmul.f32 %v1791, %v1775
        %v1808 = vmul.f32 %v1792, %v1776
        %v1809 = vmul.f32 %v1793, %v1777
        %v1810 = vmul.f32 %v1794, %v1778
        %v1811 = vmul.f32 %v1795, %v1779
        %v1812 = vmul.f32 %v1796, %v1780
        %v1813 = vmul.f32 %v1797, %v1781
        %v1814 = vmul.f32 %v1782, %v1774
        %v1815 = vmul.f32 %v1783, %v1775
        %v1816 = vmul.f32 %v1784, %v1776
        %v1817 = vmul.f32 %v1785, %v1777
        %v1818 = vmul.f32 %v1786, %v1778
        %v1819 = vmul.f32 %v1787, %v1779
        %v1820 = vmul.f32 %v1788, %v1780
        %v1821 = vmul.f32 %v1789, %v1781
        %v1822 = vadd.f32 %v1726, %v1782
        %v1823 = vadd.f32 %v1727, %v1783
        %v1824 = vadd.f32 %v1728, %v1784
        %v1825 = vadd.f32 %v1729, %v1785
        %v1826 = vadd.f32 %v1730, %v1786
        %v1827 = vadd.f32 %v1731, %v1787
        %v1828 = vadd.f32 %v1732, %v1788
        %v1829 = vadd.f32 %v1733, %v1789
        %v1830 = vadd.f32 %v1734, %v1790
        %v1831 = vadd.f32 %v1735, %v1791
        %v1832 = vadd.f32 %v1736, %v1792
        %v1833 = vadd.f32 %v1737, %v1793
        %v1834 = vadd.f32 %v1738, %v1794
        %v1835 = vadd.f32 %v1739, %v1795
        %v1836 = vadd.f32 %v1740, %v1796
        %v1837 = vadd.f32 %v1741, %v1797
        %v1838 = vadd.f32 %v1742, %v1798
        %v1839 = vadd.f32 %v1743, %v1799
        %v1840 = vadd.f32 %v1744, %v1800
        %v1841 = vadd.f32 %v1745, %v1801
        %v1842 = vadd.f32 %v1746, %v1802
        %v1843 = vadd.f32 %v1747, %v1803
        %v1844 = vadd.f32 %v1748, %v1804
        %v1845 = vadd.f32 %v1749, %v1805
        %v1846 = vadd.f32 %v1750, %v1806
        %v1847 = vadd.f32 %v1751, %v1807
        %v1848 = vadd.f32 %v1752, %v1808
        %v1849 = vadd.f32 %v1753, %v1809
        %v1850 = vadd.f32 %v1754, %v1810
        %v1851 = vadd.f32 %v1755, %v1811
        %v1852 = vadd.f32 %v1756, %v1812
        %v1853 = vadd.f32 %v1757, %v1813
        %v1854 = vadd.f32 %v1758, %v1814
        %v1855 = vadd.f32 %v1759, %v1815
        %v1856 = vadd.f32 %v1760, %v1816
        %v1857 = vadd.f32 %v1761, %v1817
        %v1858 = vadd.f32 %v1762, %v1818
        %v1859 = vadd.f32 %v1763, %v1819
        %v1860 = vadd.f32 %v1764, %v1820
        %v1861 = vadd.f32 %v1765, %v1821
        %v1862 = vld [vmem:[#allocation2 + $0x4] sm:$0xff]
        %v1863 = vld [vmem:[#allocation2 + $0xc] sm:$0xff]
        %v1864 = vld [vmem:[#allocation2 + $0x1c] sm:$0xff]
        %v1865 = vld [vmem:[#allocation2 + $0x24] sm:$0xff]
        %v1866 = vld [vmem:[#allocation2 + $0x34] sm:$0xff]
        %v1867 = vld [vmem:[#allocation2 + $0x3c] sm:$0xff]
        %v1868 = vld [vmem:[#allocation2 + $0x4c] sm:$0xff]
        %v1869 = vld [vmem:[#allocation2 + $0x54] sm:$0xff]
        %v1870 = vld [vmem:[#allocation3 + $0x4] sm:$0xff]
        %v1871 = vld [vmem:[#allocation3 + $0xc] sm:$0xff]
        %v1872 = vld [vmem:[#allocation3 + $0x1c] sm:$0xff]
        %v1873 = vld [vmem:[#allocation3 + $0x24] sm:$0xff]
        %v1874 = vld [vmem:[#allocation3 + $0x34] sm:$0xff]
        %v1875 = vld [vmem:[#allocation3 + $0x3c] sm:$0xff]
        %v1876 = vld [vmem:[#allocation3 + $0x4c] sm:$0xff]
        %v1877 = vld [vmem:[#allocation3 + $0x54] sm:$0xff]
        %v1878 = vmul.f32 %v1862, 0.120078385
        %v1879 = vmul.f32 %v1863, 0.120078385
        %v1880 = vmul.f32 %v1864, 0.120078385
        %v1881 = vmul.f32 %v1865, 0.120078385
        %v1882 = vmul.f32 %v1866, 0.120078385
        %v1883 = vmul.f32 %v1867, 0.120078385
        %v1884 = vmul.f32 %v1868, 0.120078385
        %v1885 = vmul.f32 %v1869, 0.120078385
        %v1886 = vmul.f32 %v1870, 0.120078385
        %v1887 = vmul.f32 %v1871, 0.120078385
        %v1888 = vmul.f32 %v1872, 0.120078385
        %v1889 = vmul.f32 %v1873, 0.120078385
        %v1890 = vmul.f32 %v1874, 0.120078385
        %v1891 = vmul.f32 %v1875, 0.120078385
        %v1892 = vmul.f32 %v1876, 0.120078385
        %v1893 = vmul.f32 %v1877, 0.120078385
        %v1894 = vmul.f32 %v1878, %v1862
        %v1895 = vmul.f32 %v1879, %v1863
        %v1896 = vmul.f32 %v1880, %v1864
        %v1897 = vmul.f32 %v1881, %v1865
        %v1898 = vmul.f32 %v1882, %v1866
        %v1899 = vmul.f32 %v1883, %v1867
        %v1900 = vmul.f32 %v1884, %v1868
        %v1901 = vmul.f32 %v1885, %v1869
        %v1902 = vmul.f32 %v1886, %v1870
        %v1903 = vmul.f32 %v1887, %v1871
        %v1904 = vmul.f32 %v1888, %v1872
        %v1905 = vmul.f32 %v1889, %v1873
        %v1906 = vmul.f32 %v1890, %v1874
        %v1907 = vmul.f32 %v1891, %v1875
        %v1908 = vmul.f32 %v1892, %v1876
        %v1909 = vmul.f32 %v1893, %v1877
        %v1910 = vmul.f32 %v1878, %v1870
        %v1911 = vmul.f32 %v1879, %v1871
        %v1912 = vmul.f32 %v1880, %v1872
        %v1913 = vmul.f32 %v1881, %v1873
        %v1914 = vmul.f32 %v1882, %v1874
        %v1915 = vmul.f32 %v1883, %v1875
        %v1916 = vmul.f32 %v1884, %v1876
        %v1917 = vmul.f32 %v1885, %v1877
        %v1918 = vadd.f32 %v1822, %v1878
        %v1919 = vadd.f32 %v1823, %v1879
        %v1920 = vadd.f32 %v1824, %v1880
        %v1921 = vadd.f32 %v1825, %v1881
        %v1922 = vadd.f32 %v1826, %v1882
        %v1923 = vadd.f32 %v1827, %v1883
        %v1924 = vadd.f32 %v1828, %v1884
        %v1925 = vadd.f32 %v1829, %v1885
        %v1926 = vadd.f32 %v1830, %v1886
        %v1927 = vadd.f32 %v1831, %v1887
        %v1928 = vadd.f32 %v1832, %v1888
        %v1929 = vadd.f32 %v1833, %v1889
        %v1930 = vadd.f32 %v1834, %v1890
        %v1931 = vadd.f32 %v1835, %v1891
        %v1932 = vadd.f32 %v1836, %v1892
        %v1933 = vadd.f32 %v1837, %v1893
        %v1934 = vadd.f32 %v1838, %v1894
        %v1935 = vadd.f32 %v1839, %v1895
        %v1936 = vadd.f32 %v1840, %v1896
        %v1937 = vadd.f32 %v1841, %v1897
        %v1938 = vadd.f32 %v1842, %v1898
        %v1939 = vadd.f32 %v1843, %v1899
        %v1940 = vadd.f32 %v1844, %v1900
        %v1941 = vadd.f32 %v1845, %v1901
        %v1942 = vadd.f32 %v1846, %v1902
        %v1943 = vadd.f32 %v1847, %v1903
        %v1944 = vadd.f32 %v1848, %v1904
        %v1945 = vadd.f32 %v1849, %v1905
        %v1946 = vadd.f32 %v1850, %v1906
        %v1947 = vadd.f32 %v1851, %v1907
        %v1948 = vadd.f32 %v1852, %v1908
        %v1949 = vadd.f32 %v1853, %v1909
        %v1950 = vadd.f32 %v1854, %v1910
        %v1951 = vadd.f32 %v1855, %v1911
        %v1952 = vadd.f32 %v1856, %v1912
        %v1953 = vadd.f32 %v1857, %v1913
        %v1954 = vadd.f32 %v1858, %v1914
        %v1955 = vadd.f32 %v1859, %v1915
        %v1956 = vadd.f32 %v1860, %v1916
        %v1957 = vadd.f32 %v1861, %v1917
        %v1958 = vmul.f32 %v1918, 0.2920817
        %v1959 = vmul.f32 %v1919, 0.2920817
        %v1960 = vmul.f32 %v1920, 0.2920817
        %v1961 = vmul.f32 %v1921, 0.2920817
        %v1962 = vmul.f32 %v1922, 0.2920817
        %v1963 = vmul.f32 %v1923, 0.2920817
        %v1964 = vmul.f32 %v1924, 0.2920817
        %v1965 = vmul.f32 %v1925, 0.2920817
        %1974 = vrot.lane.b32.xlu0 %v1918, 126
        %v1975 = vpop.permute.xlu0 %1974
        %1976 = vrot.lane.b32.xlu0 %v1919, 126
        %v1977 = vpop.permute.xlu0 %1976
        %1978 = vrot.lane.b32.xlu0 %v1920, 126
        %v1979 = vpop.permute.xlu0 %1978
        %1980 = vrot.lane.b32.xlu0 %v1921, 126
        %v1981 = vpop.permute.xlu0 %1980
        %1982 = vrot.lane.b32.xlu0 %v1922, 126
        %v1983 = vpop.permute.xlu0 %1982
        %1984 = vrot.lane.b32.xlu0 %v1923, 126
        %v1985 = vpop.permute.xlu0 %1984
        %1986 = vrot.lane.b32.xlu0 %v1924, 126
        %v1987 = vpop.permute.xlu0 %1986
        %1988 = vrot.lane.b32.xlu0 %v1925, 126
        %v1989 = vpop.permute.xlu0 %1988
        %v1998 = vadd.f32 %v1918, %v1975
        %v1999 = vadd.f32 %v1919, %v1977
        %v2000 = vadd.f32 %v1920, %v1979
        %v2001 = vadd.f32 %v1921, %v1981
        %v2002 = vadd.f32 %v1922, %v1983
        %v2003 = vadd.f32 %v1923, %v1985
        %v2004 = vadd.f32 %v1924, %v1987
        %v2005 = vadd.f32 %v1925, %v1989
        %v2006 = vmul.f32 %v1998, 0.23388076
        %v2007 = vmul.f32 %v1999, 0.23388076
        %v2008 = vmul.f32 %v2000, 0.23388076
        %v2009 = vmul.f32 %v2001, 0.23388076
        %v2010 = vmul.f32 %v2002, 0.23388076
        %v2011 = vmul.f32 %v2003, 0.23388076
        %v2012 = vmul.f32 %v2004, 0.23388076
        %v2013 = vmul.f32 %v2005, 0.23388076
        %2022 = vrot.lane.b32.xlu0 %v2006, 1
        %v2023 = vpop.permute.xlu0 %2022
        %2024 = vrot.lane.b32.xlu0 %v2007, 1
        %v2025 = vpop.permute.xlu0 %2024
        %2026 = vrot.lane.b32.xlu0 %v2008, 1
        %v2027 = vpop.permute.xlu0 %2026
        %2028 = vrot.lane.b32.xlu0 %v2009, 1
        %v2029 = vpop.permute.xlu0 %2028
        %2030 = vrot.lane.b32.xlu0 %v2010, 1
        %v2031 = vpop.permute.xlu0 %2030
        %2032 = vrot.lane.b32.xlu0 %v2011, 1
        %v2033 = vpop.permute.xlu0 %2032
        %2034 = vrot.lane.b32.xlu0 %v2012, 1
        %v2035 = vpop.permute.xlu0 %2034
        %2036 = vrot.lane.b32.xlu0 %v2013, 1
        %v2037 = vpop.permute.xlu0 %2036
        %v2046 = vadd.f32 %v1958, %v2023
        %v2047 = vadd.f32 %v1959, %v2025
        %v2048 = vadd.f32 %v1960, %v2027
        %v2049 = vadd.f32 %v1961, %v2029
        %v2050 = vadd.f32 %v1962, %v2031
        %v2051 = vadd.f32 %v1963, %v2033
        %v2052 = vadd.f32 %v1964, %v2035
        %v2053 = vadd.f32 %v1965, %v2037
        %2054 = vrot.lane.b32.xlu0 %v1918, 124
        %v2055 = vpop.permute.xlu0 %2054
        %2056 = vrot.lane.b32.xlu0 %v1919, 124
        %v2057 = vpop.permute.xlu0 %2056
        %2058 = vrot.lane.b32.xlu0 %v1920, 124
        %v2059 = vpop.permute.xlu0 %2058
        %2060 = vrot.lane.b32.xlu0 %v1921, 124
        %v2061 = vpop.permute.xlu0 %2060
        %2062 = vrot.lane.b32.xlu0 %v1922, 124
        %v2063 = vpop.permute.xlu0 %2062
        %2064 = vrot.lane.b32.xlu0 %v1923, 124
        %v2065 = vpop.permute.xlu0 %2064
        %2066 = vrot.lane.b32.xlu0 %v1924, 124
        %v2067 = vpop.permute.xlu0 %2066
        %2068 = vrot.lane.b32.xlu0 %v1925, 124
        %v2069 = vpop.permute.xlu0 %2068
        %v2078 = vadd.f32 %v1918, %v2055
        %v2079 = vadd.f32 %v1919, %v2057
        %v2080 = vadd.f32 %v1920, %v2059
        %v2081 = vadd.f32 %v1921, %v2061
        %v2082 = vadd.f32 %v1922, %v2063
        %v2083 = vadd.f32 %v1923, %v2065
        %v2084 = vadd.f32 %v1924, %v2067
        %v2085 = vadd.f32 %v1925, %v2069
        %v2086 = vmul.f32 %v2078, 0.120078385
        %v2087 = vmul.f32 %v2079, 0.120078385
        %v2088 = vmul.f32 %v2080, 0.120078385
        %v2089 = vmul.f32 %v2081, 0.120078385
        %v2090 = vmul.f32 %v2082, 0.120078385
        %v2091 = vmul.f32 %v2083, 0.120078385
        %v2092 = vmul.f32 %v2084, 0.120078385
        %v2093 = vmul.f32 %v2085, 0.120078385
        %2102 = vrot.lane.b32.xlu0 %v2086, 2
        %v2103 = vpop.permute.xlu0 %2102
        %2104 = vrot.lane.b32.xlu0 %v2087, 2
        %v2105 = vpop.permute.xlu0 %2104
        %2106 = vrot.lane.b32.xlu0 %v2088, 2
        %v2107 = vpop.permute.xlu0 %2106
        %2108 = vrot.lane.b32.xlu0 %v2089, 2
        %v2109 = vpop.permute.xlu0 %2108
        %2110 = vrot.lane.b32.xlu0 %v2090, 2
        %v2111 = vpop.permute.xlu0 %2110
        %2112 = vrot.lane.b32.xlu0 %v2091, 2
        %v2113 = vpop.permute.xlu0 %2112
        %2114 = vrot.lane.b32.xlu0 %v2092, 2
        %v2115 = vpop.permute.xlu0 %2114
        %2116 = vrot.lane.b32.xlu0 %v2093, 2
        %v2117 = vpop.permute.xlu0 %2116
        %v2126 = vadd.f32 %v2046, %v2103
        %v2127 = vadd.f32 %v2047, %v2105
        %v2128 = vadd.f32 %v2048, %v2107
        %v2129 = vadd.f32 %v2049, %v2109
        %v2130 = vadd.f32 %v2050, %v2111
        %v2131 = vadd.f32 %v2051, %v2113
        %v2132 = vadd.f32 %v2052, %v2115
        %v2133 = vadd.f32 %v2053, %v2117
        %v2134 = vmul.f32 %v1926, 0.2920817
        %v2135 = vmul.f32 %v1927, 0.2920817
        %v2136 = vmul.f32 %v1928, 0.2920817
        %v2137 = vmul.f32 %v1929, 0.2920817
        %v2138 = vmul.f32 %v1930, 0.2920817
        %v2139 = vmul.f32 %v1931, 0.2920817
        %v2140 = vmul.f32 %v1932, 0.2920817
        %v2141 = vmul.f32 %v1933, 0.2920817
        %2150 = vrot.lane.b32.xlu0 %v1926, 126
        %v2151 = vpop.permute.xlu0 %2150
        %2152 = vrot.lane.b32.xlu0 %v1927, 126
        %v2153 = vpop.permute.xlu0 %2152
        %2154 = vrot.lane.b32.xlu0 %v1928, 126
        %v2155 = vpop.permute.xlu0 %2154
        %2156 = vrot.lane.b32.xlu0 %v1929, 126
        %v2157 = vpop.permute.xlu0 %2156
        %2158 = vrot.lane.b32.xlu0 %v1930, 126
        %v2159 = vpop.permute.xlu0 %2158
        %2160 = vrot.lane.b32.xlu0 %v1931, 126
        %v2161 = vpop.permute.xlu0 %2160
        %2162 = vrot.lane.b32.xlu0 %v1932, 126
        %v2163 = vpop.permute.xlu0 %2162
        %2164 = vrot.lane.b32.xlu0 %v1933, 126
        %v2165 = vpop.permute.xlu0 %2164
        %v2174 = vadd.f32 %v1926, %v2151
        %v2175 = vadd.f32 %v1927, %v2153
        %v2176 = vadd.f32 %v1928, %v2155
        %v2177 = vadd.f32 %v1929, %v2157
        %v2178 = vadd.f32 %v1930, %v2159
        %v2179 = vadd.f32 %v1931, %v2161
        %v2180 = vadd.f32 %v1932, %v2163
        %v2181 = vadd.f32 %v1933, %v2165
        %v2182 = vmul.f32 %v2174, 0.23388076
        %v2183 = vmul.f32 %v2175, 0.23388076
        %v2184 = vmul.f32 %v2176, 0.23388076
        %v2185 = vmul.f32 %v2177, 0.23388076
        %v2186 = vmul.f32 %v2178, 0.23388076
        %v2187 = vmul.f32 %v2179, 0.23388076
        %v2188 = vmul.f32 %v2180, 0.23388076
        %v2189 = vmul.f32 %v2181, 0.23388076
        %2198 = vrot.lane.b32.xlu0 %v2182, 1
        %v2199 = vpop.permute.xlu0 %2198
        %2200 = vrot.lane.b32.xlu0 %v2183, 1
        %v2201 = vpop.permute.xlu0 %2200
        %2202 = vrot.lane.b32.xlu0 %v2184, 1
        %v2203 = vpop.permute.xlu0 %2202
        %2204 = vrot.lane.b32.xlu0 %v2185, 1
        %v2205 = vpop.permute.xlu0 %2204
        %2206 = vrot.lane.b32.xlu0 %v2186, 1
        %v2207 = vpop.permute.xlu0 %2206
        %2208 = vrot.lane.b32.xlu0 %v2187, 1
        %v2209 = vpop.permute.xlu0 %2208
        %2210 = vrot.lane.b32.xlu0 %v2188, 1
        %v2211 = vpop.permute.xlu0 %2210
        %2212 = vrot.lane.b32.xlu0 %v2189, 1
        %v2213 = vpop.permute.xlu0 %2212
        %v2222 = vadd.f32 %v2134, %v2199
        %v2223 = vadd.f32 %v2135, %v2201
        %v2224 = vadd.f32 %v2136, %v2203
        %v2225 = vadd.f32 %v2137, %v2205
        %v2226 = vadd.f32 %v2138, %v2207
        %v2227 = vadd.f32 %v2139, %v2209
        %v2228 = vadd.f32 %v2140, %v2211
        %v2229 = vadd.f32 %v2141, %v2213
        %2230 = vrot.lane.b32.xlu0 %v1926, 124
        %v2231 = vpop.permute.xlu0 %2230
        %2232 = vrot.lane.b32.xlu0 %v1927, 124
        %v2233 = vpop.permute.xlu0 %2232
        %2234 = vrot.lane.b32.xlu0 %v1928, 124
        %v2235 = vpop.permute.xlu0 %2234
        %2236 = vrot.lane.b32.xlu0 %v1929, 124
        %v2237 = vpop.permute.xlu0 %2236
        %2238 = vrot.lane.b32.xlu0 %v1930, 124
        %v2239 = vpop.permute.xlu0 %2238
        %2240 = vrot.lane.b32.xlu0 %v1931, 124
        %v2241 = vpop.permute.xlu0 %2240
        %2242 = vrot.lane.b32.xlu0 %v1932, 124
        %v2243 = vpop.permute.xlu0 %2242
        %2244 = vrot.lane.b32.xlu0 %v1933, 124
        %v2245 = vpop.permute.xlu0 %2244
        %v2254 = vadd.f32 %v1926, %v2231
        %v2255 = vadd.f32 %v1927, %v2233
        %v2256 = vadd.f32 %v1928, %v2235
        %v2257 = vadd.f32 %v1929, %v2237
        %v2258 = vadd.f32 %v1930, %v2239
        %v2259 = vadd.f32 %v1931, %v2241
        %v2260 = vadd.f32 %v1932, %v2243
        %v2261 = vadd.f32 %v1933, %v2245
        %v2262 = vmul.f32 %v2254, 0.120078385
        %v2263 = vmul.f32 %v2255, 0.120078385
        %v2264 = vmul.f32 %v2256, 0.120078385
        %v2265 = vmul.f32 %v2257, 0.120078385
        %v2266 = vmul.f32 %v2258, 0.120078385
        %v2267 = vmul.f32 %v2259, 0.120078385
        %v2268 = vmul.f32 %v2260, 0.120078385
        %v2269 = vmul.f32 %v2261, 0.120078385
        %2278 = vrot.lane.b32.xlu0 %v2262, 2
        %v2279 = vpop.permute.xlu0 %2278
        %2280 = vrot.lane.b32.xlu0 %v2263, 2
        %v2281 = vpop.permute.xlu0 %2280
        %2282 = vrot.lane.b32.xlu0 %v2264, 2
        %v2283 = vpop.permute.xlu0 %2282
        %2284 = vrot.lane.b32.xlu0 %v2265, 2
        %v2285 = vpop.permute.xlu0 %2284
        %2286 = vrot.lane.b32.xlu0 %v2266, 2
        %v2287 = vpop.permute.xlu0 %2286
        %2288 = vrot.lane.b32.xlu0 %v2267, 2
        %v2289 = vpop.permute.xlu0 %2288
        %2290 = vrot.lane.b32.xlu0 %v2268, 2
        %v2291 = vpop.permute.xlu0 %2290
        %2292 = vrot.lane.b32.xlu0 %v2269, 2
        %v2293 = vpop.permute.xlu0 %2292
        %v2302 = vadd.f32 %v2222, %v2279
        %v2303 = vadd.f32 %v2223, %v2281
        %v2304 = vadd.f32 %v2224, %v2283
        %v2305 = vadd.f32 %v2225, %v2285
        %v2306 = vadd.f32 %v2226, %v2287
        %v2307 = vadd.f32 %v2227, %v2289
        %v2308 = vadd.f32 %v2228, %v2291
        %v2309 = vadd.f32 %v2229, %v2293
        %v2310 = vmul.f32 %v1934, 0.2920817
        %v2311 = vmul.f32 %v1935, 0.2920817
        %v2312 = vmul.f32 %v1936, 0.2920817
        %v2313 = vmul.f32 %v1937, 0.2920817
        %v2314 = vmul.f32 %v1938, 0.2920817
        %v2315 = vmul.f32 %v1939, 0.2920817
        %v2316 = vmul.f32 %v1940, 0.2920817
        %v2317 = vmul.f32 %v1941, 0.2920817
        %2326 = vrot.lane.b32.xlu0 %v1934, 126
        %v2327 = vpop.permute.xlu0 %2326
        %2328 = vrot.lane.b32.xlu0 %v1935, 126
        %v2329 = vpop.permute.xlu0 %2328
        %2330 = vrot.lane.b32.xlu0 %v1936, 126
        %v2331 = vpop.permute.xlu0 %2330
        %2332 = vrot.lane.b32.xlu0 %v1937, 126
        %v2333 = vpop.permute.xlu0 %2332
        %2334 = vrot.lane.b32.xlu0 %v1938, 126
        %v2335 = vpop.permute.xlu0 %2334
        %2336 = vrot.lane.b32.xlu0 %v1939, 126
        %v2337 = vpop.permute.xlu0 %2336
        %2338 = vrot.lane.b32.xlu0 %v1940, 126
        %v2339 = vpop.permute.xlu0 %2338
        %2340 = vrot.lane.b32.xlu0 %v1941, 126
        %v2341 = vpop.permute.xlu0 %2340
        %v2350 = vadd.f32 %v1934, %v2327
        %v2351 = vadd.f32 %v1935, %v2329
        %v2352 = vadd.f32 %v1936, %v2331
        %v2353 = vadd.f32 %v1937, %v2333
        %v2354 = vadd.f32 %v1938, %v2335
        %v2355 = vadd.f32 %v1939, %v2337
        %v2356 = vadd.f32 %v1940, %v2339
        %v2357 = vadd.f32 %v1941, %v2341
        %v2358 = vmul.f32 %v2350, 0.23388076
        %v2359 = vmul.f32 %v2351, 0.23388076
        %v2360 = vmul.f32 %v2352, 0.23388076
        %v2361 = vmul.f32 %v2353, 0.23388076
        %v2362 = vmul.f32 %v2354, 0.23388076
        %v2363 = vmul.f32 %v2355, 0.23388076
        %v2364 = vmul.f32 %v2356, 0.23388076
        %v2365 = vmul.f32 %v2357, 0.23388076
        %2374 = vrot.lane.b32.xlu0 %v2358, 1
        %v2375 = vpop.permute.xlu0 %2374
        %2376 = vrot.lane.b32.xlu0 %v2359, 1
        %v2377 = vpop.permute.xlu0 %2376
        %2378 = vrot.lane.b32.xlu0 %v2360, 1
        %v2379 = vpop.permute.xlu0 %2378
        %2380 = vrot.lane.b32.xlu0 %v2361, 1
        %v2381 = vpop.permute.xlu0 %2380
        %2382 = vrot.lane.b32.xlu0 %v2362, 1
        %v2383 = vpop.permute.xlu0 %2382
        %2384 = vrot.lane.b32.xlu0 %v2363, 1
        %v2385 = vpop.permute.xlu0 %2384
        %2386 = vrot.lane.b32.xlu0 %v2364, 1
        %v2387 = vpop.permute.xlu0 %2386
        %2388 = vrot.lane.b32.xlu0 %v2365, 1
        %v2389 = vpop.permute.xlu0 %2388
        %v2398 = vadd.f32 %v2310, %v2375
        %v2399 = vadd.f32 %v2311, %v2377
        %v2400 = vadd.f32 %v2312, %v2379
        %v2401 = vadd.f32 %v2313, %v2381
        %v2402 = vadd.f32 %v2314, %v2383
        %v2403 = vadd.f32 %v2315, %v2385
        %v2404 = vadd.f32 %v2316, %v2387
        %v2405 = vadd.f32 %v2317, %v2389
        %2406 = vrot.lane.b32.xlu0 %v1934, 124
        %v2407 = vpop.permute.xlu0 %2406
        %2408 = vrot.lane.b32.xlu0 %v1935, 124
        %v2409 = vpop.permute.xlu0 %2408
        %2410 = vrot.lane.b32.xlu0 %v1936, 124
        %v2411 = vpop.permute.xlu0 %2410
        %2412 = vrot.lane.b32.xlu0 %v1937, 124
        %v2413 = vpop.permute.xlu0 %2412
        %2414 = vrot.lane.b32.xlu0 %v1938, 124
        %v2415 = vpop.permute.xlu0 %2414
        %2416 = vrot.lane.b32.xlu0 %v1939, 124
        %v2417 = vpop.permute.xlu0 %2416
        %2418 = vrot.lane.b32.xlu0 %v1940, 124
        %v2419 = vpop.permute.xlu0 %2418
        %2420 = vrot.lane.b32.xlu0 %v1941, 124
        %v2421 = vpop.permute.xlu0 %2420
        %v2430 = vadd.f32 %v1934, %v2407
        %v2431 = vadd.f32 %v1935, %v2409
        %v2432 = vadd.f32 %v1936, %v2411
        %v2433 = vadd.f32 %v1937, %v2413
        %v2434 = vadd.f32 %v1938, %v2415
        %v2435 = vadd.f32 %v1939, %v2417
        %v2436 = vadd.f32 %v1940, %v2419
        %v2437 = vadd.f32 %v1941, %v2421
        %v2438 = vmul.f32 %v2430, 0.120078385
        %v2439 = vmul.f32 %v2431, 0.120078385
        %v2440 = vmul.f32 %v2432, 0.120078385
        %v2441 = vmul.f32 %v2433, 0.120078385
        %v2442 = vmul.f32 %v2434, 0.120078385
        %v2443 = vmul.f32 %v2435, 0.120078385
        %v2444 = vmul.f32 %v2436, 0.120078385
        %v2445 = vmul.f32 %v2437, 0.120078385
        %2454 = vrot.lane.b32.xlu0 %v2438, 2
        %v2455 = vpop.permute.xlu0 %2454
        %2456 = vrot.lane.b32.xlu0 %v2439, 2
        %v2457 = vpop.permute.xlu0 %2456
        %2458 = vrot.lane.b32.xlu0 %v2440, 2
        %v2459 = vpop.permute.xlu0 %2458
        %2460 = vrot.lane.b32.xlu0 %v2441, 2
        %v2461 = vpop.permute.xlu0 %2460
        %2462 = vrot.lane.b32.xlu0 %v2442, 2
        %v2463 = vpop.permute.xlu0 %2462
        %2464 = vrot.lane.b32.xlu0 %v2443, 2
        %v2465 = vpop.permute.xlu0 %2464
        %2466 = vrot.lane.b32.xlu0 %v2444, 2
        %v2467 = vpop.permute.xlu0 %2466
        %2468 = vrot.lane.b32.xlu0 %v2445, 2
        %v2469 = vpop.permute.xlu0 %2468
        %v2478 = vadd.f32 %v2398, %v2455
        %v2479 = vadd.f32 %v2399, %v2457
        %v2480 = vadd.f32 %v2400, %v2459
        %v2481 = vadd.f32 %v2401, %v2461
        %v2482 = vadd.f32 %v2402, %v2463
        %v2483 = vadd.f32 %v2403, %v2465
        %v2484 = vadd.f32 %v2404, %v2467
        %v2485 = vadd.f32 %v2405, %v2469
        %v2486 = vmul.f32 %v1942, 0.2920817
        %v2487 = vmul.f32 %v1943, 0.2920817
        %v2488 = vmul.f32 %v1944, 0.2920817
        %v2489 = vmul.f32 %v1945, 0.2920817
        %v2490 = vmul.f32 %v1946, 0.2920817
        %v2491 = vmul.f32 %v1947, 0.2920817
        %v2492 = vmul.f32 %v1948, 0.2920817
        %v2493 = vmul.f32 %v1949, 0.2920817
        %2502 = vrot.lane.b32.xlu0 %v1942, 126
        %v2503 = vpop.permute.xlu0 %2502
        %2504 = vrot.lane.b32.xlu0 %v1943, 126
        %v2505 = vpop.permute.xlu0 %2504
        %2506 = vrot.lane.b32.xlu0 %v1944, 126
        %v2507 = vpop.permute.xlu0 %2506
        %2508 = vrot.lane.b32.xlu0 %v1945, 126
        %v2509 = vpop.permute.xlu0 %2508
        %2510 = vrot.lane.b32.xlu0 %v1946, 126
        %v2511 = vpop.permute.xlu0 %2510
        %2512 = vrot.lane.b32.xlu0 %v1947, 126
        %v2513 = vpop.permute.xlu0 %2512
        %2514 = vrot.lane.b32.xlu0 %v1948, 126
        %v2515 = vpop.permute.xlu0 %2514
        %2516 = vrot.lane.b32.xlu0 %v1949, 126
        %v2517 = vpop.permute.xlu0 %2516
        %v2526 = vadd.f32 %v1942, %v2503
        %v2527 = vadd.f32 %v1943, %v2505
        %v2528 = vadd.f32 %v1944, %v2507
        %v2529 = vadd.f32 %v1945, %v2509
        %v2530 = vadd.f32 %v1946, %v2511
        %v2531 = vadd.f32 %v1947, %v2513
        %v2532 = vadd.f32 %v1948, %v2515
        %v2533 = vadd.f32 %v1949, %v2517
        %v2534 = vmul.f32 %v2526, 0.23388076
        %v2535 = vmul.f32 %v2527, 0.23388076
        %v2536 = vmul.f32 %v2528, 0.23388076
        %v2537 = vmul.f32 %v2529, 0.23388076
        %v2538 = vmul.f32 %v2530, 0.23388076
        %v2539 = vmul.f32 %v2531, 0.23388076
        %v2540 = vmul.f32 %v2532, 0.23388076
        %v2541 = vmul.f32 %v2533, 0.23388076
        %2550 = vrot.lane.b32.xlu0 %v2534, 1
        %v2551 = vpop.permute.xlu0 %2550
        %2552 = vrot.lane.b32.xlu0 %v2535, 1
        %v2553 = vpop.permute.xlu0 %2552
        %2554 = vrot.lane.b32.xlu0 %v2536, 1
        %v2555 = vpop.permute.xlu0 %2554
        %2556 = vrot.lane.b32.xlu0 %v2537, 1
        %v2557 = vpop.permute.xlu0 %2556
        %2558 = vrot.lane.b32.xlu0 %v2538, 1
        %v2559 = vpop.permute.xlu0 %2558
        %2560 = vrot.lane.b32.xlu0 %v2539, 1
        %v2561 = vpop.permute.xlu0 %2560
        %2562 = vrot.lane.b32.xlu0 %v2540, 1
        %v2563 = vpop.permute.xlu0 %2562
        %2564 = vrot.lane.b32.xlu0 %v2541, 1
        %v2565 = vpop.permute.xlu0 %2564
        %v2574 = vadd.f32 %v2486, %v2551
        %v2575 = vadd.f32 %v2487, %v2553
        %v2576 = vadd.f32 %v2488, %v2555
        %v2577 = vadd.f32 %v2489, %v2557
        %v2578 = vadd.f32 %v2490, %v2559
        %v2579 = vadd.f32 %v2491, %v2561
        %v2580 = vadd.f32 %v2492, %v2563
        %v2581 = vadd.f32 %v2493, %v2565
        %2582 = vrot.lane.b32.xlu0 %v1942, 124
        %v2583 = vpop.permute.xlu0 %2582
        %2584 = vrot.lane.b32.xlu0 %v1943, 124
        %v2585 = vpop.permute.xlu0 %2584
        %2586 = vrot.lane.b32.xlu0 %v1944, 124
        %v2587 = vpop.permute.xlu0 %2586
        %2588 = vrot.lane.b32.xlu0 %v1945, 124
        %v2589 = vpop.permute.xlu0 %2588
        %2590 = vrot.lane.b32.xlu0 %v1946, 124
        %v2591 = vpop.permute.xlu0 %2590
        %2592 = vrot.lane.b32.xlu0 %v1947, 124
        %v2593 = vpop.permute.xlu0 %2592
        %2594 = vrot.lane.b32.xlu0 %v1948, 124
        %v2595 = vpop.permute.xlu0 %2594
        %2596 = vrot.lane.b32.xlu0 %v1949, 124
        %v2597 = vpop.permute.xlu0 %2596
        %v2606 = vadd.f32 %v1942, %v2583
        %v2607 = vadd.f32 %v1943, %v2585
        %v2608 = vadd.f32 %v1944, %v2587
        %v2609 = vadd.f32 %v1945, %v2589
        %v2610 = vadd.f32 %v1946, %v2591
        %v2611 = vadd.f32 %v1947, %v2593
        %v2612 = vadd.f32 %v1948, %v2595
        %v2613 = vadd.f32 %v1949, %v2597
        %v2614 = vmul.f32 %v2606, 0.120078385
        %v2615 = vmul.f32 %v2607, 0.120078385
        %v2616 = vmul.f32 %v2608, 0.120078385
        %v2617 = vmul.f32 %v2609, 0.120078385
        %v2618 = vmul.f32 %v2610, 0.120078385
        %v2619 = vmul.f32 %v2611, 0.120078385
        %v2620 = vmul.f32 %v2612, 0.120078385
        %v2621 = vmul.f32 %v2613, 0.120078385
        %2630 = vrot.lane.b32.xlu0 %v2614, 2
        %v2631 = vpop.permute.xlu0 %2630
        %2632 = vrot.lane.b32.xlu0 %v2615, 2
        %v2633 = vpop.permute.xlu0 %2632
        %2634 = vrot.lane.b32.xlu0 %v2616, 2
        %v2635 = vpop.permute.xlu0 %2634
        %2636 = vrot.lane.b32.xlu0 %v2617, 2
        %v2637 = vpop.permute.xlu0 %2636
        %2638 = vrot.lane.b32.xlu0 %v2618, 2
        %v2639 = vpop.permute.xlu0 %2638
        %2640 = vrot.lane.b32.xlu0 %v2619, 2
        %v2641 = vpop.permute.xlu0 %2640
        %2642 = vrot.lane.b32.xlu0 %v2620, 2
        %v2643 = vpop.permute.xlu0 %2642
        %2644 = vrot.lane.b32.xlu0 %v2621, 2
        %v2645 = vpop.permute.xlu0 %2644
        %v2654 = vadd.f32 %v2574, %v2631
        %v2655 = vadd.f32 %v2575, %v2633
        %v2656 = vadd.f32 %v2576, %v2635
        %v2657 = vadd.f32 %v2577, %v2637
        %v2658 = vadd.f32 %v2578, %v2639
        %v2659 = vadd.f32 %v2579, %v2641
        %v2660 = vadd.f32 %v2580, %v2643
        %v2661 = vadd.f32 %v2581, %v2645
        %v2662 = vmul.f32 %v1950, 0.2920817
        %v2663 = vmul.f32 %v1951, 0.2920817
        %v2664 = vmul.f32 %v1952, 0.2920817
        %v2665 = vmul.f32 %v1953, 0.2920817
        %v2666 = vmul.f32 %v1954, 0.2920817
        %v2667 = vmul.f32 %v1955, 0.2920817
        %v2668 = vmul.f32 %v1956, 0.2920817
        %v2669 = vmul.f32 %v1957, 0.2920817
        %2678 = vrot.lane.b32.xlu0 %v1950, 126
        %v2679 = vpop.permute.xlu0 %2678
        %2680 = vrot.lane.b32.xlu0 %v1951, 126
        %v2681 = vpop.permute.xlu0 %2680
        %2682 = vrot.lane.b32.xlu0 %v1952, 126
        %v2683 = vpop.permute.xlu0 %2682
        %2684 = vrot.lane.b32.xlu0 %v1953, 126
        %v2685 = vpop.permute.xlu0 %2684
        %2686 = vrot.lane.b32.xlu0 %v1954, 126
        %v2687 = vpop.permute.xlu0 %2686
        %2688 = vrot.lane.b32.xlu0 %v1955, 126
        %v2689 = vpop.permute.xlu0 %2688
        %2690 = vrot.lane.b32.xlu0 %v1956, 126
        %v2691 = vpop.permute.xlu0 %2690
        %2692 = vrot.lane.b32.xlu0 %v1957, 126
        %v2693 = vpop.permute.xlu0 %2692
        %v2702 = vadd.f32 %v1950, %v2679
        %v2703 = vadd.f32 %v1951, %v2681
        %v2704 = vadd.f32 %v1952, %v2683
        %v2705 = vadd.f32 %v1953, %v2685
        %v2706 = vadd.f32 %v1954, %v2687
        %v2707 = vadd.f32 %v1955, %v2689
        %v2708 = vadd.f32 %v1956, %v2691
        %v2709 = vadd.f32 %v1957, %v2693
        %v2710 = vmul.f32 %v2702, 0.23388076
        %v2711 = vmul.f32 %v2703, 0.23388076
        %v2712 = vmul.f32 %v2704, 0.23388076
        %v2713 = vmul.f32 %v2705, 0.23388076
        %v2714 = vmul.f32 %v2706, 0.23388076
        %v2715 = vmul.f32 %v2707, 0.23388076
        %v2716 = vmul.f32 %v2708, 0.23388076
        %v2717 = vmul.f32 %v2709, 0.23388076
        %2726 = vrot.lane.b32.xlu0 %v2710, 1
        %v2727 = vpop.permute.xlu0 %2726
        %2728 = vrot.lane.b32.xlu0 %v2711, 1
        %v2729 = vpop.permute.xlu0 %2728
        %2730 = vrot.lane.b32.xlu0 %v2712, 1
        %v2731 = vpop.permute.xlu0 %2730
        %2732 = vrot.lane.b32.xlu0 %v2713, 1
        %v2733 = vpop.permute.xlu0 %2732
        %2734 = vrot.lane.b32.xlu0 %v2714, 1
        %v2735 = vpop.permute.xlu0 %2734
        %2736 = vrot.lane.b32.xlu0 %v2715, 1
        %v2737 = vpop.permute.xlu0 %2736
        %2738 = vrot.lane.b32.xlu0 %v2716, 1
        %v2739 = vpop.permute.xlu0 %2738
        %2740 = vrot.lane.b32.xlu0 %v2717, 1
        %v2741 = vpop.permute.xlu0 %2740
        %v2750 = vadd.f32 %v2662, %v2727
        %v2751 = vadd.f32 %v2663, %v2729
        %v2752 = vadd.f32 %v2664, %v2731
        %v2753 = vadd.f32 %v2665, %v2733
        %v2754 = vadd.f32 %v2666, %v2735
        %v2755 = vadd.f32 %v2667, %v2737
        %v2756 = vadd.f32 %v2668, %v2739
        %v2757 = vadd.f32 %v2669, %v2741
        %2758 = vrot.lane.b32.xlu0 %v1950, 124
        %v2759 = vpop.permute.xlu0 %2758
        %2760 = vrot.lane.b32.xlu0 %v1951, 124
        %v2761 = vpop.permute.xlu0 %2760
        %2762 = vrot.lane.b32.xlu0 %v1952, 124
        %v2763 = vpop.permute.xlu0 %2762
        %2764 = vrot.lane.b32.xlu0 %v1953, 124
        %v2765 = vpop.permute.xlu0 %2764
        %2766 = vrot.lane.b32.xlu0 %v1954, 124
        %v2767 = vpop.permute.xlu0 %2766
        %2768 = vrot.lane.b32.xlu0 %v1955, 124
        %v2769 = vpop.permute.xlu0 %2768
        %2770 = vrot.lane.b32.xlu0 %v1956, 124
        %v2771 = vpop.permute.xlu0 %2770
        %2772 = vrot.lane.b32.xlu0 %v1957, 124
        %v2773 = vpop.permute.xlu0 %2772
        %v2782 = vadd.f32 %v1950, %v2759
        %v2783 = vadd.f32 %v1951, %v2761
        %v2784 = vadd.f32 %v1952, %v2763
        %v2785 = vadd.f32 %v1953, %v2765
        %v2786 = vadd.f32 %v1954, %v2767
        %v2787 = vadd.f32 %v1955, %v2769
        %v2788 = vadd.f32 %v1956, %v2771
        %v2789 = vadd.f32 %v1957, %v2773
        %v2790 = vmul.f32 %v2782, 0.120078385
        %v2791 = vmul.f32 %v2783, 0.120078385
        %v2792 = vmul.f32 %v2784, 0.120078385
        %v2793 = vmul.f32 %v2785, 0.120078385
        %v2794 = vmul.f32 %v2786, 0.120078385
        %v2795 = vmul.f32 %v2787, 0.120078385
        %v2796 = vmul.f32 %v2788, 0.120078385
        %v2797 = vmul.f32 %v2789, 0.120078385
        %2806 = vrot.lane.b32.xlu0 %v2790, 2
        %v2807 = vpop.permute.xlu0 %2806
        %2808 = vrot.lane.b32.xlu0 %v2791, 2
        %v2809 = vpop.permute.xlu0 %2808
        %2810 = vrot.lane.b32.xlu0 %v2792, 2
        %v2811 = vpop.permute.xlu0 %2810
        %2812 = vrot.lane.b32.xlu0 %v2793, 2
        %v2813 = vpop.permute.xlu0 %2812
        %2814 = vrot.lane.b32.xlu0 %v2794, 2
        %v2815 = vpop.permute.xlu0 %2814
        %2816 = vrot.lane.b32.xlu0 %v2795, 2
        %v2817 = vpop.permute.xlu0 %2816
        %2818 = vrot.lane.b32.xlu0 %v2796, 2
        %v2819 = vpop.permute.xlu0 %2818
        %2820 = vrot.lane.b32.xlu0 %v2797, 2
        %v2821 = vpop.permute.xlu0 %2820
        %v2830 = vadd.f32 %v2750, %v2807
        %v2831 = vadd.f32 %v2751, %v2809
        %v2832 = vadd.f32 %v2752, %v2811
        %v2833 = vadd.f32 %v2753, %v2813
        %v2834 = vadd.f32 %v2754, %v2815
        %v2835 = vadd.f32 %v2755, %v2817
        %v2836 = vadd.f32 %v2756, %v2819
        %v2837 = vadd.f32 %v2757, %v2821
        %v2838 = vmul.f32 %v2126, %v2126
        %v2839 = vmul.f32 %v2127, %v2127
        %v2840 = vmul.f32 %v2128, %v2128
        %v2841 = vmul.f32 %v2129, %v2129
        %v2842 = vmul.f32 %v2130, %v2130
        %v2843 = vmul.f32 %v2131, %v2131
        %v2844 = vmul.f32 %v2132, %v2132
        %v2845 = vmul.f32 %v2133, %v2133
        %v2846 = vmul.f32 %v2302, %v2302
        %v2847 = vmul.f32 %v2303, %v2303
        %v2848 = vmul.f32 %v2304, %v2304
        %v2849 = vmul.f32 %v2305, %v2305
        %v2850 = vmul.f32 %v2306, %v2306
        %v2851 = vmul.f32 %v2307, %v2307
        %v2852 = vmul.f32 %v2308, %v2308
        %v2853 = vmul.f32 %v2309, %v2309
        %v2854 = vmul.f32 %v2126, %v2302
        %v2855 = vmul.f32 %v2127, %v2303
        %v2856 = vmul.f32 %v2128, %v2304
        %v2857 = vmul.f32 %v2129, %v2305
        %v2858 = vmul.f32 %v2130, %v2306
        %v2859 = vmul.f32 %v2131, %v2307
        %v2860 = vmul.f32 %v2132, %v2308
        %v2861 = vmul.f32 %v2133, %v2309
        %v2862 = vsub.f32 %v2478, %v2838
        %v2863 = vsub.f32 %v2479, %v2839
        %v2864 = vsub.f32 %v2480, %v2840
        %v2865 = vsub.f32 %v2481, %v2841
        %v2866 = vsub.f32 %v2482, %v2842
        %v2867 = vsub.f32 %v2483, %v2843
        %v2868 = vsub.f32 %v2484, %v2844
        %v2869 = vsub.f32 %v2485, %v2845
        %v2870 = vsub.f32 %v2654, %v2846
        %v2871 = vsub.f32 %v2655, %v2847
        %v2872 = vsub.f32 %v2656, %v2848
        %v2873 = vsub.f32 %v2657, %v2849
        %v2874 = vsub.f32 %v2658, %v2850
        %v2875 = vsub.f32 %v2659, %v2851
        %v2876 = vsub.f32 %v2660, %v2852
        %v2877 = vsub.f32 %v2661, %v2853
        %v2878 = vsub.f32 %v2830, %v2854
        %v2879 = vsub.f32 %v2831, %v2855
        %v2880 = vsub.f32 %v2832, %v2856
        %v2881 = vsub.f32 %v2833, %v2857
        %v2882 = vsub.f32 %v2834, %v2858
        %v2883 = vsub.f32 %v2835, %v2859
        %v2884 = vsub.f32 %v2836, %v2860
        %v2885 = vsub.f32 %v2837, %v2861
        %v2886 = vmul.f32 %v2854, 2.0
        %v2887 = vmul.f32 %v2855, 2.0
        %v2888 = vmul.f32 %v2856, 2.0
        %v2889 = vmul.f32 %v2857, 2.0
        %v2890 = vmul.f32 %v2858, 2.0
        %v2891 = vmul.f32 %v2859, 2.0
        %v2892 = vmul.f32 %v2860, 2.0
        %v2893 = vmul.f32 %v2861, 2.0
        %v2894 = vadd.f32 %v2886, 0.0001
        %v2895 = vadd.f32 %v2887, 0.0001
        %v2896 = vadd.f32 %v2888, 0.0001
        %v2897 = vadd.f32 %v2889, 0.0001
        %v2898 = vadd.f32 %v2890, 0.0001
        %v2899 = vadd.f32 %v2891, 0.0001
        %v2900 = vadd.f32 %v2892, 0.0001
        %v2901 = vadd.f32 %v2893, 0.0001
        %v2902 = vmul.f32 %v2878, 2.0
        %v2903 = vmul.f32 %v2879, 2.0
        %v2904 = vmul.f32 %v2880, 2.0
        %v2905 = vmul.f32 %v2881, 2.0
        %v2906 = vmul.f32 %v2882, 2.0
        %v2907 = vmul.f32 %v2883, 2.0
        %v2908 = vmul.f32 %v2884, 2.0
        %v2909 = vmul.f32 %v2885, 2.0
        %v2910 = vadd.f32 %v2902, 0.0009
        %v2911 = vadd.f32 %v2903, 0.0009
        %v2912 = vadd.f32 %v2904, 0.0009
        %v2913 = vadd.f32 %v2905, 0.0009
        %v2914 = vadd.f32 %v2906, 0.0009
        %v2915 = vadd.f32 %v2907, 0.0009
        %v2916 = vadd.f32 %v2908, 0.0009
        %v2917 = vadd.f32 %v2909, 0.0009
        %v2918 = vmul.f32 %v2894, %v2910
        %v2919 = vmul.f32 %v2895, %v2911
        %v2920 = vmul.f32 %v2896, %v2912
        %v2921 = vmul.f32 %v2897, %v2913
        %v2922 = vmul.f32 %v2898, %v2914
        %v2923 = vmul.f32 %v2899, %v2915
        %v2924 = vmul.f32 %v2900, %v2916
        %v2925 = vmul.f32 %v2901, %v2917
        %v2926 = vadd.f32 %v2838, %v2846
        %v2927 = vadd.f32 %v2839, %v2847
        %v2928 = vadd.f32 %v2840, %v2848
        %v2929 = vadd.f32 %v2841, %v2849
        %v2930 = vadd.f32 %v2842, %v2850
        %v2931 = vadd.f32 %v2843, %v2851
        %v2932 = vadd.f32 %v2844, %v2852
        %v2933 = vadd.f32 %v2845, %v2853
        %v2934 = vadd.f32 %v2926, 0.0001
        %v2935 = vadd.f32 %v2927, 0.0001
        %v2936 = vadd.f32 %v2928, 0.0001
        %v2937 = vadd.f32 %v2929, 0.0001
        %v2938 = vadd.f32 %v2930, 0.0001
        %v2939 = vadd.f32 %v2931, 0.0001
        %v2940 = vadd.f32 %v2932, 0.0001
        %v2941 = vadd.f32 %v2933, 0.0001
        %v2942 = vadd.f32 %v2862, %v2870
        %v2943 = vadd.f32 %v2863, %v2871
        %v2944 = vadd.f32 %v2864, %v2872
        %v2945 = vadd.f32 %v2865, %v2873
        %v2946 = vadd.f32 %v2866, %v2874
        %v2947 = vadd.f32 %v2867, %v2875
        %v2948 = vadd.f32 %v2868, %v2876
        %v2949 = vadd.f32 %v2869, %v2877
        %v2950 = vadd.f32 %v2942, 0.0009
        %v2951 = vadd.f32 %v2943, 0.0009
        %v2952 = vadd.f32 %v2944, 0.0009
        %v2953 = vadd.f32 %v2945, 0.0009
        %v2954 = vadd.f32 %v2946, 0.0009
        %v2955 = vadd.f32 %v2947, 0.0009
        %v2956 = vadd.f32 %v2948, 0.0009
        %v2957 = vadd.f32 %v2949, 0.0009
        %v2958 = vmul.f32 %v2934, %v2950
        %v2959 = vmul.f32 %v2935, %v2951
        %v2960 = vmul.f32 %v2936, %v2952
        %v2961 = vmul.f32 %v2937, %v2953
        %v2962 = vmul.f32 %v2938, %v2954
        %v2963 = vmul.f32 %v2939, %v2955
        %v2964 = vmul.f32 %v2940, %v2956
        %v2965 = vmul.f32 %v2941, %v2957
        %v2966 = vadd.f32 %v2958, 1e-12
        %v2967 = vadd.f32 %v2959, 1e-12
        %v2968 = vadd.f32 %v2960, 1e-12
        %v2969 = vadd.f32 %v2961, 1e-12
        %v2970 = vadd.f32 %v2962, 1e-12
        %v2971 = vadd.f32 %v2963, 1e-12
        %v2972 = vadd.f32 %v2964, 1e-12
        %v2973 = vadd.f32 %v2965, 1e-12
        %v2974 = vrcp.pop %v2966
        %v2975 = vrcp.pop %v2967
        %v2976 = vrcp.pop %v2968
        %v2977 = vrcp.pop %v2969
        %v2978 = vrcp.pop %v2970
        %v2979 = vrcp.pop %v2971
        %v2980 = vrcp.pop %v2972
        %v2981 = vrcp.pop %v2973
        %v2982 = vmul.f32 %v2966, %v2974
        %v2983 = vmul.f32 %v2967, %v2975
        %v2984 = vmul.f32 %v2968, %v2976
        %v2985 = vmul.f32 %v2969, %v2977
        %v2986 = vmul.f32 %v2970, %v2978
        %v2987 = vmul.f32 %v2971, %v2979
        %v2988 = vmul.f32 %v2972, %v2980
        %v2989 = vmul.f32 %v2973, %v2981
        %v2990 = vsub.f32 2.0, %v2982
        %v2991 = vsub.f32 2.0, %v2983
        %v2992 = vsub.f32 2.0, %v2984
        %v2993 = vsub.f32 2.0, %v2985
        %v2994 = vsub.f32 2.0, %v2986
        %v2995 = vsub.f32 2.0, %v2987
        %v2996 = vsub.f32 2.0, %v2988
        %v2997 = vsub.f32 2.0, %v2989
        %v2998 = vmul.f32 %v2974, %v2990
        %v2999 = vmul.f32 %v2975, %v2991
        %v3000 = vmul.f32 %v2976, %v2992
        %v3001 = vmul.f32 %v2977, %v2993
        %v3002 = vmul.f32 %v2978, %v2994
        %v3003 = vmul.f32 %v2979, %v2995
        %v3004 = vmul.f32 %v2980, %v2996
        %v3005 = vmul.f32 %v2981, %v2997
        %v3006 = vmul.f32 %v2918, %v2998
        %v3007 = vmul.f32 %v2919, %v2999
        %v3008 = vmul.f32 %v2920, %v3000
        %v3009 = vmul.f32 %v2921, %v3001
        %v3010 = vmul.f32 %v2922, %v3002
        %v3011 = vmul.f32 %v2923, %v3003
        %v3012 = vmul.f32 %v2924, %v3004
        %v3013 = vmul.f32 %v2925, %v3005
        %3022 = vrot.lane.b32.xlu0 %v3006, 126
        %v3023 = vpop.permute.xlu0 %3022
        %3024 = vrot.lane.b32.xlu0 %v3007, 126
        %v3025 = vpop.permute.xlu0 %3024
        %3026 = vrot.lane.b32.xlu0 %v3008, 126
        %v3027 = vpop.permute.xlu0 %3026
        %3028 = vrot.lane.b32.xlu0 %v3009, 126
        %v3029 = vpop.permute.xlu0 %3028
        %3030 = vrot.lane.b32.xlu0 %v3010, 126
        %v3031 = vpop.permute.xlu0 %3030
        %3032 = vrot.lane.b32.xlu0 %v3011, 126
        %v3033 = vpop.permute.xlu0 %3032
        %3034 = vrot.lane.b32.xlu0 %v3012, 126
        %v3035 = vpop.permute.xlu0 %3034
        %3036 = vrot.lane.b32.xlu0 %v3013, 126
        %v3037 = vpop.permute.xlu0 %3036
        %vm3046 = vcmask 130048
        %3047 = vst.msk [vmem:[%s503] sm:$0xff] %vm3046, %v3023
        %3048 = vst.msk [vmem:[%s503 + $0x8] sm:$0xff] %vm3046, %v3025
        %3049 = vst.msk [vmem:[%s503 + $0x10] sm:$0xff] %vm3046, %v3027
        %3050 = vst.msk [vmem:[%s503 + $0x18] sm:$0xff] %vm3046, %v3029
        %3051 = vst.msk [vmem:[%s503 + $0x20] sm:$0xff] %vm3046, %v3031
        %3052 = vst.msk [vmem:[%s503 + $0x28] sm:$0xff] %vm3046, %v3033
        %3053 = vst.msk [vmem:[%s503 + $0x30] sm:$0xff] %vm3046, %v3035
        %3054 = vst.msk [vmem:[%s503 + $0x38] sm:$0xff] %vm3046, %v3037
        %s3055 = sand.u32 %s214, 1
        %s3056 = scalar_lea.sflag [#allocation6], %s3055
        %s3057 = sand.u32 %s214, 1
        %s3058 = smul.addr %s3057, 64
        %s3059 = scalar_lea.vmem [#allocation15], %s3058
        // Predicated region
        $region101: #{tpu_custom_call.1} parent=43 // pred_check
          %p3060 = pneg %p224
        $region102: #{tpu_custom_call.1} parent=43 // pred_check_branch
          %3062 = sbr.rel (%p3060) target = $region104
        $region103: #{tpu_custom_call.1} parent=43 // pred_region
          %s3063 = smul.u32 4, %s36
          %s3064 = smul.u32 2, %s37
          %3066 = vsyncadd %s3056, 0
          %s3067 = smul.addr %s3063, 2
          %s3068 = sadd.s32 %s3064, %s3067
          %s3069 = smul.addr %s3068, 8
          %s3070 = scalar_lea.hbm %s6, %s3069
          %s3071 = sshll.u32 %s3059, 4
          %s3072 = int_to_ptr.vmem [resolvable:$true] %s3071
          %s3073 = sshll.u32 %s3070, 4
          %s3074 = int_to_ptr.hbm [resolvable:$true] %s3073
          %3079 = dma.vmem_to_hbm [thread:$0]  %s3072, 1024, %s3074, %s3056, 128, 128, 8
        $region104: #{tpu_custom_call.1} parent=43 // pred_fallthru
          _
      $region44: #{tpu_custom_call.1} parent=5 // pred_fallthru
        _
      %p3080 = scmp.le.s32.totalorder 2, %s27
      // Predicated region
      $region105: #{tpu_custom_call.1} parent=5 // pred_check
        %p3081 = pneg %p3080
      $region106: #{tpu_custom_call.1} parent=5 // pred_check_branch
        %3083 = sbr.rel (%p3081) target = $region108
      $region107: #{tpu_custom_call.1} parent=5 // pred_region
        %s3084 = ssub.s32 %s27, 2
        // Predicated region
        $region109: #{tpu_custom_call.1} parent=107 // pred_check
          %p3085 = pneg %p230
        $region110: #{tpu_custom_call.1} parent=107 // pred_check_branch
          %3087 = sbr.rel (%p3085) target = $region112
        $region111: #{tpu_custom_call.1} parent=107 // pred_region
          %s3088 = sand.u32 %s215, 1
          %s3089 = scalar_lea.sflag [#allocation6], %s3088
          %s3090 = sand.u32 %s215, 1
          %s3091 = smul.addr %s3090, 64
          %s3092 = scalar_lea.vmem [#allocation15], %s3091
          %3094 = dma.done %s3089, 1024
        $region112: #{tpu_custom_call.1} parent=107 // pred_fallthru
          _
      $region108: #{tpu_custom_call.1} parent=5 // pred_fallthru
        _
    $region6: #{tpu_custom_call.1} parent=1 // loop_footer
      %s31 = sadd.s32 1, %s27
    $region7: #{tpu_custom_call.1} parent=1 // loop_footer_branch
      %26 = sbr.rel target = $region3
    $region8: #{tpu_custom_call.1} parent=1 // loop_exit
      _
    %3095 = vsyncpa [#allocation5], 1
    %s3096 = scalar_lea.sflag [#allocation5], 1
    %3097 = vsyncpa %s3096, 1
    %3098 = vsyncpa [#allocation8], 1
    %s3099 = scalar_lea.sflag [#allocation8], 1
    %3100 = vsyncpa %s3099, 1
    %3101 = vsyncpa [#allocation11], 1
    %s3102 = scalar_lea.sflag [#allocation11], 1
    %3103 = vsyncpa %s3102, 1
    %3104 = vsyncpa [#allocation14], 1
    %s3105 = scalar_lea.sflag [#allocation14], 1
    %3106 = vsyncpa %s3105, 1
    %3107 = vsyncpa [#allocation6], 1
    %s3108 = scalar_lea.sflag [#allocation6], 1
    %3109 = vsyncpa %s3108, 1

</llo_original>
